<compile_context>
chip_gen: v7x
topology: tpu7x:2x2x1
jax: 0.10.0
libtpu: 0.0.40
codegen_flags: <defaults>
</compile_context>

<pallas_src>
import functools

import jax
import jax.numpy as jnp
from jax import lax
from jax.experimental import pallas as pl
from jax.experimental.pallas import tpu as pltpu

_LN_EPS = 1e-12


# -----------------------------------------------------------------------------
# Fused whole-model Pallas kernel (one grid step == one batch tile of TB seqs)
# -----------------------------------------------------------------------------
def _layer_norm(h, g, b, eps):
    mean = jnp.mean(h, axis=-1, keepdims=True)
    var = jnp.mean((h - mean) ** 2, axis=-1, keepdims=True)
    return (h - mean) * lax.rsqrt(var + eps) * g + b


def _fused_forward_kernel(
    ids_ref,                                    # SMEM (B_pad, S) int32 (scalar prefetch)
    tok_ref, pos_ref, emb_g_ref, emb_b_ref,
    wqkv_ref, bqkv_ref, wo_ref, bo_ref, ln1g_ref, ln1b_ref,
    w1_ref, b1_ref, w2_ref, b2_ref, ln2g_ref, ln2b_ref,
    head_w_ref, head_b_ref,
    out_ref,
    xbuf,                                       # VMEM scratch (TB, S, H) f32
    *, num_layers, num_heads, seq_len, batch_tile, eps,
):
    TB, S = batch_tile, seq_len
    H = pos_ref.shape[1]
    dh = H // num_heads
    scale = 1.0 / (dh ** 0.5)
    bt = pl.program_id(0)

    # In-kernel token-embedding gather: ids live in SMEM, table in VMEM.
    for b in range(TB):
        for s in range(S):
            tid = ids_ref[bt * TB + b, s]
            xbuf[b, s, :] = tok_ref[tid][0]      # (1, H) row -> (H,)

    x = xbuf[...] + pos_ref[0:S, :]              # (TB, S, H), learned positions
    x = _layer_norm(x, emb_g_ref[...], emb_b_ref[...], eps)

    row_dims = (((2,), (0,)), ((), ()))          # contract hidden dim, no batch
    attn_dims = (((2,), (2,)), ((0,), (0,)))     # q·k over dh, batch over TB
    pv_dims = (((2,), (1,)), ((0,), (0,)))       # p·v over keys, batch over TB

    # TODO(synk): attention_mask is assumed all-ones (no padding mask applied).
    for l in range(num_layers):
        # Fused QKV projection: one (TB*S rows, H) @ (H, 3H) bf16 MXU matmul,
        # f32 accumulation; weights arrive pre-cast to bf16.
        qkv = lax.dot_general(x.astype(jnp.bfloat16), wqkv_ref[l], row_dims,
                              preferred_element_type=jnp.float32) + bqkv_ref[l]
        wo_l = wo_ref[l]                          # (H, H) bf16
        attn = jnp.zeros((TB, S, H), jnp.float32)
        # Per-head attention; ctx @ Wo is accumulated head-by-head (identical
        # to concat(ctx_h) @ Wo, avoids a concat).
        # TODO(synk): heads are dh-lane sub-slices here; at real dims move
        # heads to an outer grid/block axis instead.
        for h in range(num_heads):
            qh = qkv[..., h * dh:(h + 1) * dh]            # (TB, S, dh)
            kh = qkv[..., H + h * dh:H + (h + 1) * dh]
            vh = qkv[..., 2 * H + h * dh:2 * H + (h + 1) * dh]
            s_ = lax.dot_general(qh, kh, attn_dims,
                                 preferred_element_type=jnp.float32) * scale
            s_ = s_ - jnp.max(s_, axis=-1, keepdims=True)
            p = jnp.exp(s_)
            p = p * pl.reciprocal(jnp.sum(p, axis=-1, keepdims=True), approx=True)
            ctx = lax.dot_general(p, vh, pv_dims,
                                  preferred_element_type=jnp.float32)  # (TB,S,dh)
            attn = attn + lax.dot_general(
                ctx.astype(jnp.bfloat16), wo_l[h * dh:(h + 1) * dh, :], row_dims,
                preferred_element_type=jnp.float32)
        h1 = _layer_norm(attn + bo_ref[l] + x, ln1g_ref[l], ln1b_ref[l], eps)

        # FFN (bf16 matmuls with f32 accumulation, f32 elementwise).
        ff = lax.dot_general(h1.astype(jnp.bfloat16), w1_ref[l], row_dims,
                             preferred_element_type=jnp.float32) + b1_ref[l]
        ff = jax.nn.gelu(ff, approximate=True)  # TODO(synk): HF BERT default is exact erf GELU.
        ff2 = lax.dot_general(ff.astype(jnp.bfloat16), w2_ref[l], row_dims,
                              preferred_element_type=jnp.float32) + b2_ref[l]
        x = _layer_norm(ff2 + h1, ln2g_ref[l], ln2b_ref[l], eps)

    # CLS token -> packed prediction head (one lane-dense matmul; columns are
    # zero-padded to a 128-lane multiple so the store is an unmasked vst).
    cls = x[:, 0, :]                                                  # (TB, H)
    out = jnp.dot(cls.astype(jnp.bfloat16), head_w_ref[...],
                  preferred_element_type=jnp.float32) + head_b_ref[...]
    out_ref[...] = out[None].astype(out_ref.dtype)                    # (1, TB, n_pad)


def rating_model_forward(params, input_ids, *, num_heads, num_layers, n_out,
                         batch_tile=16):
    """Full forward pass in one pallas_call. Returns (B, n_out) f32."""
    B, S = input_ids.shape
    V = params["tok_emb"].shape[0]
    H = params["pos_emb"].shape[1]
    max_seq = params["pos_emb"].shape[0]
    L = num_layers
    F = params["w1"].shape[-1]
    n_pad = params["head_w"].shape[-1]
    assert S <= max_seq

    # Batch tiling: TB sequences per grid step (pad batch up if needed).
    TB = min(batch_tile, B)
    pad = (-B) % TB
    ids = input_ids.astype(jnp.int32)
    if pad:
        ids = jnp.concatenate([ids, jnp.zeros((pad, S), jnp.int32)], axis=0)
    nb = (B + pad) // TB

    def bcast(shape):  # operand shared by all grid steps (weights / biases)
        rank = len(shape)

        def idx(b, ids_ref):
            return (0,) * rank

        return pl.BlockSpec(shape, idx)

    def out_idx(b, ids_ref):
        return (b, 0, 0)

    kernel = functools.partial(
        _fused_forward_kernel, num_layers=L, num_heads=num_heads,
        seq_len=S, batch_tile=TB, eps=_LN_EPS)

    out = pl.pallas_call(
        kernel,
        out_shape=jax.ShapeDtypeStruct((nb, TB, n_pad), jnp.float32),
        grid_spec=pltpu.PrefetchScalarGridSpec(
            num_scalar_prefetch=1,                       # input_ids -> SMEM
            grid=(nb,),
            in_specs=[
                bcast((V, 1, H)),                        # token-embedding table
                bcast((max_seq, H)),                     # position embeddings
                bcast((1, H)), bcast((1, H)),            # embedding LN gamma/beta
                bcast((L, H, 3 * H)), bcast((L, 1, 3 * H)),   # fused QKV (bf16 W)
                bcast((L, H, H)), bcast((L, 1, H)),           # attn out-proj
                bcast((L, 1, H)), bcast((L, 1, H)),           # LN1
                bcast((L, H, F)), bcast((L, 1, F)),           # FFN in
                bcast((L, F, H)), bcast((L, 1, H)),           # FFN out
                bcast((L, 1, H)), bcast((L, 1, H)),           # LN2
                bcast((H, n_pad)), bcast((1, n_pad)),         # packed head (padded)
            ],
            out_specs=pl.BlockSpec((1, TB, n_pad), out_idx),
            scratch_shapes=[pltpu.VMEM((TB, S, H), jnp.float32)],
        ),
        compiler_params=pltpu.CompilerParams(
            dimension_semantics=("parallel",)),          # v7x: tiles over 2 TCs
    )(ids, params["tok_emb"], params["pos_emb"], params["emb_g"], params["emb_b"],
      params["wqkv"], params["bqkv"], params["wo"], params["bo"],
      params["ln1_g"], params["ln1_b"],
      params["w1"], params["b1"], params["w2"], params["b2"],
      params["ln2_g"], params["ln2_b"],
      params["head_w"], params["head_b"])

    return out.reshape(nb * TB, n_pad)[:B, :n_out]


# -----------------------------------------------------------------------------
# Model wrapper (synthetic deterministic encoder + RatingModel heads)
# -----------------------------------------------------------------------------
class RatingModelPallas:
    BASE_MODEL = "base"
    MULTI_MODEL = "multi"

    def __init__(self, model_type, num_annotators, num_classes, *,
                 vocab_size=100, max_seq=16, hidden=32, num_heads=2,
                 ffn=64, num_layers=2, seed=0):
        assert model_type in (self.BASE_MODEL, self.MULTI_MODEL), (
            f"Invalid model_type. Must be one of {self.BASE_MODEL} or "
            f"{self.MULTI_MODEL}. Got {model_type} instead.")
        self.model_type = model_type
        self.num_annotators = num_annotators
        self.num_classes = num_classes
        self.num_heads = num_heads
        self.num_layers = num_layers
        self.hidden = hidden
        self.n_out = (num_classes if model_type == self.BASE_MODEL
                      else num_annotators * num_classes)

        key = jax.random.PRNGKey(seed)

        def nxt():
            nonlocal key
            key, sub = jax.random.split(key)
            return sub

        def dense(i, o):
            return 0.02 * jax.random.normal(nxt(), (i, o), jnp.float32)

        H, F, L = hidden, ffn, num_layers
        wqkv, wo, w1, w2 = [], [], [], []
        for _ in range(L):
            wq, wk, wv = dense(H, H), dense(H, H), dense(H, H)
            wqkv.append(jnp.concatenate([wq, wk, wv], axis=1))   # (H, 3H)
            wo.append(dense(H, H))
            w1.append(dense(H, F))
            w2.append(dense(F, H))

        params = {
            # Table stored (V, 1, H): the head axis is an untiled leading dim,
            # so the in-kernel dynamic row gather is a plain address offset.
            "tok_emb": (0.02 * jax.random.normal(
                nxt(), (vocab_size, H), jnp.float32))[:, None, :],
            "pos_emb": 0.02 * jax.random.normal(nxt(), (max_seq, H), jnp.float32),
            "emb_g": jnp.ones((1, H), jnp.float32),
            "emb_b": jnp.zeros((1, H), jnp.float32),
            # Matmul weights pre-cast to bf16 once (halves DMA bytes / VMEM and
            # removes the per-grid-step f32->bf16 VPU cast); biases / LN f32.
            "wqkv": jnp.stack(wqkv).astype(jnp.bfloat16),
            "bqkv": jnp.zeros((L, 1, 3 * H), jnp.float32),
            "wo": jnp.stack(wo).astype(jnp.bfloat16),
            "bo": jnp.zeros((L, 1, H), jnp.float32),
            "ln1_g": jnp.ones((L, 1, H), jnp.float32),
            "ln1_b": jnp.zeros((L, 1, H), jnp.float32),
            "w1": jnp.stack(w1).astype(jnp.bfloat16),
            "b1": jnp.zeros((L, 1, F), jnp.float32),
            "w2": jnp.stack(w2).astype(jnp.bfloat16),
            "b2": jnp.zeros((L, 1, H), jnp.float32),
            "ln2_g": jnp.ones((L, 1, H), jnp.float32),
            "ln2_b": jnp.zeros((L, 1, H), jnp.float32),
        }

        if model_type == self.BASE_MODEL:
            head_w = dense(H, num_classes)                                 # (H, C)
        else:
            # Per-annotator Linear heads packed once into a lane-dense (H, A*C)
            # matmul; out[:, a*C+c] == cls @ W_a[:, c] + b_a[c].
            w_a = 0.02 * jax.random.normal(
                nxt(), (num_annotators, H, num_classes), jnp.float32)
            head_w = jnp.transpose(w_a, (1, 0, 2)).reshape(
                H, num_annotators * num_classes)
        # Zero-pad head columns to a multiple of 128 lanes (lane-dense store).
        n_pad = ((self.n_out + 127) // 128) * 128
        params["head_w"] = jnp.pad(
            head_w, ((0, 0), (0, n_pad - self.n_out))).astype(jnp.bfloat16)
        params["head_b"] = jnp.zeros((1, n_pad), jnp.float32)
        self.params = params

    def __call__(self, inputs):
        input_ids = inputs["input_ids"]
        assert input_ids.ndim == 2, (
            "Input must have 2 dimensions (batch_size, sequence_length). "
            f"Got {input_ids.ndim} instead.")
        B = input_ids.shape[0]
        out = rating_model_forward(self.params, input_ids,
                                   num_heads=self.num_heads,
                                   num_layers=self.num_layers,
                                   n_out=self.n_out)                  # (B, n_out)
        if self.model_type == self.BASE_MODEL:
            return out
        return out.reshape(B, self.num_annotators, self.num_classes)


# -----------------------------------------------------------------------------
# Pure-JAX reference of the same forward (f32 math) for a sanity check.
# -----------------------------------------------------------------------------
def reference_forward(model, input_ids):
    p = model.params
    B, S = input_ids.shape
    H, nH = model.hidden, model.num_heads
    dh = H // nH
    f32 = lambda t: t.astype(jnp.float32)

    def ln(h, g, b):
        m = jnp.mean(h, -1, keepdims=True)
        v = jnp.mean((h - m) ** 2, -1, keepdims=True)
        return (h - m) / jnp.sqrt(v + _LN_EPS) * g + b

    x = jnp.take(p["tok_emb"][:, 0, :], input_ids, axis=0) + p["pos_emb"][:S][None]
    x = ln(x, p["emb_g"], p["emb_b"])
    for l in range(model.num_layers):
        qkv = x @ f32(p["wqkv"][l]) + p["bqkv"][l]
        q, k, v = jnp.split(qkv, 3, axis=-1)
        sh = lambda t: t.reshape(B, S, nH, dh).transpose(0, 2, 1, 3)
        q, k, v = sh(q), sh(k), sh(v)
        s = jnp.einsum("bhqd,bhkd->bhqk", q, k) / jnp.sqrt(dh)
        pr = jax.nn.softmax(s, axis=-1)
        ctx = jnp.einsum("bhqk,bhkd->bhqd", pr, v).transpose(0, 2, 1, 3).reshape(B, S, H)
        h1 = ln(ctx @ f32(p["wo"][l]) + p["bo"][l] + x, p["ln1_g"][l], p["ln1_b"][l])
        ff = jax.nn.gelu(h1 @ f32(p["w1"][l]) + p["b1"][l], approximate=True)
        x = ln(ff @ f32(p["w2"][l]) + p["b2"][l] + h1, p["ln2_g"][l], p["ln2_b"][l])
    out = (x[:, 0, :] @ f32(p["head_w"]) + p["head_b"])[:, :model.n_out]
    if model.model_type == model.BASE_MODEL:
        return out
    return out.reshape(B, model.num_annotators, model.num_classes)


# -----------------------------------------------------------------------------
if __name__ == "__main__":
    B, S = 2, 8
    num_annotators, num_classes = 3, 5

    key = jax.random.PRNGKey(0)
    k_ids, _ = jax.random.split(key)
    inputs = {
        "input_ids": jax.random.randint(k_ids, (B, S), 0, 100, dtype=jnp.int32),
        "attention_mask": jnp.ones((B, S), jnp.int32),
    }

    multi_model = RatingModelPallas("multi", num_annotators, num_classes)
    out_multi = jax.block_until_ready(multi_model(inputs))
    assert out_multi.shape == (B, num_annotators, num_classes), out_multi.shape

    base_model = RatingModelPallas("base", num_annotators, num_classes)
    out_base = jax.block_until_ready(base_model(inputs))
    assert out_base.shape == (B, num_classes), out_base.shape

    # Numerical sanity vs pure-JAX reference (loose: kernel uses bf16 matmul
    # operands + approx reciprocal in softmax).
    ref_multi = reference_forward(multi_model, inputs["input_ids"])
    ref_base = reference_forward(base_model, inputs["input_ids"])
    assert jnp.allclose(out_multi, ref_multi, atol=5e-2, rtol=5e-2), (
        float(jnp.max(jnp.abs(out_multi - ref_multi))))
    assert jnp.allclose(out_base, ref_base, atol=5e-2, rtol=5e-2), (
        float(jnp.max(jnp.abs(out_base - ref_base))))
    assert jnp.all(jnp.isfinite(out_multi)) and jnp.all(jnp.isfinite(out_base))
    print("KERNEL_OK")
</pallas_src>

<mosaic_0001>
module attributes {stable_mosaic.version = 11 : i64} {
  func.func @_fused_forward_kernel(%arg0: i32, %arg1: memref<2x8xi32, #tpu.memory_space<smem>>, %arg2: memref<100x1x32xf32, #tpu.memory_space<vmem>>, %arg3: memref<16x32xf32, #tpu.memory_space<vmem>>, %arg4: memref<1x32xf32, #tpu.memory_space<vmem>>, %arg5: memref<1x32xf32, #tpu.memory_space<vmem>>, %arg6: memref<2x32x96xbf16, #tpu.memory_space<vmem>>, %arg7: memref<2x1x96xf32, #tpu.memory_space<vmem>>, %arg8: memref<2x32x32xbf16, #tpu.memory_space<vmem>>, %arg9: memref<2x1x32xf32, #tpu.memory_space<vmem>>, %arg10: memref<2x1x32xf32, #tpu.memory_space<vmem>>, %arg11: memref<2x1x32xf32, #tpu.memory_space<vmem>>, %arg12: memref<2x32x64xbf16, #tpu.memory_space<vmem>>, %arg13: memref<2x1x64xf32, #tpu.memory_space<vmem>>, %arg14: memref<2x64x32xbf16, #tpu.memory_space<vmem>>, %arg15: memref<2x1x32xf32, #tpu.memory_space<vmem>>, %arg16: memref<2x1x32xf32, #tpu.memory_space<vmem>>, %arg17: memref<2x1x32xf32, #tpu.memory_space<vmem>>, %arg18: memref<32x128xbf16, #tpu.memory_space<vmem>>, %arg19: memref<1x128xf32, #tpu.memory_space<vmem>>, %arg20: memref<1x2x128xf32, #tpu.memory_space<vmem>>, %arg21: memref<2x8x32xf32, #tpu.memory_space<vmem>>) attributes {dimension_semantics = [#tpu.dimension_semantics<parallel>], iteration_bounds = array<i64: 1>, scalar_prefetch = 1 : i64, scratch_operands = 1 : i64, tpu.core_type = #tpu.core_type<tc>, window_params = [{pipeline_mode = #tpu.pipeline_mode<synchronous>, transform_indices = @transform_0, window_bounds = array<i64: 100, 1, 32>}, {pipeline_mode = #tpu.pipeline_mode<synchronous>, transform_indices = @transform_1, window_bounds = array<i64: 16, 32>}, {pipeline_mode = #tpu.pipeline_mode<synchronous>, transform_indices = @transform_2, window_bounds = array<i64: 1, 32>}, {pipeline_mode = #tpu.pipeline_mode<synchronous>, transform_indices = @transform_3, window_bounds = array<i64: 1, 32>}, {pipeline_mode = #tpu.pipeline_mode<synchronous>, transform_indices = @transform_4, window_bounds = array<i64: 2, 32, 96>}, {pipeline_mode = #tpu.pipeline_mode<synchronous>, transform_indices = @transform_5, window_bounds = array<i64: 2, 1, 96>}, {pipeline_mode = #tpu.pipeline_mode<synchronous>, transform_indices = @transform_6, window_bounds = array<i64: 2, 32, 32>}, {pipeline_mode = #tpu.pipeline_mode<synchronous>, transform_indices = @transform_7, window_bounds = array<i64: 2, 1, 32>}, {pipeline_mode = #tpu.pipeline_mode<synchronous>, transform_indices = @transform_8, window_bounds = array<i64: 2, 1, 32>}, {pipeline_mode = #tpu.pipeline_mode<synchronous>, transform_indices = @transform_9, window_bounds = array<i64: 2, 1, 32>}, {pipeline_mode = #tpu.pipeline_mode<synchronous>, transform_indices = @transform_10, window_bounds = array<i64: 2, 32, 64>}, {pipeline_mode = #tpu.pipeline_mode<synchronous>, transform_indices = @transform_11, window_bounds = array<i64: 2, 1, 64>}, {pipeline_mode = #tpu.pipeline_mode<synchronous>, transform_indices = @transform_12, window_bounds = array<i64: 2, 64, 32>}, {pipeline_mode = #tpu.pipeline_mode<synchronous>, transform_indices = @transform_13, window_bounds = array<i64: 2, 1, 32>}, {pipeline_mode = #tpu.pipeline_mode<synchronous>, transform_indices = @transform_14, window_bounds = array<i64: 2, 1, 32>}, {pipeline_mode = #tpu.pipeline_mode<synchronous>, transform_indices = @transform_15, window_bounds = array<i64: 2, 1, 32>}, {pipeline_mode = #tpu.pipeline_mode<synchronous>, transform_indices = @transform_16, window_bounds = array<i64: 32, 128>}, {pipeline_mode = #tpu.pipeline_mode<synchronous>, transform_indices = @transform_17, window_bounds = array<i64: 1, 128>}, {transform_indices = @transform_18, window_bounds = array<i64: 1, 2, 128>}]} {
    %c2_i32 = arith.constant 2 : i32
    %0 = arith.muli %arg0, %c2_i32 : i32
    %c0_i32 = arith.constant 0 : i32
    %1 = arith.addi %0, %c0_i32 : i32
    %2 = arith.index_cast %1 : i32 to index
    %c0 = arith.constant 0 : index
    %3 = memref.load %arg1[%2, %c0] : memref<2x8xi32, #tpu.memory_space<smem>>
    %4 = arith.index_cast %3 : i32 to index
    %c0_0 = arith.constant 0 : index
    %c0_1 = arith.constant 0 : index
    %5 = vector.load %arg2[%4, %c0_0, %c0_1] : memref<100x1x32xf32, #tpu.memory_space<vmem>>, vector<1x1x32xf32>
    %6 = vector.shape_cast %5 : vector<1x1x32xf32> to vector<1x32xf32>
    %7 = vector.shape_cast %6 : vector<1x32xf32> to vector<32xf32>
    %c0_2 = arith.constant 0 : index
    %c0_3 = arith.constant 0 : index
    %c0_4 = arith.constant 0 : index
    %8 = vector.load %arg21[%c0_2, %c0_3, %c0_4] : memref<2x8x32xf32, #tpu.memory_space<vmem>>, vector<1x1x32xf32>
    %9 = vector.shape_cast %8 : vector<1x1x32xf32> to vector<32xf32>
    %10 = vector.shape_cast %7 : vector<32xf32> to vector<1x1x32xf32>
    tpu.vector_store %arg21[%c0_2, %c0_3, %c0_4], %10 {strides = array<i32>} : memref<2x8x32xf32, #tpu.memory_space<vmem>>, vector<1x1x32xf32>,
    %c2_i32_5 = arith.constant 2 : i32
    %11 = arith.muli %arg0, %c2_i32_5 : i32
    %c0_i32_6 = arith.constant 0 : i32
    %12 = arith.addi %11, %c0_i32_6 : i32
    %13 = arith.index_cast %12 : i32 to index
    %c1 = arith.constant 1 : index
    %14 = memref.load %arg1[%13, %c1] : memref<2x8xi32, #tpu.memory_space<smem>>
    %15 = arith.index_cast %14 : i32 to index
    %c0_7 = arith.constant 0 : index
    %c0_8 = arith.constant 0 : index
    %16 = vector.load %arg2[%15, %c0_7, %c0_8] : memref<100x1x32xf32, #tpu.memory_space<vmem>>, vector<1x1x32xf32>
    %17 = vector.shape_cast %16 : vector<1x1x32xf32> to vector<1x32xf32>
    %18 = vector.shape_cast %17 : vector<1x32xf32> to vector<32xf32>
    %c0_9 = arith.constant 0 : index
    %c1_10 = arith.constant 1 : index
    %c0_11 = arith.constant 0 : index
    %19 = vector.load %arg21[%c0_9, %c1_10, %c0_11] : memref<2x8x32xf32, #tpu.memory_space<vmem>>, vector<1x1x32xf32>
    %20 = vector.shape_cast %19 : vector<1x1x32xf32> to vector<32xf32>
    %21 = vector.shape_cast %18 : vector<32xf32> to vector<1x1x32xf32>
    tpu.vector_store %arg21[%c0_9, %c1_10, %c0_11], %21 {strides = array<i32>} : memref<2x8x32xf32, #tpu.memory_space<vmem>>, vector<1x1x32xf32>,
    %c2_i32_12 = arith.constant 2 : i32
    %22 = arith.muli %arg0, %c2_i32_12 : i32
    %c0_i32_13 = arith.constant 0 : i32
    %23 = arith.addi %22, %c0_i32_13 : i32
    %24 = arith.index_cast %23 : i32 to index
    %c2 = arith.constant 2 : index
    %25 = memref.load %arg1[%24, %c2] : memref<2x8xi32, #tpu.memory_space<smem>>
    %26 = arith.index_cast %25 : i32 to index
    %c0_14 = arith.constant 0 : index
    %c0_15 = arith.constant 0 : index
    %27 = vector.load %arg2[%26, %c0_14, %c0_15] : memref<100x1x32xf32, #tpu.memory_space<vmem>>, vector<1x1x32xf32>
    %28 = vector.shape_cast %27 : vector<1x1x32xf32> to vector<1x32xf32>
    %29 = vector.shape_cast %28 : vector<1x32xf32> to vector<32xf32>
    %c0_16 = arith.constant 0 : index
    %c2_17 = arith.constant 2 : index
    %c0_18 = arith.constant 0 : index
    %30 = vector.load %arg21[%c0_16, %c2_17, %c0_18] : memref<2x8x32xf32, #tpu.memory_space<vmem>>, vector<1x1x32xf32>
    %31 = vector.shape_cast %30 : vector<1x1x32xf32> to vector<32xf32>
    %32 = vector.shape_cast %29 : vector<32xf32> to vector<1x1x32xf32>
    tpu.vector_store %arg21[%c0_16, %c2_17, %c0_18], %32 {strides = array<i32>} : memref<2x8x32xf32, #tpu.memory_space<vmem>>, vector<1x1x32xf32>,
    %c2_i32_19 = arith.constant 2 : i32
    %33 = arith.muli %arg0, %c2_i32_19 : i32
    %c0_i32_20 = arith.constant 0 : i32
    %34 = arith.addi %33, %c0_i32_20 : i32
    %35 = arith.index_cast %34 : i32 to index
    %c3 = arith.constant 3 : index
    %36 = memref.load %arg1[%35, %c3] : memref<2x8xi32, #tpu.memory_space<smem>>
    %37 = arith.index_cast %36 : i32 to index
    %c0_21 = arith.constant 0 : index
    %c0_22 = arith.constant 0 : index
    %38 = vector.load %arg2[%37, %c0_21, %c0_22] : memref<100x1x32xf32, #tpu.memory_space<vmem>>, vector<1x1x32xf32>
    %39 = vector.shape_cast %38 : vector<1x1x32xf32> to vector<1x32xf32>
    %40 = vector.shape_cast %39 : vector<1x32xf32> to vector<32xf32>
    %c0_23 = arith.constant 0 : index
    %c3_24 = arith.constant 3 : index
    %c0_25 = arith.constant 0 : index
    %41 = vector.load %arg21[%c0_23, %c3_24, %c0_25] : memref<2x8x32xf32, #tpu.memory_space<vmem>>, vector<1x1x32xf32>
    %42 = vector.shape_cast %41 : vector<1x1x32xf32> to vector<32xf32>
    %43 = vector.shape_cast %40 : vector<32xf32> to vector<1x1x32xf32>
    tpu.vector_store %arg21[%c0_23, %c3_24, %c0_25], %43 {strides = array<i32>} : memref<2x8x32xf32, #tpu.memory_space<vmem>>, vector<1x1x32xf32>,
    %c2_i32_26 = arith.constant 2 : i32
    %44 = arith.muli %arg0, %c2_i32_26 : i32
    %c0_i32_27 = arith.constant 0 : i32
    %45 = arith.addi %44, %c0_i32_27 : i32
    %46 = arith.index_cast %45 : i32 to index
    %c4 = arith.constant 4 : index
    %47 = memref.load %arg1[%46, %c4] : memref<2x8xi32, #tpu.memory_space<smem>>
    %48 = arith.index_cast %47 : i32 to index
    %c0_28 = arith.constant 0 : index
    %c0_29 = arith.constant 0 : index
    %49 = vector.load %arg2[%48, %c0_28, %c0_29] : memref<100x1x32xf32, #tpu.memory_space<vmem>>, vector<1x1x32xf32>
    %50 = vector.shape_cast %49 : vector<1x1x32xf32> to vector<1x32xf32>
    %51 = vector.shape_cast %50 : vector<1x32xf32> to vector<32xf32>
    %c0_30 = arith.constant 0 : index
    %c4_31 = arith.constant 4 : index
    %c0_32 = arith.constant 0 : index
    %52 = vector.load %arg21[%c0_30, %c4_31, %c0_32] : memref<2x8x32xf32, #tpu.memory_space<vmem>>, vector<1x1x32xf32>
    %53 = vector.shape_cast %52 : vector<1x1x32xf32> to vector<32xf32>
    %54 = vector.shape_cast %51 : vector<32xf32> to vector<1x1x32xf32>
    tpu.vector_store %arg21[%c0_30, %c4_31, %c0_32], %54 {strides = array<i32>} : memref<2x8x32xf32, #tpu.memory_space<vmem>>, vector<1x1x32xf32>,
    %c2_i32_33 = arith.constant 2 : i32
    %55 = arith.muli %arg0, %c2_i32_33 : i32
    %c0_i32_34 = arith.constant 0 : i32
    %56 = arith.addi %55, %c0_i32_34 : i32
    %57 = arith.index_cast %56 : i32 to index
    %c5 = arith.constant 5 : index
    %58 = memref.load %arg1[%57, %c5] : memref<2x8xi32, #tpu.memory_space<smem>>
    %59 = arith.index_cast %58 : i32 to index
    %c0_35 = arith.constant 0 : index
    %c0_36 = arith.constant 0 : index
    %60 = vector.load %arg2[%59, %c0_35, %c0_36] : memref<100x1x32xf32, #tpu.memory_space<vmem>>, vector<1x1x32xf32>
    %61 = vector.shape_cast %60 : vector<1x1x32xf32> to vector<1x32xf32>
    %62 = vector.shape_cast %61 : vector<1x32xf32> to vector<32xf32>
    %c0_37 = arith.constant 0 : index
    %c5_38 = arith.constant 5 : index
    %c0_39 = arith.constant 0 : index
    %63 = vector.load %arg21[%c0_37, %c5_38, %c0_39] : memref<2x8x32xf32, #tpu.memory_space<vmem>>, vector<1x1x32xf32>
    %64 = vector.shape_cast %63 : vector<1x1x32xf32> to vector<32xf32>
    %65 = vector.shape_cast %62 : vector<32xf32> to vector<1x1x32xf32>
    tpu.vector_store %arg21[%c0_37, %c5_38, %c0_39], %65 {strides = array<i32>} : memref<2x8x32xf32, #tpu.memory_space<vmem>>, vector<1x1x32xf32>,
    %c2_i32_40 = arith.constant 2 : i32
    %66 = arith.muli %arg0, %c2_i32_40 : i32
    %c0_i32_41 = arith.constant 0 : i32
    %67 = arith.addi %66, %c0_i32_41 : i32
    %68 = arith.index_cast %67 : i32 to index
    %c6 = arith.constant 6 : index
    %69 = memref.load %arg1[%68, %c6] : memref<2x8xi32, #tpu.memory_space<smem>>
    %70 = arith.index_cast %69 : i32 to index
    %c0_42 = arith.constant 0 : index
    %c0_43 = arith.constant 0 : index
    %71 = vector.load %arg2[%70, %c0_42, %c0_43] : memref<100x1x32xf32, #tpu.memory_space<vmem>>, vector<1x1x32xf32>
    %72 = vector.shape_cast %71 : vector<1x1x32xf32> to vector<1x32xf32>
    %73 = vector.shape_cast %72 : vector<1x32xf32> to vector<32xf32>
    %c0_44 = arith.constant 0 : index
    %c6_45 = arith.constant 6 : index
    %c0_46 = arith.constant 0 : index
    %74 = vector.load %arg21[%c0_44, %c6_45, %c0_46] : memref<2x8x32xf32, #tpu.memory_space<vmem>>, vector<1x1x32xf32>
    %75 = vector.shape_cast %74 : vector<1x1x32xf32> to vector<32xf32>
    %76 = vector.shape_cast %73 : vector<32xf32> to vector<1x1x32xf32>
    tpu.vector_store %arg21[%c0_44, %c6_45, %c0_46], %76 {strides = array<i32>} : memref<2x8x32xf32, #tpu.memory_space<vmem>>, vector<1x1x32xf32>,
    %c2_i32_47 = arith.constant 2 : i32
    %77 = arith.muli %arg0, %c2_i32_47 : i32
    %c0_i32_48 = arith.constant 0 : i32
    %78 = arith.addi %77, %c0_i32_48 : i32
    %79 = arith.index_cast %78 : i32 to index
    %c7 = arith.constant 7 : index
    %80 = memref.load %arg1[%79, %c7] : memref<2x8xi32, #tpu.memory_space<smem>>
    %81 = arith.index_cast %80 : i32 to index
    %c0_49 = arith.constant 0 : index
    %c0_50 = arith.constant 0 : index
    %82 = vector.load %arg2[%81, %c0_49, %c0_50] : memref<100x1x32xf32, #tpu.memory_space<vmem>>, vector<1x1x32xf32>
    %83 = vector.shape_cast %82 : vector<1x1x32xf32> to vector<1x32xf32>
    %84 = vector.shape_cast %83 : vector<1x32xf32> to vector<32xf32>
    %c0_51 = arith.constant 0 : index
    %c7_52 = arith.constant 7 : index
    %c0_53 = arith.constant 0 : index
    %85 = vector.load %arg21[%c0_51, %c7_52, %c0_53] : memref<2x8x32xf32, #tpu.memory_space<vmem>>, vector<1x1x32xf32>
    %86 = vector.shape_cast %85 : vector<1x1x32xf32> to vector<32xf32>
    %87 = vector.shape_cast %84 : vector<32xf32> to vector<1x1x32xf32>
    tpu.vector_store %arg21[%c0_51, %c7_52, %c0_53], %87 {strides = array<i32>} : memref<2x8x32xf32, #tpu.memory_space<vmem>>, vector<1x1x32xf32>,
    %c2_i32_54 = arith.constant 2 : i32
    %88 = arith.muli %arg0, %c2_i32_54 : i32
    %c1_i32 = arith.constant 1 : i32
    %89 = arith.addi %88, %c1_i32 : i32
    %90 = arith.index_cast %89 : i32 to index
    %c0_55 = arith.constant 0 : index
    %91 = memref.load %arg1[%90, %c0_55] : memref<2x8xi32, #tpu.memory_space<smem>>
    %92 = arith.index_cast %91 : i32 to index
    %c0_56 = arith.constant 0 : index
    %c0_57 = arith.constant 0 : index
    %93 = vector.load %arg2[%92, %c0_56, %c0_57] : memref<100x1x32xf32, #tpu.memory_space<vmem>>, vector<1x1x32xf32>
    %94 = vector.shape_cast %93 : vector<1x1x32xf32> to vector<1x32xf32>
    %95 = vector.shape_cast %94 : vector<1x32xf32> to vector<32xf32>
    %c1_58 = arith.constant 1 : index
    %c0_59 = arith.constant 0 : index
    %c0_60 = arith.constant 0 : index
    %96 = vector.load %arg21[%c1_58, %c0_59, %c0_60] : memref<2x8x32xf32, #tpu.memory_space<vmem>>, vector<1x1x32xf32>
    %97 = vector.shape_cast %96 : vector<1x1x32xf32> to vector<32xf32>
    %98 = vector.shape_cast %95 : vector<32xf32> to vector<1x1x32xf32>
    tpu.vector_store %arg21[%c1_58, %c0_59, %c0_60], %98 {strides = array<i32>} : memref<2x8x32xf32, #tpu.memory_space<vmem>>, vector<1x1x32xf32>,
    %c2_i32_61 = arith.constant 2 : i32
    %99 = arith.muli %arg0, %c2_i32_61 : i32
    %c1_i32_62 = arith.constant 1 : i32
    %100 = arith.addi %99, %c1_i32_62 : i32
    %101 = arith.index_cast %100 : i32 to index
    %c1_63 = arith.constant 1 : index
    %102 = memref.load %arg1[%101, %c1_63] : memref<2x8xi32, #tpu.memory_space<smem>>
    %103 = arith.index_cast %102 : i32 to index
    %c0_64 = arith.constant 0 : index
    %c0_65 = arith.constant 0 : index
    %104 = vector.load %arg2[%103, %c0_64, %c0_65] : memref<100x1x32xf32, #tpu.memory_space<vmem>>, vector<1x1x32xf32>
    %105 = vector.shape_cast %104 : vector<1x1x32xf32> to vector<1x32xf32>
    %106 = vector.shape_cast %105 : vector<1x32xf32> to vector<32xf32>
    %c1_66 = arith.constant 1 : index
    %c1_67 = arith.constant 1 : index
    %c0_68 = arith.constant 0 : index
    %107 = vector.load %arg21[%c1_66, %c1_67, %c0_68] : memref<2x8x32xf32, #tpu.memory_space<vmem>>, vector<1x1x32xf32>
    %108 = vector.shape_cast %107 : vector<1x1x32xf32> to vector<32xf32>
    %109 = vector.shape_cast %106 : vector<32xf32> to vector<1x1x32xf32>
    tpu.vector_store %arg21[%c1_66, %c1_67, %c0_68], %109 {strides = array<i32>} : memref<2x8x32xf32, #tpu.memory_space<vmem>>, vector<1x1x32xf32>,
    %c2_i32_69 = arith.constant 2 : i32
    %110 = arith.muli %arg0, %c2_i32_69 : i32
    %c1_i32_70 = arith.constant 1 : i32
    %111 = arith.addi %110, %c1_i32_70 : i32
    %112 = arith.index_cast %111 : i32 to index
    %c2_71 = arith.constant 2 : index
    %113 = memref.load %arg1[%112, %c2_71] : memref<2x8xi32, #tpu.memory_space<smem>>
    %114 = arith.index_cast %113 : i32 to index
    %c0_72 = arith.constant 0 : index
    %c0_73 = arith.constant 0 : index
    %115 = vector.load %arg2[%114, %c0_72, %c0_73] : memref<100x1x32xf32, #tpu.memory_space<vmem>>, vector<1x1x32xf32>
    %116 = vector.shape_cast %115 : vector<1x1x32xf32> to vector<1x32xf32>
    %117 = vector.shape_cast %116 : vector<1x32xf32> to vector<32xf32>
    %c1_74 = arith.constant 1 : index
    %c2_75 = arith.constant 2 : index
    %c0_76 = arith.constant 0 : index
    %118 = vector.load %arg21[%c1_74, %c2_75, %c0_76] : memref<2x8x32xf32, #tpu.memory_space<vmem>>, vector<1x1x32xf32>
    %119 = vector.shape_cast %118 : vector<1x1x32xf32> to vector<32xf32>
    %120 = vector.shape_cast %117 : vector<32xf32> to vector<1x1x32xf32>
    tpu.vector_store %arg21[%c1_74, %c2_75, %c0_76], %120 {strides = array<i32>} : memref<2x8x32xf32, #tpu.memory_space<vmem>>, vector<1x1x32xf32>,
    %c2_i32_77 = arith.constant 2 : i32
    %121 = arith.muli %arg0, %c2_i32_77 : i32
    %c1_i32_78 = arith.constant 1 : i32
    %122 = arith.addi %121, %c1_i32_78 : i32
    %123 = arith.index_cast %122 : i32 to index
    %c3_79 = arith.constant 3 : index
    %124 = memref.load %arg1[%123, %c3_79] : memref<2x8xi32, #tpu.memory_space<smem>>
    %125 = arith.index_cast %124 : i32 to index
    %c0_80 = arith.constant 0 : index
    %c0_81 = arith.constant 0 : index
    %126 = vector.load %arg2[%125, %c0_80, %c0_81] : memref<100x1x32xf32, #tpu.memory_space<vmem>>, vector<1x1x32xf32>
    %127 = vector.shape_cast %126 : vector<1x1x32xf32> to vector<1x32xf32>
    %128 = vector.shape_cast %127 : vector<1x32xf32> to vector<32xf32>
    %c1_82 = arith.constant 1 : index
    %c3_83 = arith.constant 3 : index
    %c0_84 = arith.constant 0 : index
    %129 = vector.load %arg21[%c1_82, %c3_83, %c0_84] : memref<2x8x32xf32, #tpu.memory_space<vmem>>, vector<1x1x32xf32>
    %130 = vector.shape_cast %129 : vector<1x1x32xf32> to vector<32xf32>
    %131 = vector.shape_cast %128 : vector<32xf32> to vector<1x1x32xf32>
    tpu.vector_store %arg21[%c1_82, %c3_83, %c0_84], %131 {strides = array<i32>} : memref<2x8x32xf32, #tpu.memory_space<vmem>>, vector<1x1x32xf32>,
    %c2_i32_85 = arith.constant 2 : i32
    %132 = arith.muli %arg0, %c2_i32_85 : i32
    %c1_i32_86 = arith.constant 1 : i32
    %133 = arith.addi %132, %c1_i32_86 : i32
    %134 = arith.index_cast %133 : i32 to index
    %c4_87 = arith.constant 4 : index
    %135 = memref.load %arg1[%134, %c4_87] : memref<2x8xi32, #tpu.memory_space<smem>>
    %136 = arith.index_cast %135 : i32 to index
    %c0_88 = arith.constant 0 : index
    %c0_89 = arith.constant 0 : index
    %137 = vector.load %arg2[%136, %c0_88, %c0_89] : memref<100x1x32xf32, #tpu.memory_space<vmem>>, vector<1x1x32xf32>
    %138 = vector.shape_cast %137 : vector<1x1x32xf32> to vector<1x32xf32>
    %139 = vector.shape_cast %138 : vector<1x32xf32> to vector<32xf32>
    %c1_90 = arith.constant 1 : index
    %c4_91 = arith.constant 4 : index
    %c0_92 = arith.constant 0 : index
    %140 = vector.load %arg21[%c1_90, %c4_91, %c0_92] : memref<2x8x32xf32, #tpu.memory_space<vmem>>, vector<1x1x32xf32>
    %141 = vector.shape_cast %140 : vector<1x1x32xf32> to vector<32xf32>
    %142 = vector.shape_cast %139 : vector<32xf32> to vector<1x1x32xf32>
    tpu.vector_store %arg21[%c1_90, %c4_91, %c0_92], %142 {strides = array<i32>} : memref<2x8x32xf32, #tpu.memory_space<vmem>>, vector<1x1x32xf32>,
    %c2_i32_93 = arith.constant 2 : i32
    %143 = arith.muli %arg0, %c2_i32_93 : i32
    %c1_i32_94 = arith.constant 1 : i32
    %144 = arith.addi %143, %c1_i32_94 : i32
    %145 = arith.index_cast %144 : i32 to index
    %c5_95 = arith.constant 5 : index
    %146 = memref.load %arg1[%145, %c5_95] : memref<2x8xi32, #tpu.memory_space<smem>>
    %147 = arith.index_cast %146 : i32 to index
    %c0_96 = arith.constant 0 : index
    %c0_97 = arith.constant 0 : index
    %148 = vector.load %arg2[%147, %c0_96, %c0_97] : memref<100x1x32xf32, #tpu.memory_space<vmem>>, vector<1x1x32xf32>
    %149 = vector.shape_cast %148 : vector<1x1x32xf32> to vector<1x32xf32>
    %150 = vector.shape_cast %149 : vector<1x32xf32> to vector<32xf32>
    %c1_98 = arith.constant 1 : index
    %c5_99 = arith.constant 5 : index
    %c0_100 = arith.constant 0 : index
    %151 = vector.load %arg21[%c1_98, %c5_99, %c0_100] : memref<2x8x32xf32, #tpu.memory_space<vmem>>, vector<1x1x32xf32>
    %152 = vector.shape_cast %151 : vector<1x1x32xf32> to vector<32xf32>
    %153 = vector.shape_cast %150 : vector<32xf32> to vector<1x1x32xf32>
    tpu.vector_store %arg21[%c1_98, %c5_99, %c0_100], %153 {strides = array<i32>} : memref<2x8x32xf32, #tpu.memory_space<vmem>>, vector<1x1x32xf32>,
    %c2_i32_101 = arith.constant 2 : i32
    %154 = arith.muli %arg0, %c2_i32_101 : i32
    %c1_i32_102 = arith.constant 1 : i32
    %155 = arith.addi %154, %c1_i32_102 : i32
    %156 = arith.index_cast %155 : i32 to index
    %c6_103 = arith.constant 6 : index
    %157 = memref.load %arg1[%156, %c6_103] : memref<2x8xi32, #tpu.memory_space<smem>>
    %158 = arith.index_cast %157 : i32 to index
    %c0_104 = arith.constant 0 : index
    %c0_105 = arith.constant 0 : index
    %159 = vector.load %arg2[%158, %c0_104, %c0_105] : memref<100x1x32xf32, #tpu.memory_space<vmem>>, vector<1x1x32xf32>
    %160 = vector.shape_cast %159 : vector<1x1x32xf32> to vector<1x32xf32>
    %161 = vector.shape_cast %160 : vector<1x32xf32> to vector<32xf32>
    %c1_106 = arith.constant 1 : index
    %c6_107 = arith.constant 6 : index
    %c0_108 = arith.constant 0 : index
    %162 = vector.load %arg21[%c1_106, %c6_107, %c0_108] : memref<2x8x32xf32, #tpu.memory_space<vmem>>, vector<1x1x32xf32>
    %163 = vector.shape_cast %162 : vector<1x1x32xf32> to vector<32xf32>
    %164 = vector.shape_cast %161 : vector<32xf32> to vector<1x1x32xf32>
    tpu.vector_store %arg21[%c1_106, %c6_107, %c0_108], %164 {strides = array<i32>} : memref<2x8x32xf32, #tpu.memory_space<vmem>>, vector<1x1x32xf32>,
    %c2_i32_109 = arith.constant 2 : i32
    %165 = arith.muli %arg0, %c2_i32_109 : i32
    %c1_i32_110 = arith.constant 1 : i32
    %166 = arith.addi %165, %c1_i32_110 : i32
    %167 = arith.index_cast %166 : i32 to index
    %c7_111 = arith.constant 7 : index
    %168 = memref.load %arg1[%167, %c7_111] : memref<2x8xi32, #tpu.memory_space<smem>>
    %169 = arith.index_cast %168 : i32 to index
    %c0_112 = arith.constant 0 : index
    %c0_113 = arith.constant 0 : index
    %170 = vector.load %arg2[%169, %c0_112, %c0_113] : memref<100x1x32xf32, #tpu.memory_space<vmem>>, vector<1x1x32xf32>
    %171 = vector.shape_cast %170 : vector<1x1x32xf32> to vector<1x32xf32>
    %172 = vector.shape_cast %171 : vector<1x32xf32> to vector<32xf32>
    %c1_114 = arith.constant 1 : index
    %c7_115 = arith.constant 7 : index
    %c0_116 = arith.constant 0 : index
    %173 = vector.load %arg21[%c1_114, %c7_115, %c0_116] : memref<2x8x32xf32, #tpu.memory_space<vmem>>, vector<1x1x32xf32>
    %174 = vector.shape_cast %173 : vector<1x1x32xf32> to vector<32xf32>
    %175 = vector.shape_cast %172 : vector<32xf32> to vector<1x1x32xf32>
    tpu.vector_store %arg21[%c1_114, %c7_115, %c0_116], %175 {strides = array<i32>} : memref<2x8x32xf32, #tpu.memory_space<vmem>>, vector<1x1x32xf32>,
    %c0_117 = arith.constant 0 : index
    %c0_118 = arith.constant 0 : index
    %c0_119 = arith.constant 0 : index
    %176 = vector.load %arg21[%c0_117, %c0_118, %c0_119] : memref<2x8x32xf32, #tpu.memory_space<vmem>>, vector<2x8x32xf32>
    %c0_120 = arith.constant 0 : index
    %c0_121 = arith.constant 0 : index
    %177 = vector.load %arg3[%c0_120, %c0_121] : memref<16x32xf32, #tpu.memory_space<vmem>>, vector<8x32xf32>
    %178 = vector.shape_cast %177 : vector<8x32xf32> to vector<1x8x32xf32>
    %179 = vector.broadcast %178 : vector<1x8x32xf32> to vector<2x8x32xf32>
    %180 = arith.addf %176, %179 : vector<2x8x32xf32>
    %c0_122 = arith.constant 0 : index
    %c0_123 = arith.constant 0 : index
    %181 = vector.load %arg4[%c0_122, %c0_123] : memref<1x32xf32, #tpu.memory_space<vmem>>, vector<1x32xf32>
    %c0_124 = arith.constant 0 : index
    %c0_125 = arith.constant 0 : index
    %182 = vector.load %arg5[%c0_124, %c0_125] : memref<1x32xf32, #tpu.memory_space<vmem>>, vector<1x32xf32>
    %cst = arith.constant dense<0.000000e+00> : vector<2x8xf32>
    %183 = vector.multi_reduction <add>, %180, %cst [2] : vector<2x8x32xf32> to vector<2x8xf32>
    %184 = vector.shape_cast %183 : vector<2x8xf32> to vector<2x8x1xf32>
    %cst_126 = arith.constant 3.200000e+01 : f32
    %185 = vector.broadcast %cst_126 : f32 to vector<2x8x1xf32>
    %186 = arith.divf %184, %185 : vector<2x8x1xf32>
    %187 = vector.broadcast %186 : vector<2x8x1xf32> to vector<2x8x32xf32>
    %188 = arith.subf %180, %187 : vector<2x8x32xf32>
    %189 = arith.mulf %188, %188 : vector<2x8x32xf32>
    %cst_127 = arith.constant dense<0.000000e+00> : vector<2x8xf32>
    %190 = vector.multi_reduction <add>, %189, %cst_127 [2] : vector<2x8x32xf32> to vector<2x8xf32>
    %191 = vector.shape_cast %190 : vector<2x8xf32> to vector<2x8x1xf32>
    %cst_128 = arith.constant 3.200000e+01 : f32
    %192 = vector.broadcast %cst_128 : f32 to vector<2x8x1xf32>
    %193 = arith.divf %191, %192 : vector<2x8x1xf32>
    %194 = vector.broadcast %186 : vector<2x8x1xf32> to vector<2x8x32xf32>
    %195 = arith.subf %180, %194 : vector<2x8x32xf32>
    %cst_129 = arith.constant 9.99999996E-13 : f32
    %196 = vector.broadcast %cst_129 : f32 to vector<2x8x1xf32>
    %197 = arith.addf %193, %196 : vector<2x8x1xf32>
    %198 = math.rsqrt %197 : vector<2x8x1xf32>
    %199 = vector.broadcast %198 : vector<2x8x1xf32> to vector<2x8x32xf32>
    %200 = arith.mulf %195, %199 : vector<2x8x32xf32>
    %201 = vector.shape_cast %181 : vector<1x32xf32> to vector<1x1x32xf32>
    %202 = vector.broadcast %201 : vector<1x1x32xf32> to vector<2x8x32xf32>
    %203 = arith.mulf %200, %202 : vector<2x8x32xf32>
    %204 = vector.shape_cast %182 : vector<1x32xf32> to vector<1x1x32xf32>
    %205 = vector.broadcast %204 : vector<1x1x32xf32> to vector<2x8x32xf32>
    %206 = arith.addf %203, %205 : vector<2x8x32xf32>
    %207 = arith.truncf %206 : vector<2x8x32xf32> to vector<2x8x32xbf16>
    %c0_130 = arith.constant 0 : index
    %c0_131 = arith.constant 0 : index
    %c0_132 = arith.constant 0 : index
    %208 = vector.load %arg6[%c0_130, %c0_131, %c0_132] : memref<2x32x96xbf16, #tpu.memory_space<vmem>>, vector<1x32x96xbf16>
    %209 = vector.shape_cast %208 : vector<1x32x96xbf16> to vector<32x96xbf16>
    %cst_133 = arith.constant dense<0.000000e+00> : vector<2x8x96xf32>
    %210 = tpu.matmul %207, %209, %cst_133 {dimension_numbers = #tpu.dot_dimension_numbers<[2], [0], [0, 1], [1], [0, 0, 0, 1, 1, 1], [], []>} : vector<2x8x32xbf16>, vector<32x96xbf16>, vector<2x8x96xf32> -> vector<2x8x96xf32>
    %c0_134 = arith.constant 0 : index
    %c0_135 = arith.constant 0 : index
    %c0_136 = arith.constant 0 : index
    %211 = vector.load %arg7[%c0_134, %c0_135, %c0_136] : memref<2x1x96xf32, #tpu.memory_space<vmem>>, vector<1x1x96xf32>
    %212 = vector.shape_cast %211 : vector<1x1x96xf32> to vector<1x96xf32>
    %213 = vector.shape_cast %212 : vector<1x96xf32> to vector<1x1x96xf32>
    %214 = vector.broadcast %213 : vector<1x1x96xf32> to vector<2x8x96xf32>
    %215 = arith.addf %210, %214 : vector<2x8x96xf32>
    %c0_137 = arith.constant 0 : index
    %c0_138 = arith.constant 0 : index
    %c0_139 = arith.constant 0 : index
    %216 = vector.load %arg8[%c0_137, %c0_138, %c0_139] : memref<2x32x32xbf16, #tpu.memory_space<vmem>>, vector<1x32x32xbf16>
    %217 = vector.shape_cast %216 : vector<1x32x32xbf16> to vector<32x32xbf16>
    %cst_140 = arith.constant 0.000000e+00 : f32
    %218 = vector.broadcast %cst_140 : f32 to vector<2x8x32xf32>
    %219 = vector.extract_strided_slice %215 {offsets = [0, 0, 0], sizes = [2, 8, 16], strides = [1, 1, 1]} : vector<2x8x96xf32> to vector<2x8x16xf32>
    %220 = vector.extract_strided_slice %215 {offsets = [0, 0, 32], sizes = [2, 8, 16], strides = [1, 1, 1]} : vector<2x8x96xf32> to vector<2x8x16xf32>
    %221 = vector.extract_strided_slice %215 {offsets = [0, 0, 64], sizes = [2, 8, 16], strides = [1, 1, 1]} : vector<2x8x96xf32> to vector<2x8x16xf32>
    %cst_141 = arith.constant dense<0.000000e+00> : vector<2x8x8xf32>
    %222 = tpu.matmul %219, %220, %cst_141 {dimension_numbers = #tpu.dot_dimension_numbers<[2], [2], [1], [1], [0, 0, 0, 1, 1, 1], [0], [0]>} : vector<2x8x16xf32>, vector<2x8x16xf32>, vector<2x8x8xf32> -> vector<2x8x8xf32>
    %cst_142 = arith.constant 2.500000e-01 : f32
    %223 = vector.broadcast %cst_142 : f32 to vector<2x8x8xf32>
    %224 = arith.mulf %222, %223 : vector<2x8x8xf32>
    %cst_143 = arith.constant dense<0xFF800000> : vector<2x8xf32>
    %225 = vector.multi_reduction <maximumf>, %224, %cst_143 [2] : vector<2x8x8xf32> to vector<2x8xf32>
    %226 = vector.shape_cast %225 : vector<2x8xf32> to vector<2x8x1xf32>
    %227 = vector.broadcast %226 : vector<2x8x1xf32> to vector<2x8x8xf32>
    %228 = arith.subf %224, %227 : vector<2x8x8xf32>
    %229 = math.exp %228 : vector<2x8x8xf32>
    %cst_144 = arith.constant dense<0.000000e+00> : vector<2x8xf32>
    %230 = vector.multi_reduction <add>, %229, %cst_144 [2] : vector<2x8x8xf32> to vector<2x8xf32>
    %231 = vector.shape_cast %230 : vector<2x8xf32> to vector<2x8x1xf32>
    %232 = tpu.reciprocal %231 {approx = true} : vector<2x8x1xf32> -> vector<2x8x1xf32>
    %233 = vector.broadcast %232 : vector<2x8x1xf32> to vector<2x8x8xf32>
    %234 = arith.mulf %229, %233 : vector<2x8x8xf32>
    %cst_145 = arith.constant dense<0.000000e+00> : vector<2x8x16xf32>
    %235 = tpu.matmul %234, %221, %cst_145 {dimension_numbers = #tpu.dot_dimension_numbers<[2], [1], [1], [2], [0, 0, 0, 1, 1, 2], [0], [0]>} : vector<2x8x8xf32>, vector<2x8x16xf32>, vector<2x8x16xf32> -> vector<2x8x16xf32>
    %236 = arith.truncf %235 : vector<2x8x16xf32> to vector<2x8x16xbf16>
    %237 = vector.extract_strided_slice %217 {offsets = [0, 0], sizes = [16, 32], strides = [1, 1]} : vector<32x32xbf16> to vector<16x32xbf16>
    %cst_146 = arith.constant dense<0.000000e+00> : vector<2x8x32xf32>
    %238 = tpu.matmul %236, %237, %cst_146 {dimension_numbers = #tpu.dot_dimension_numbers<[2], [0], [0, 1], [1], [0, 0, 0, 1, 1, 1], [], []>} : vector<2x8x16xbf16>, vector<16x32xbf16>, vector<2x8x32xf32> -> vector<2x8x32xf32>
    %239 = arith.addf %218, %238 : vector<2x8x32xf32>
    %240 = vector.extract_strided_slice %215 {offsets = [0, 0, 16], sizes = [2, 8, 16], strides = [1, 1, 1]} : vector<2x8x96xf32> to vector<2x8x16xf32>
    %241 = vector.extract_strided_slice %215 {offsets = [0, 0, 48], sizes = [2, 8, 16], strides = [1, 1, 1]} : vector<2x8x96xf32> to vector<2x8x16xf32>
    %242 = vector.extract_strided_slice %215 {offsets = [0, 0, 80], sizes = [2, 8, 16], strides = [1, 1, 1]} : vector<2x8x96xf32> to vector<2x8x16xf32>
    %cst_147 = arith.constant dense<0.000000e+00> : vector<2x8x8xf32>
    %243 = tpu.matmul %240, %241, %cst_147 {dimension_numbers = #tpu.dot_dimension_numbers<[2], [2], [1], [1], [0, 0, 0, 1, 1, 1], [0], [0]>} : vector<2x8x16xf32>, vector<2x8x16xf32>, vector<2x8x8xf32> -> vector<2x8x8xf32>
    %cst_148 = arith.constant 2.500000e-01 : f32
    %244 = vector.broadcast %cst_148 : f32 to vector<2x8x8xf32>
    %245 = arith.mulf %243, %244 : vector<2x8x8xf32>
    %cst_149 = arith.constant dense<0xFF800000> : vector<2x8xf32>
    %246 = vector.multi_reduction <maximumf>, %245, %cst_149 [2] : vector<2x8x8xf32> to vector<2x8xf32>
    %247 = vector.shape_cast %246 : vector<2x8xf32> to vector<2x8x1xf32>
    %248 = vector.broadcast %247 : vector<2x8x1xf32> to vector<2x8x8xf32>
    %249 = arith.subf %245, %248 : vector<2x8x8xf32>
    %250 = math.exp %249 : vector<2x8x8xf32>
    %cst_150 = arith.constant dense<0.000000e+00> : vector<2x8xf32>
    %251 = vector.multi_reduction <add>, %250, %cst_150 [2] : vector<2x8x8xf32> to vector<2x8xf32>
    %252 = vector.shape_cast %251 : vector<2x8xf32> to vector<2x8x1xf32>
    %253 = tpu.reciprocal %252 {approx = true} : vector<2x8x1xf32> -> vector<2x8x1xf32>
    %254 = vector.broadcast %253 : vector<2x8x1xf32> to vector<2x8x8xf32>
    %255 = arith.mulf %250, %254 : vector<2x8x8xf32>
    %cst_151 = arith.constant dense<0.000000e+00> : vector<2x8x16xf32>
    %256 = tpu.matmul %255, %242, %cst_151 {dimension_numbers = #tpu.dot_dimension_numbers<[2], [1], [1], [2], [0, 0, 0, 1, 1, 2], [0], [0]>} : vector<2x8x8xf32>, vector<2x8x16xf32>, vector<2x8x16xf32> -> vector<2x8x16xf32>
    %257 = arith.truncf %256 : vector<2x8x16xf32> to vector<2x8x16xbf16>
    %258 = vector.extract_strided_slice %217 {offsets = [16, 0], sizes = [16, 32], strides = [1, 1]} : vector<32x32xbf16> to vector<16x32xbf16>
    %cst_152 = arith.constant dense<0.000000e+00> : vector<2x8x32xf32>
    %259 = tpu.matmul %257, %258, %cst_152 {dimension_numbers = #tpu.dot_dimension_numbers<[2], [0], [0, 1], [1], [0, 0, 0, 1, 1, 1], [], []>} : vector<2x8x16xbf16>, vector<16x32xbf16>, vector<2x8x32xf32> -> vector<2x8x32xf32>
    %260 = arith.addf %239, %259 : vector<2x8x32xf32>
    %c0_153 = arith.constant 0 : index
    %c0_154 = arith.constant 0 : index
    %c0_155 = arith.constant 0 : index
    %261 = vector.load %arg9[%c0_153, %c0_154, %c0_155] : memref<2x1x32xf32, #tpu.memory_space<vmem>>, vector<1x1x32xf32>
    %262 = vector.shape_cast %261 : vector<1x1x32xf32> to vector<1x32xf32>
    %263 = vector.shape_cast %262 : vector<1x32xf32> to vector<1x1x32xf32>
    %264 = vector.broadcast %263 : vector<1x1x32xf32> to vector<2x8x32xf32>
    %265 = arith.addf %260, %264 : vector<2x8x32xf32>
    %266 = arith.addf %265, %206 : vector<2x8x32xf32>
    %c0_156 = arith.constant 0 : index
    %c0_157 = arith.constant 0 : index
    %c0_158 = arith.constant 0 : index
    %267 = vector.load %arg10[%c0_156, %c0_157, %c0_158] : memref<2x1x32xf32, #tpu.memory_space<vmem>>, vector<1x1x32xf32>
    %268 = vector.shape_cast %267 : vector<1x1x32xf32> to vector<1x32xf32>
    %c0_159 = arith.constant 0 : index
    %c0_160 = arith.constant 0 : index
    %c0_161 = arith.constant 0 : index
    %269 = vector.load %arg11[%c0_159, %c0_160, %c0_161] : memref<2x1x32xf32, #tpu.memory_space<vmem>>, vector<1x1x32xf32>
    %270 = vector.shape_cast %269 : vector<1x1x32xf32> to vector<1x32xf32>
    %cst_162 = arith.constant dense<0.000000e+00> : vector<2x8xf32>
    %271 = vector.multi_reduction <add>, %266, %cst_162 [2] : vector<2x8x32xf32> to vector<2x8xf32>
    %272 = vector.shape_cast %271 : vector<2x8xf32> to vector<2x8x1xf32>
    %cst_163 = arith.constant 3.200000e+01 : f32
    %273 = vector.broadcast %cst_163 : f32 to vector<2x8x1xf32>
    %274 = arith.divf %272, %273 : vector<2x8x1xf32>
    %275 = vector.broadcast %274 : vector<2x8x1xf32> to vector<2x8x32xf32>
    %276 = arith.subf %266, %275 : vector<2x8x32xf32>
    %277 = arith.mulf %276, %276 : vector<2x8x32xf32>
    %cst_164 = arith.constant dense<0.000000e+00> : vector<2x8xf32>
    %278 = vector.multi_reduction <add>, %277, %cst_164 [2] : vector<2x8x32xf32> to vector<2x8xf32>
    %279 = vector.shape_cast %278 : vector<2x8xf32> to vector<2x8x1xf32>
    %cst_165 = arith.constant 3.200000e+01 : f32
    %280 = vector.broadcast %cst_165 : f32 to vector<2x8x1xf32>
    %281 = arith.divf %279, %280 : vector<2x8x1xf32>
    %282 = vector.broadcast %274 : vector<2x8x1xf32> to vector<2x8x32xf32>
    %283 = arith.subf %266, %282 : vector<2x8x32xf32>
    %cst_166 = arith.constant 9.99999996E-13 : f32
    %284 = vector.broadcast %cst_166 : f32 to vector<2x8x1xf32>
    %285 = arith.addf %281, %284 : vector<2x8x1xf32>
    %286 = math.rsqrt %285 : vector<2x8x1xf32>
    %287 = vector.broadcast %286 : vector<2x8x1xf32> to vector<2x8x32xf32>
    %288 = arith.mulf %283, %287 : vector<2x8x32xf32>
    %289 = vector.shape_cast %268 : vector<1x32xf32> to vector<1x1x32xf32>
    %290 = vector.broadcast %289 : vector<1x1x32xf32> to vector<2x8x32xf32>
    %291 = arith.mulf %288, %290 : vector<2x8x32xf32>
    %292 = vector.shape_cast %270 : vector<1x32xf32> to vector<1x1x32xf32>
    %293 = vector.broadcast %292 : vector<1x1x32xf32> to vector<2x8x32xf32>
    %294 = arith.addf %291, %293 : vector<2x8x32xf32>
    %295 = arith.truncf %294 : vector<2x8x32xf32> to vector<2x8x32xbf16>
    %c0_167 = arith.constant 0 : index
    %c0_168 = arith.constant 0 : index
    %c0_169 = arith.constant 0 : index
    %296 = vector.load %arg12[%c0_167, %c0_168, %c0_169] : memref<2x32x64xbf16, #tpu.memory_space<vmem>>, vector<1x32x64xbf16>
    %297 = vector.shape_cast %296 : vector<1x32x64xbf16> to vector<32x64xbf16>
    %cst_170 = arith.constant dense<0.000000e+00> : vector<2x8x64xf32>
    %298 = tpu.matmul %295, %297, %cst_170 {dimension_numbers = #tpu.dot_dimension_numbers<[2], [0], [0, 1], [1], [0, 0, 0, 1, 1, 1], [], []>} : vector<2x8x32xbf16>, vector<32x64xbf16>, vector<2x8x64xf32> -> vector<2x8x64xf32>
    %c0_171 = arith.constant 0 : index
    %c0_172 = arith.constant 0 : index
    %c0_173 = arith.constant 0 : index
    %299 = vector.load %arg13[%c0_171, %c0_172, %c0_173] : memref<2x1x64xf32, #tpu.memory_space<vmem>>, vector<1x1x64xf32>
    %300 = vector.shape_cast %299 : vector<1x1x64xf32> to vector<1x64xf32>
    %301 = vector.shape_cast %300 : vector<1x64xf32> to vector<1x1x64xf32>
    %302 = vector.broadcast %301 : vector<1x1x64xf32> to vector<2x8x64xf32>
    %303 = arith.addf %298, %302 : vector<2x8x64xf32>
    %304 = arith.mulf %303, %303 : vector<2x8x64xf32>
    %305 = arith.mulf %303, %304 : vector<2x8x64xf32>
    %cst_174 = arith.constant 4.471500e-02 : f32
    %306 = vector.broadcast %cst_174 : f32 to vector<2x8x64xf32>
    %307 = arith.mulf %306, %305 : vector<2x8x64xf32>
    %308 = arith.addf %303, %307 : vector<2x8x64xf32>
    %cst_175 = arith.constant 0.797884583 : f32
    %309 = vector.broadcast %cst_175 : f32 to vector<2x8x64xf32>
    %310 = arith.mulf %309, %308 : vector<2x8x64xf32>
    %311 = math.tanh %310 : vector<2x8x64xf32>
    %cst_176 = arith.constant 1.000000e+00 : f32
    %312 = vector.broadcast %cst_176 : f32 to vector<2x8x64xf32>
    %313 = arith.addf %312, %311 : vector<2x8x64xf32>
    %cst_177 = arith.constant 5.000000e-01 : f32
    %314 = vector.broadcast %cst_177 : f32 to vector<2x8x64xf32>
    %315 = arith.mulf %314, %313 : vector<2x8x64xf32>
    %316 = arith.mulf %303, %315 : vector<2x8x64xf32>
    %317 = arith.truncf %316 : vector<2x8x64xf32> to vector<2x8x64xbf16>
    %c0_178 = arith.constant 0 : index
    %c0_179 = arith.constant 0 : index
    %c0_180 = arith.constant 0 : index
    %318 = vector.load %arg14[%c0_178, %c0_179, %c0_180] : memref<2x64x32xbf16, #tpu.memory_space<vmem>>, vector<1x64x32xbf16>
    %319 = vector.shape_cast %318 : vector<1x64x32xbf16> to vector<64x32xbf16>
    %cst_181 = arith.constant dense<0.000000e+00> : vector<2x8x32xf32>
    %320 = tpu.matmul %317, %319, %cst_181 {dimension_numbers = #tpu.dot_dimension_numbers<[2], [0], [0, 1], [1], [0, 0, 0, 1, 1, 1], [], []>} : vector<2x8x64xbf16>, vector<64x32xbf16>, vector<2x8x32xf32> -> vector<2x8x32xf32>
    %c0_182 = arith.constant 0 : index
    %c0_183 = arith.constant 0 : index
    %c0_184 = arith.constant 0 : index
    %321 = vector.load %arg15[%c0_182, %c0_183, %c0_184] : memref<2x1x32xf32, #tpu.memory_space<vmem>>, vector<1x1x32xf32>
    %322 = vector.shape_cast %321 : vector<1x1x32xf32> to vector<1x32xf32>
    %323 = vector.shape_cast %322 : vector<1x32xf32> to vector<1x1x32xf32>
    %324 = vector.broadcast %323 : vector<1x1x32xf32> to vector<2x8x32xf32>
    %325 = arith.addf %320, %324 : vector<2x8x32xf32>
    %326 = arith.addf %325, %294 : vector<2x8x32xf32>
    %c0_185 = arith.constant 0 : index
    %c0_186 = arith.constant 0 : index
    %c0_187 = arith.constant 0 : index
    %327 = vector.load %arg16[%c0_185, %c0_186, %c0_187] : memref<2x1x32xf32, #tpu.memory_space<vmem>>, vector<1x1x32xf32>
    %328 = vector.shape_cast %327 : vector<1x1x32xf32> to vector<1x32xf32>
    %c0_188 = arith.constant 0 : index
    %c0_189 = arith.constant 0 : index
    %c0_190 = arith.constant 0 : index
    %329 = vector.load %arg17[%c0_188, %c0_189, %c0_190] : memref<2x1x32xf32, #tpu.memory_space<vmem>>, vector<1x1x32xf32>
    %330 = vector.shape_cast %329 : vector<1x1x32xf32> to vector<1x32xf32>
    %cst_191 = arith.constant dense<0.000000e+00> : vector<2x8xf32>
    %331 = vector.multi_reduction <add>, %326, %cst_191 [2] : vector<2x8x32xf32> to vector<2x8xf32>
    %332 = vector.shape_cast %331 : vector<2x8xf32> to vector<2x8x1xf32>
    %cst_192 = arith.constant 3.200000e+01 : f32
    %333 = vector.broadcast %cst_192 : f32 to vector<2x8x1xf32>
    %334 = arith.divf %332, %333 : vector<2x8x1xf32>
    %335 = vector.broadcast %334 : vector<2x8x1xf32> to vector<2x8x32xf32>
    %336 = arith.subf %326, %335 : vector<2x8x32xf32>
    %337 = arith.mulf %336, %336 : vector<2x8x32xf32>
    %cst_193 = arith.constant dense<0.000000e+00> : vector<2x8xf32>
    %338 = vector.multi_reduction <add>, %337, %cst_193 [2] : vector<2x8x32xf32> to vector<2x8xf32>
    %339 = vector.shape_cast %338 : vector<2x8xf32> to vector<2x8x1xf32>
    %cst_194 = arith.constant 3.200000e+01 : f32
    %340 = vector.broadcast %cst_194 : f32 to vector<2x8x1xf32>
    %341 = arith.divf %339, %340 : vector<2x8x1xf32>
    %342 = vector.broadcast %334 : vector<2x8x1xf32> to vector<2x8x32xf32>
    %343 = arith.subf %326, %342 : vector<2x8x32xf32>
    %cst_195 = arith.constant 9.99999996E-13 : f32
    %344 = vector.broadcast %cst_195 : f32 to vector<2x8x1xf32>
    %345 = arith.addf %341, %344 : vector<2x8x1xf32>
    %346 = math.rsqrt %345 : vector<2x8x1xf32>
    %347 = vector.broadcast %346 : vector<2x8x1xf32> to vector<2x8x32xf32>
    %348 = arith.mulf %343, %347 : vector<2x8x32xf32>
    %349 = vector.shape_cast %328 : vector<1x32xf32> to vector<1x1x32xf32>
    %350 = vector.broadcast %349 : vector<1x1x32xf32> to vector<2x8x32xf32>
    %351 = arith.mulf %348, %350 : vector<2x8x32xf32>
    %352 = vector.shape_cast %330 : vector<1x32xf32> to vector<1x1x32xf32>
    %353 = vector.broadcast %352 : vector<1x1x32xf32> to vector<2x8x32xf32>
    %354 = arith.addf %351, %353 : vector<2x8x32xf32>
    %355 = arith.truncf %354 : vector<2x8x32xf32> to vector<2x8x32xbf16>
    %c1_196 = arith.constant 1 : index
    %c0_197 = arith.constant 0 : index
    %c0_198 = arith.constant 0 : index
    %356 = vector.load %arg6[%c1_196, %c0_197, %c0_198] : memref<2x32x96xbf16, #tpu.memory_space<vmem>>, vector<1x32x96xbf16>
    %357 = vector.shape_cast %356 : vector<1x32x96xbf16> to vector<32x96xbf16>
    %cst_199 = arith.constant dense<0.000000e+00> : vector<2x8x96xf32>
    %358 = tpu.matmul %355, %357, %cst_199 {dimension_numbers = #tpu.dot_dimension_numbers<[2], [0], [0, 1], [1], [0, 0, 0, 1, 1, 1], [], []>} : vector<2x8x32xbf16>, vector<32x96xbf16>, vector<2x8x96xf32> -> vector<2x8x96xf32>
    %c1_200 = arith.constant 1 : index
    %c0_201 = arith.constant 0 : index
    %c0_202 = arith.constant 0 : index
    %359 = vector.load %arg7[%c1_200, %c0_201, %c0_202] : memref<2x1x96xf32, #tpu.memory_space<vmem>>, vector<1x1x96xf32>
    %360 = vector.shape_cast %359 : vector<1x1x96xf32> to vector<1x96xf32>
    %361 = vector.shape_cast %360 : vector<1x96xf32> to vector<1x1x96xf32>
    %362 = vector.broadcast %361 : vector<1x1x96xf32> to vector<2x8x96xf32>
    %363 = arith.addf %358, %362 : vector<2x8x96xf32>
    %c1_203 = arith.constant 1 : index
    %c0_204 = arith.constant 0 : index
    %c0_205 = arith.constant 0 : index
    %364 = vector.load %arg8[%c1_203, %c0_204, %c0_205] : memref<2x32x32xbf16, #tpu.memory_space<vmem>>, vector<1x32x32xbf16>
    %365 = vector.shape_cast %364 : vector<1x32x32xbf16> to vector<32x32xbf16>
    %cst_206 = arith.constant 0.000000e+00 : f32
    %366 = vector.broadcast %cst_206 : f32 to vector<2x8x32xf32>
    %367 = vector.extract_strided_slice %363 {offsets = [0, 0, 0], sizes = [2, 8, 16], strides = [1, 1, 1]} : vector<2x8x96xf32> to vector<2x8x16xf32>
    %368 = vector.extract_strided_slice %363 {offsets = [0, 0, 32], sizes = [2, 8, 16], strides = [1, 1, 1]} : vector<2x8x96xf32> to vector<2x8x16xf32>
    %369 = vector.extract_strided_slice %363 {offsets = [0, 0, 64], sizes = [2, 8, 16], strides = [1, 1, 1]} : vector<2x8x96xf32> to vector<2x8x16xf32>
    %cst_207 = arith.constant dense<0.000000e+00> : vector<2x8x8xf32>
    %370 = tpu.matmul %367, %368, %cst_207 {dimension_numbers = #tpu.dot_dimension_numbers<[2], [2], [1], [1], [0, 0, 0, 1, 1, 1], [0], [0]>} : vector<2x8x16xf32>, vector<2x8x16xf32>, vector<2x8x8xf32> -> vector<2x8x8xf32>
    %cst_208 = arith.constant 2.500000e-01 : f32
    %371 = vector.broadcast %cst_208 : f32 to vector<2x8x8xf32>
    %372 = arith.mulf %370, %371 : vector<2x8x8xf32>
    %cst_209 = arith.constant dense<0xFF800000> : vector<2x8xf32>
    %373 = vector.multi_reduction <maximumf>, %372, %cst_209 [2] : vector<2x8x8xf32> to vector<2x8xf32>
    %374 = vector.shape_cast %373 : vector<2x8xf32> to vector<2x8x1xf32>
    %375 = vector.broadcast %374 : vector<2x8x1xf32> to vector<2x8x8xf32>
    %376 = arith.subf %372, %375 : vector<2x8x8xf32>
    %377 = math.exp %376 : vector<2x8x8xf32>
    %cst_210 = arith.constant dense<0.000000e+00> : vector<2x8xf32>
    %378 = vector.multi_reduction <add>, %377, %cst_210 [2] : vector<2x8x8xf32> to vector<2x8xf32>
    %379 = vector.shape_cast %378 : vector<2x8xf32> to vector<2x8x1xf32>
    %380 = tpu.reciprocal %379 {approx = true} : vector<2x8x1xf32> -> vector<2x8x1xf32>
    %381 = vector.broadcast %380 : vector<2x8x1xf32> to vector<2x8x8xf32>
    %382 = arith.mulf %377, %381 : vector<2x8x8xf32>
    %cst_211 = arith.constant dense<0.000000e+00> : vector<2x8x16xf32>
    %383 = tpu.matmul %382, %369, %cst_211 {dimension_numbers = #tpu.dot_dimension_numbers<[2], [1], [1], [2], [0, 0, 0, 1, 1, 2], [0], [0]>} : vector<2x8x8xf32>, vector<2x8x16xf32>, vector<2x8x16xf32> -> vector<2x8x16xf32>
    %384 = arith.truncf %383 : vector<2x8x16xf32> to vector<2x8x16xbf16>
    %385 = vector.extract_strided_slice %365 {offsets = [0, 0], sizes = [16, 32], strides = [1, 1]} : vector<32x32xbf16> to vector<16x32xbf16>
    %cst_212 = arith.constant dense<0.000000e+00> : vector<2x8x32xf32>
    %386 = tpu.matmul %384, %385, %cst_212 {dimension_numbers = #tpu.dot_dimension_numbers<[2], [0], [0, 1], [1], [0, 0, 0, 1, 1, 1], [], []>} : vector<2x8x16xbf16>, vector<16x32xbf16>, vector<2x8x32xf32> -> vector<2x8x32xf32>
    %387 = arith.addf %366, %386 : vector<2x8x32xf32>
    %388 = vector.extract_strided_slice %363 {offsets = [0, 0, 16], sizes = [2, 8, 16], strides = [1, 1, 1]} : vector<2x8x96xf32> to vector<2x8x16xf32>
    %389 = vector.extract_strided_slice %363 {offsets = [0, 0, 48], sizes = [2, 8, 16], strides = [1, 1, 1]} : vector<2x8x96xf32> to vector<2x8x16xf32>
    %390 = vector.extract_strided_slice %363 {offsets = [0, 0, 80], sizes = [2, 8, 16], strides = [1, 1, 1]} : vector<2x8x96xf32> to vector<2x8x16xf32>
    %cst_213 = arith.constant dense<0.000000e+00> : vector<2x8x8xf32>
    %391 = tpu.matmul %388, %389, %cst_213 {dimension_numbers = #tpu.dot_dimension_numbers<[2], [2], [1], [1], [0, 0, 0, 1, 1, 1], [0], [0]>} : vector<2x8x16xf32>, vector<2x8x16xf32>, vector<2x8x8xf32> -> vector<2x8x8xf32>
    %cst_214 = arith.constant 2.500000e-01 : f32
    %392 = vector.broadcast %cst_214 : f32 to vector<2x8x8xf32>
    %393 = arith.mulf %391, %392 : vector<2x8x8xf32>
    %cst_215 = arith.constant dense<0xFF800000> : vector<2x8xf32>
    %394 = vector.multi_reduction <maximumf>, %393, %cst_215 [2] : vector<2x8x8xf32> to vector<2x8xf32>
    %395 = vector.shape_cast %394 : vector<2x8xf32> to vector<2x8x1xf32>
    %396 = vector.broadcast %395 : vector<2x8x1xf32> to vector<2x8x8xf32>
    %397 = arith.subf %393, %396 : vector<2x8x8xf32>
    %398 = math.exp %397 : vector<2x8x8xf32>
    %cst_216 = arith.constant dense<0.000000e+00> : vector<2x8xf32>
    %399 = vector.multi_reduction <add>, %398, %cst_216 [2] : vector<2x8x8xf32> to vector<2x8xf32>
    %400 = vector.shape_cast %399 : vector<2x8xf32> to vector<2x8x1xf32>
    %401 = tpu.reciprocal %400 {approx = true} : vector<2x8x1xf32> -> vector<2x8x1xf32>
    %402 = vector.broadcast %401 : vector<2x8x1xf32> to vector<2x8x8xf32>
    %403 = arith.mulf %398, %402 : vector<2x8x8xf32>
    %cst_217 = arith.constant dense<0.000000e+00> : vector<2x8x16xf32>
    %404 = tpu.matmul %403, %390, %cst_217 {dimension_numbers = #tpu.dot_dimension_numbers<[2], [1], [1], [2], [0, 0, 0, 1, 1, 2], [0], [0]>} : vector<2x8x8xf32>, vector<2x8x16xf32>, vector<2x8x16xf32> -> vector<2x8x16xf32>
    %405 = arith.truncf %404 : vector<2x8x16xf32> to vector<2x8x16xbf16>
    %406 = vector.extract_strided_slice %365 {offsets = [16, 0], sizes = [16, 32], strides = [1, 1]} : vector<32x32xbf16> to vector<16x32xbf16>
    %cst_218 = arith.constant dense<0.000000e+00> : vector<2x8x32xf32>
    %407 = tpu.matmul %405, %406, %cst_218 {dimension_numbers = #tpu.dot_dimension_numbers<[2], [0], [0, 1], [1], [0, 0, 0, 1, 1, 1], [], []>} : vector<2x8x16xbf16>, vector<16x32xbf16>, vector<2x8x32xf32> -> vector<2x8x32xf32>
    %408 = arith.addf %387, %407 : vector<2x8x32xf32>
    %c1_219 = arith.constant 1 : index
    %c0_220 = arith.constant 0 : index
    %c0_221 = arith.constant 0 : index
    %409 = vector.load %arg9[%c1_219, %c0_220, %c0_221] : memref<2x1x32xf32, #tpu.memory_space<vmem>>, vector<1x1x32xf32>
    %410 = vector.shape_cast %409 : vector<1x1x32xf32> to vector<1x32xf32>
    %411 = vector.shape_cast %410 : vector<1x32xf32> to vector<1x1x32xf32>
    %412 = vector.broadcast %411 : vector<1x1x32xf32> to vector<2x8x32xf32>
    %413 = arith.addf %408, %412 : vector<2x8x32xf32>
    %414 = arith.addf %413, %354 : vector<2x8x32xf32>
    %c1_222 = arith.constant 1 : index
    %c0_223 = arith.constant 0 : index
    %c0_224 = arith.constant 0 : index
    %415 = vector.load %arg10[%c1_222, %c0_223, %c0_224] : memref<2x1x32xf32, #tpu.memory_space<vmem>>, vector<1x1x32xf32>
    %416 = vector.shape_cast %415 : vector<1x1x32xf32> to vector<1x32xf32>
    %c1_225 = arith.constant 1 : index
    %c0_226 = arith.constant 0 : index
    %c0_227 = arith.constant 0 : index
    %417 = vector.load %arg11[%c1_225, %c0_226, %c0_227] : memref<2x1x32xf32, #tpu.memory_space<vmem>>, vector<1x1x32xf32>
    %418 = vector.shape_cast %417 : vector<1x1x32xf32> to vector<1x32xf32>
    %cst_228 = arith.constant dense<0.000000e+00> : vector<2x8xf32>
    %419 = vector.multi_reduction <add>, %414, %cst_228 [2] : vector<2x8x32xf32> to vector<2x8xf32>
    %420 = vector.shape_cast %419 : vector<2x8xf32> to vector<2x8x1xf32>
    %cst_229 = arith.constant 3.200000e+01 : f32
    %421 = vector.broadcast %cst_229 : f32 to vector<2x8x1xf32>
    %422 = arith.divf %420, %421 : vector<2x8x1xf32>
    %423 = vector.broadcast %422 : vector<2x8x1xf32> to vector<2x8x32xf32>
    %424 = arith.subf %414, %423 : vector<2x8x32xf32>
    %425 = arith.mulf %424, %424 : vector<2x8x32xf32>
    %cst_230 = arith.constant dense<0.000000e+00> : vector<2x8xf32>
    %426 = vector.multi_reduction <add>, %425, %cst_230 [2] : vector<2x8x32xf32> to vector<2x8xf32>
    %427 = vector.shape_cast %426 : vector<2x8xf32> to vector<2x8x1xf32>
    %cst_231 = arith.constant 3.200000e+01 : f32
    %428 = vector.broadcast %cst_231 : f32 to vector<2x8x1xf32>
    %429 = arith.divf %427, %428 : vector<2x8x1xf32>
    %430 = vector.broadcast %422 : vector<2x8x1xf32> to vector<2x8x32xf32>
    %431 = arith.subf %414, %430 : vector<2x8x32xf32>
    %cst_232 = arith.constant 9.99999996E-13 : f32
    %432 = vector.broadcast %cst_232 : f32 to vector<2x8x1xf32>
    %433 = arith.addf %429, %432 : vector<2x8x1xf32>
    %434 = math.rsqrt %433 : vector<2x8x1xf32>
    %435 = vector.broadcast %434 : vector<2x8x1xf32> to vector<2x8x32xf32>
    %436 = arith.mulf %431, %435 : vector<2x8x32xf32>
    %437 = vector.shape_cast %416 : vector<1x32xf32> to vector<1x1x32xf32>
    %438 = vector.broadcast %437 : vector<1x1x32xf32> to vector<2x8x32xf32>
    %439 = arith.mulf %436, %438 : vector<2x8x32xf32>
    %440 = vector.shape_cast %418 : vector<1x32xf32> to vector<1x1x32xf32>
    %441 = vector.broadcast %440 : vector<1x1x32xf32> to vector<2x8x32xf32>
    %442 = arith.addf %439, %441 : vector<2x8x32xf32>
    %443 = arith.truncf %442 : vector<2x8x32xf32> to vector<2x8x32xbf16>
    %c1_233 = arith.constant 1 : index
    %c0_234 = arith.constant 0 : index
    %c0_235 = arith.constant 0 : index
    %444 = vector.load %arg12[%c1_233, %c0_234, %c0_235] : memref<2x32x64xbf16, #tpu.memory_space<vmem>>, vector<1x32x64xbf16>
    %445 = vector.shape_cast %444 : vector<1x32x64xbf16> to vector<32x64xbf16>
    %cst_236 = arith.constant dense<0.000000e+00> : vector<2x8x64xf32>
    %446 = tpu.matmul %443, %445, %cst_236 {dimension_numbers = #tpu.dot_dimension_numbers<[2], [0], [0, 1], [1], [0, 0, 0, 1, 1, 1], [], []>} : vector<2x8x32xbf16>, vector<32x64xbf16>, vector<2x8x64xf32> -> vector<2x8x64xf32>
    %c1_237 = arith.constant 1 : index
    %c0_238 = arith.constant 0 : index
    %c0_239 = arith.constant 0 : index
    %447 = vector.load %arg13[%c1_237, %c0_238, %c0_239] : memref<2x1x64xf32, #tpu.memory_space<vmem>>, vector<1x1x64xf32>
    %448 = vector.shape_cast %447 : vector<1x1x64xf32> to vector<1x64xf32>
    %449 = vector.shape_cast %448 : vector<1x64xf32> to vector<1x1x64xf32>
    %450 = vector.broadcast %449 : vector<1x1x64xf32> to vector<2x8x64xf32>
    %451 = arith.addf %446, %450 : vector<2x8x64xf32>
    %452 = arith.mulf %451, %451 : vector<2x8x64xf32>
    %453 = arith.mulf %451, %452 : vector<2x8x64xf32>
    %cst_240 = arith.constant 4.471500e-02 : f32
    %454 = vector.broadcast %cst_240 : f32 to vector<2x8x64xf32>
    %455 = arith.mulf %454, %453 : vector<2x8x64xf32>
    %456 = arith.addf %451, %455 : vector<2x8x64xf32>
    %cst_241 = arith.constant 0.797884583 : f32
    %457 = vector.broadcast %cst_241 : f32 to vector<2x8x64xf32>
    %458 = arith.mulf %457, %456 : vector<2x8x64xf32>
    %459 = math.tanh %458 : vector<2x8x64xf32>
    %cst_242 = arith.constant 1.000000e+00 : f32
    %460 = vector.broadcast %cst_242 : f32 to vector<2x8x64xf32>
    %461 = arith.addf %460, %459 : vector<2x8x64xf32>
    %cst_243 = arith.constant 5.000000e-01 : f32
    %462 = vector.broadcast %cst_243 : f32 to vector<2x8x64xf32>
    %463 = arith.mulf %462, %461 : vector<2x8x64xf32>
    %464 = arith.mulf %451, %463 : vector<2x8x64xf32>
    %465 = arith.truncf %464 : vector<2x8x64xf32> to vector<2x8x64xbf16>
    %c1_244 = arith.constant 1 : index
    %c0_245 = arith.constant 0 : index
    %c0_246 = arith.constant 0 : index
    %466 = vector.load %arg14[%c1_244, %c0_245, %c0_246] : memref<2x64x32xbf16, #tpu.memory_space<vmem>>, vector<1x64x32xbf16>
    %467 = vector.shape_cast %466 : vector<1x64x32xbf16> to vector<64x32xbf16>
    %cst_247 = arith.constant dense<0.000000e+00> : vector<2x8x32xf32>
    %468 = tpu.matmul %465, %467, %cst_247 {dimension_numbers = #tpu.dot_dimension_numbers<[2], [0], [0, 1], [1], [0, 0, 0, 1, 1, 1], [], []>} : vector<2x8x64xbf16>, vector<64x32xbf16>, vector<2x8x32xf32> -> vector<2x8x32xf32>
    %c1_248 = arith.constant 1 : index
    %c0_249 = arith.constant 0 : index
    %c0_250 = arith.constant 0 : index
    %469 = vector.load %arg15[%c1_248, %c0_249, %c0_250] : memref<2x1x32xf32, #tpu.memory_space<vmem>>, vector<1x1x32xf32>
    %470 = vector.shape_cast %469 : vector<1x1x32xf32> to vector<1x32xf32>
    %471 = vector.shape_cast %470 : vector<1x32xf32> to vector<1x1x32xf32>
    %472 = vector.broadcast %471 : vector<1x1x32xf32> to vector<2x8x32xf32>
    %473 = arith.addf %468, %472 : vector<2x8x32xf32>
    %474 = arith.addf %473, %442 : vector<2x8x32xf32>
    %c1_251 = arith.constant 1 : index
    %c0_252 = arith.constant 0 : index
    %c0_253 = arith.constant 0 : index
    %475 = vector.load %arg16[%c1_251, %c0_252, %c0_253] : memref<2x1x32xf32, #tpu.memory_space<vmem>>, vector<1x1x32xf32>
    %476 = vector.shape_cast %475 : vector<1x1x32xf32> to vector<1x32xf32>
    %c1_254 = arith.constant 1 : index
    %c0_255 = arith.constant 0 : index
    %c0_256 = arith.constant 0 : index
    %477 = vector.load %arg17[%c1_254, %c0_255, %c0_256] : memref<2x1x32xf32, #tpu.memory_space<vmem>>, vector<1x1x32xf32>
    %478 = vector.shape_cast %477 : vector<1x1x32xf32> to vector<1x32xf32>
    %cst_257 = arith.constant dense<0.000000e+00> : vector<2x8xf32>
    %479 = vector.multi_reduction <add>, %474, %cst_257 [2] : vector<2x8x32xf32> to vector<2x8xf32>
    %480 = vector.shape_cast %479 : vector<2x8xf32> to vector<2x8x1xf32>
    %cst_258 = arith.constant 3.200000e+01 : f32
    %481 = vector.broadcast %cst_258 : f32 to vector<2x8x1xf32>
    %482 = arith.divf %480, %481 : vector<2x8x1xf32>
    %483 = vector.broadcast %482 : vector<2x8x1xf32> to vector<2x8x32xf32>
    %484 = arith.subf %474, %483 : vector<2x8x32xf32>
    %485 = arith.mulf %484, %484 : vector<2x8x32xf32>
    %cst_259 = arith.constant dense<0.000000e+00> : vector<2x8xf32>
    %486 = vector.multi_reduction <add>, %485, %cst_259 [2] : vector<2x8x32xf32> to vector<2x8xf32>
    %487 = vector.shape_cast %486 : vector<2x8xf32> to vector<2x8x1xf32>
    %cst_260 = arith.constant 3.200000e+01 : f32
    %488 = vector.broadcast %cst_260 : f32 to vector<2x8x1xf32>
    %489 = arith.divf %487, %488 : vector<2x8x1xf32>
    %490 = vector.broadcast %482 : vector<2x8x1xf32> to vector<2x8x32xf32>
    %491 = arith.subf %474, %490 : vector<2x8x32xf32>
    %cst_261 = arith.constant 9.99999996E-13 : f32
    %492 = vector.broadcast %cst_261 : f32 to vector<2x8x1xf32>
    %493 = arith.addf %489, %492 : vector<2x8x1xf32>
    %494 = math.rsqrt %493 : vector<2x8x1xf32>
    %495 = vector.broadcast %494 : vector<2x8x1xf32> to vector<2x8x32xf32>
    %496 = arith.mulf %491, %495 : vector<2x8x32xf32>
    %497 = vector.shape_cast %476 : vector<1x32xf32> to vector<1x1x32xf32>
    %498 = vector.broadcast %497 : vector<1x1x32xf32> to vector<2x8x32xf32>
    %499 = arith.mulf %496, %498 : vector<2x8x32xf32>
    %500 = vector.shape_cast %478 : vector<1x32xf32> to vector<1x1x32xf32>
    %501 = vector.broadcast %500 : vector<1x1x32xf32> to vector<2x8x32xf32>
    %502 = arith.addf %499, %501 : vector<2x8x32xf32>
    %503 = vector.extract_strided_slice %502 {offsets = [0, 0, 0], sizes = [2, 1, 32], strides = [1, 1, 1]} : vector<2x8x32xf32> to vector<2x1x32xf32>
    %504 = vector.shape_cast %503 : vector<2x1x32xf32> to vector<2x32xf32>
    %505 = arith.truncf %504 : vector<2x32xf32> to vector<2x32xbf16>
    %c0_262 = arith.constant 0 : index
    %c0_263 = arith.constant 0 : index
    %506 = vector.load %arg18[%c0_262, %c0_263] : memref<32x128xbf16, #tpu.memory_space<vmem>>, vector<32x128xbf16>
    %cst_264 = arith.constant dense<0.000000e+00> : vector<2x128xf32>
    %507 = tpu.matmul %505, %506, %cst_264 {dimension_numbers = #tpu.dot_dimension_numbers<[1], [0], [0], [1], [0, 0, 1, 1], [], []>} : vector<2x32xbf16>, vector<32x128xbf16>, vector<2x128xf32> -> vector<2x128xf32>
    %c0_265 = arith.constant 0 : index
    %c0_266 = arith.constant 0 : index
    %508 = vector.load %arg19[%c0_265, %c0_266] : memref<1x128xf32, #tpu.memory_space<vmem>>, vector<1x128xf32>
    %509 = vector.broadcast %508 : vector<1x128xf32> to vector<2x128xf32>
    %510 = arith.addf %507, %509 : vector<2x128xf32>
    %511 = vector.shape_cast %510 : vector<2x128xf32> to vector<1x2x128xf32>
    %c0_267 = arith.constant 0 : index
    %c0_268 = arith.constant 0 : index
    %c0_269 = arith.constant 0 : index
    %512 = vector.load %arg20[%c0_267, %c0_268, %c0_269] : memref<1x2x128xf32, #tpu.memory_space<vmem>>, vector<1x2x128xf32>
    tpu.vector_store %arg20[%c0_267, %c0_268, %c0_269], %511 {strides = array<i32>} : memref<1x2x128xf32, #tpu.memory_space<vmem>>, vector<1x2x128xf32>,
    return
  }
  func.func @transform_0(%arg0: i32, %arg1: memref<2x8xi32, #tpu.memory_space<smem>>) -> (i32, i32, i32) {
    %c0_i32 = arith.constant 0 : i32
    %c0_i32_0 = arith.constant 0 : i32
    %c0_i32_1 = arith.constant 0 : i32
    %c0_i32_2 = arith.constant 0 : i32
    return %c0_i32, %c0_i32_0, %c0_i32_1 : i32, i32, i32
  }
  func.func @transform_1(%arg0: i32, %arg1: memref<2x8xi32, #tpu.memory_space<smem>>) -> (i32, i32) {
    %c0_i32 = arith.constant 0 : i32
    %c0_i32_0 = arith.constant 0 : i32
    %c0_i32_1 = arith.constant 0 : i32
    return %c0_i32, %c0_i32_0 : i32, i32
  }
  func.func @transform_2(%arg0: i32, %arg1: memref<2x8xi32, #tpu.memory_space<smem>>) -> (i32, i32) {
    %c0_i32 = arith.constant 0 : i32
    %c0_i32_0 = arith.constant 0 : i32
    %c0_i32_1 = arith.constant 0 : i32
    return %c0_i32, %c0_i32_0 : i32, i32
  }
  func.func @transform_3(%arg0: i32, %arg1: memref<2x8xi32, #tpu.memory_space<smem>>) -> (i32, i32) {
    %c0_i32 = arith.constant 0 : i32
    %c0_i32_0 = arith.constant 0 : i32
    %c0_i32_1 = arith.constant 0 : i32
    return %c0_i32, %c0_i32_0 : i32, i32
  }
  func.func @transform_4(%arg0: i32, %arg1: memref<2x8xi32, #tpu.memory_space<smem>>) -> (i32, i32, i32) {
    %c0_i32 = arith.constant 0 : i32
    %c0_i32_0 = arith.constant 0 : i32
    %c0_i32_1 = arith.constant 0 : i32
    %c0_i32_2 = arith.constant 0 : i32
    return %c0_i32, %c0_i32_0, %c0_i32_1 : i32, i32, i32
  }
  func.func @transform_5(%arg0: i32, %arg1: memref<2x8xi32, #tpu.memory_space<smem>>) -> (i32, i32, i32) {
    %c0_i32 = arith.constant 0 : i32
    %c0_i32_0 = arith.constant 0 : i32
    %c0_i32_1 = arith.constant 0 : i32
    %c0_i32_2 = arith.constant 0 : i32
    return %c0_i32, %c0_i32_0, %c0_i32_1 : i32, i32, i32
  }
  func.func @transform_6(%arg0: i32, %arg1: memref<2x8xi32, #tpu.memory_space<smem>>) -> (i32, i32, i32) {
    %c0_i32 = arith.constant 0 : i32
    %c0_i32_0 = arith.constant 0 : i32
    %c0_i32_1 = arith.constant 0 : i32
    %c0_i32_2 = arith.constant 0 : i32
    return %c0_i32, %c0_i32_0, %c0_i32_1 : i32, i32, i32
  }
  func.func @transform_7(%arg0: i32, %arg1: memref<2x8xi32, #tpu.memory_space<smem>>) -> (i32, i32, i32) {
    %c0_i32 = arith.constant 0 : i32
    %c0_i32_0 = arith.constant 0 : i32
    %c0_i32_1 = arith.constant 0 : i32
    %c0_i32_2 = arith.constant 0 : i32
    return %c0_i32, %c0_i32_0, %c0_i32_1 : i32, i32, i32
  }
  func.func @transform_8(%arg0: i32, %arg1: memref<2x8xi32, #tpu.memory_space<smem>>) -> (i32, i32, i32) {
    %c0_i32 = arith.constant 0 : i32
    %c0_i32_0 = arith.constant 0 : i32
    %c0_i32_1 = arith.constant 0 : i32
    %c0_i32_2 = arith.constant 0 : i32
    return %c0_i32, %c0_i32_0, %c0_i32_1 : i32, i32, i32
  }
  func.func @transform_9(%arg0: i32, %arg1: memref<2x8xi32, #tpu.memory_space<smem>>) -> (i32, i32, i32) {
    %c0_i32 = arith.constant 0 : i32
    %c0_i32_0 = arith.constant 0 : i32
    %c0_i32_1 = arith.constant 0 : i32
    %c0_i32_2 = arith.constant 0 : i32
    return %c0_i32, %c0_i32_0, %c0_i32_1 : i32, i32, i32
  }
  func.func @transform_10(%arg0: i32, %arg1: memref<2x8xi32, #tpu.memory_space<smem>>) -> (i32, i32, i32) {
    %c0_i32 = arith.constant 0 : i32
    %c0_i32_0 = arith.constant 0 : i32
    %c0_i32_1 = arith.constant 0 : i32
    %c0_i32_2 = arith.constant 0 : i32
    return %c0_i32, %c0_i32_0, %c0_i32_1 : i32, i32, i32
  }
  func.func @transform_11(%arg0: i32, %arg1: memref<2x8xi32, #tpu.memory_space<smem>>) -> (i32, i32, i32) {
    %c0_i32 = arith.constant 0 : i32
    %c0_i32_0 = arith.constant 0 : i32
    %c0_i32_1 = arith.constant 0 : i32
    %c0_i32_2 = arith.constant 0 : i32
    return %c0_i32, %c0_i32_0, %c0_i32_1 : i32, i32, i32
  }
  func.func @transform_12(%arg0: i32, %arg1: memref<2x8xi32, #tpu.memory_space<smem>>) -> (i32, i32, i32) {
    %c0_i32 = arith.constant 0 : i32
    %c0_i32_0 = arith.constant 0 : i32
    %c0_i32_1 = arith.constant 0 : i32
    %c0_i32_2 = arith.constant 0 : i32
    return %c0_i32, %c0_i32_0, %c0_i32_1 : i32, i32, i32
  }
  func.func @transform_13(%arg0: i32, %arg1: memref<2x8xi32, #tpu.memory_space<smem>>) -> (i32, i32, i32) {
    %c0_i32 = arith.constant 0 : i32
    %c0_i32_0 = arith.constant 0 : i32
    %c0_i32_1 = arith.constant 0 : i32
    %c0_i32_2 = arith.constant 0 : i32
    return %c0_i32, %c0_i32_0, %c0_i32_1 : i32, i32, i32
  }
  func.func @transform_14(%arg0: i32, %arg1: memref<2x8xi32, #tpu.memory_space<smem>>) -> (i32, i32, i32) {
    %c0_i32 = arith.constant 0 : i32
    %c0_i32_0 = arith.constant 0 : i32
    %c0_i32_1 = arith.constant 0 : i32
    %c0_i32_2 = arith.constant 0 : i32
    return %c0_i32, %c0_i32_0, %c0_i32_1 : i32, i32, i32
  }
  func.func @transform_15(%arg0: i32, %arg1: memref<2x8xi32, #tpu.memory_space<smem>>) -> (i32, i32, i32) {
    %c0_i32 = arith.constant 0 : i32
    %c0_i32_0 = arith.constant 0 : i32
    %c0_i32_1 = arith.constant 0 : i32
    %c0_i32_2 = arith.constant 0 : i32
    return %c0_i32, %c0_i32_0, %c0_i32_1 : i32, i32, i32
  }
  func.func @transform_16(%arg0: i32, %arg1: memref<2x8xi32, #tpu.memory_space<smem>>) -> (i32, i32) {
    %c0_i32 = arith.constant 0 : i32
    %c0_i32_0 = arith.constant 0 : i32
    %c0_i32_1 = arith.constant 0 : i32
    return %c0_i32, %c0_i32_0 : i32, i32
  }
  func.func @transform_17(%arg0: i32, %arg1: memref<2x8xi32, #tpu.memory_space<smem>>) -> (i32, i32) {
    %c0_i32 = arith.constant 0 : i32
    %c0_i32_0 = arith.constant 0 : i32
    %c0_i32_1 = arith.constant 0 : i32
    return %c0_i32, %c0_i32_0 : i32, i32
  }
  func.func @transform_18(%arg0: i32, %arg1: memref<2x8xi32, #tpu.memory_space<smem>>) -> (i32, i32, i32) {
    %c0_i32 = arith.constant 0 : i32
    %c0_i32_0 = arith.constant 0 : i32
    %c0_i32_1 = arith.constant 0 : i32
    return %arg0, %c0_i32, %c0_i32_0 : i32, i32, i32
  }
}

</mosaic_0001>

<llo_original>
// kernel: tpu_custom_call.1
$region0: #{tpu_custom_call.1}
  #allocation0 [shape = 'u32[]', space=smem, size = 0x4, offset = 0x4, fixed_abs, tag = 'smem constant byte address 0x4 - core index']
  #allocation1 [shape = 'u32[144,128]{1,0:T(1,128)}', space=vmem, size = 0x12000, scoped, tag = 'internal scratch']
  #allocation2 [shape = 'f32[2,8,32]{2,1,0:T(8,128)}', space=vmem, size = 0x2000, scoped, tag = 'scratch operand']
  #allocation3 [shape = 's32[1]{0}', space=sflag, size = 0x4, scoped, tag = 'scoped memory for tpu_custom_call.1']
  #allocation4 [shape = 'u8[1024]{0}', space=smem, size = 0x400, scoped, tag = 'prefetched SMEM operand 0']
  %s0 = inlined_call_operand.vmem [shape: s32[2,8], index: 0, kind: input, shape index: {}]
  %s1 = inlined_call_operand.vmem [shape: f32[100,1,32], index: 1, kind: input, shape index: {}]
  %s2 = inlined_call_operand.vmem [shape: f32[16,32], index: 2, kind: input, shape index: {}]
  %s3 = inlined_call_operand.vmem [shape: f32[1,32], index: 3, kind: input, shape index: {}]
  %s4 = inlined_call_operand.vmem [shape: f32[1,32], index: 4, kind: input, shape index: {}]
  %s5 = inlined_call_operand.vmem [shape: bf16[2,32,96], index: 5, kind: input, shape index: {}]
  %s6 = inlined_call_operand.vmem [shape: f32[2,1,96], index: 6, kind: input, shape index: {}]
  %s7 = inlined_call_operand.vmem [shape: bf16[2,32,32], index: 7, kind: input, shape index: {}]
  %s8 = inlined_call_operand.vmem [shape: f32[2,1,32], index: 8, kind: input, shape index: {}]
  %s9 = inlined_call_operand.vmem [shape: f32[2,1,32], index: 9, kind: input, shape index: {}]
  %s10 = inlined_call_operand.vmem [shape: f32[2,1,32], index: 10, kind: input, shape index: {}]
  %s11 = inlined_call_operand.vmem [shape: bf16[2,32,64], index: 11, kind: input, shape index: {}]
  %s12 = inlined_call_operand.vmem [shape: f32[2,1,64], index: 12, kind: input, shape index: {}]
  %s13 = inlined_call_operand.vmem [shape: bf16[2,64,32], index: 13, kind: input, shape index: {}]
  %s14 = inlined_call_operand.vmem [shape: f32[2,1,32], index: 14, kind: input, shape index: {}]
  %s15 = inlined_call_operand.vmem [shape: f32[2,1,32], index: 15, kind: input, shape index: {}]
  %s16 = inlined_call_operand.vmem [shape: f32[2,1,32], index: 16, kind: input, shape index: {}]
  %s17 = inlined_call_operand.vmem [shape: bf16[32,128], index: 17, kind: input, shape index: {}]
  %s18 = inlined_call_operand.vmem [shape: f32[1,128], index: 18, kind: input, shape index: {}]
  %s19 = inlined_call_operand.hbm [shape: f32[1,2,128], index: 19, kind: output, shape index: {}]
  %s20 = sld [smem:[#allocation0]]
  $region82: #{tpu_custom_call.1} parent=0
    _
  %s22 = ssub.s32 1, %s20
  %s23 = scalar_select 0, %s22, %s20
  %s24 = sshll.u32 %s0, 4
  %s25 = int_to_ptr.vmem [resolvable:$true] %s24
  %27 = dma.vmem_to_smem %s25, 32, [#allocation4], [#allocation3]
  %28 = dma.done [#allocation3], 32
  %29 = sfence
  $region1: #{tpu_custom_call.1} parent=0
    #allocation5 [shape = 'u8[1024]{0}', space=vmem, size = 0x400, scoped, tag = 'output window, operand 0, single buffered']
    #allocation6 [shape = 's32[1]{0}', space=sflag, size = 0x4, scoped, tag = 'scoped memory for tpu_custom_call.1']
    %30 = vsyncpa [#allocation6], 0
    // Predicated region
    $region2: #{tpu_custom_call.1} parent=1 // pred_check
      _
    $region3: #{tpu_custom_call.1} parent=1 // pred_check_branch
      %32 = sbr.rel (0) target = $region5
    $region4: #{tpu_custom_call.1} parent=1 // pred_region
      _
    $region5: #{tpu_custom_call.1} parent=1 // pred_fallthru
      _
    // Predicated region
    $region6: #{tpu_custom_call.1} parent=1 // pred_check
      _
    $region7: #{tpu_custom_call.1} parent=1 // pred_check_branch
      %34 = sbr.rel (0) target = $region9
    $region8: #{tpu_custom_call.1} parent=1 // pred_region
      _
    $region9: #{tpu_custom_call.1} parent=1 // pred_fallthru
      _
    // Predicated region
    $region10: #{tpu_custom_call.1} parent=1 // pred_check
      _
    $region11: #{tpu_custom_call.1} parent=1 // pred_check_branch
      %36 = sbr.rel (0) target = $region13
    $region12: #{tpu_custom_call.1} parent=1 // pred_region
      _
    $region13: #{tpu_custom_call.1} parent=1 // pred_fallthru
      _
    // Predicated region
    $region14: #{tpu_custom_call.1} parent=1 // pred_check
      _
    $region15: #{tpu_custom_call.1} parent=1 // pred_check_branch
      %38 = sbr.rel (0) target = $region17
    $region16: #{tpu_custom_call.1} parent=1 // pred_region
      _
    $region17: #{tpu_custom_call.1} parent=1 // pred_fallthru
      _
    // Predicated region
    $region18: #{tpu_custom_call.1} parent=1 // pred_check
      _
    $region19: #{tpu_custom_call.1} parent=1 // pred_check_branch
      %40 = sbr.rel (0) target = $region21
    $region20: #{tpu_custom_call.1} parent=1 // pred_region
      _
    $region21: #{tpu_custom_call.1} parent=1 // pred_fallthru
      _
    // Predicated region
    $region22: #{tpu_custom_call.1} parent=1 // pred_check
      _
    $region23: #{tpu_custom_call.1} parent=1 // pred_check_branch
      %42 = sbr.rel (0) target = $region25
    $region24: #{tpu_custom_call.1} parent=1 // pred_region
      _
    $region25: #{tpu_custom_call.1} parent=1 // pred_fallthru
      _
    // Predicated region
    $region26: #{tpu_custom_call.1} parent=1 // pred_check
      _
    $region27: #{tpu_custom_call.1} parent=1 // pred_check_branch
      %44 = sbr.rel (0) target = $region29
    $region28: #{tpu_custom_call.1} parent=1 // pred_region
      _
    $region29: #{tpu_custom_call.1} parent=1 // pred_fallthru
      _
    // Predicated region
    $region30: #{tpu_custom_call.1} parent=1 // pred_check
      _
    $region31: #{tpu_custom_call.1} parent=1 // pred_check_branch
      %46 = sbr.rel (0) target = $region33
    $region32: #{tpu_custom_call.1} parent=1 // pred_region
      _
    $region33: #{tpu_custom_call.1} parent=1 // pred_fallthru
      _
    // Predicated region
    $region34: #{tpu_custom_call.1} parent=1 // pred_check
      _
    $region35: #{tpu_custom_call.1} parent=1 // pred_check_branch
      %48 = sbr.rel (0) target = $region37
    $region36: #{tpu_custom_call.1} parent=1 // pred_region
      _
    $region37: #{tpu_custom_call.1} parent=1 // pred_fallthru
      _
    // Predicated region
    $region38: #{tpu_custom_call.1} parent=1 // pred_check
      _
    $region39: #{tpu_custom_call.1} parent=1 // pred_check_branch
      %50 = sbr.rel (0) target = $region41
    $region40: #{tpu_custom_call.1} parent=1 // pred_region
      _
    $region41: #{tpu_custom_call.1} parent=1 // pred_fallthru
      _
    // Predicated region
    $region42: #{tpu_custom_call.1} parent=1 // pred_check
      _
    $region43: #{tpu_custom_call.1} parent=1 // pred_check_branch
      %52 = sbr.rel (0) target = $region45
    $region44: #{tpu_custom_call.1} parent=1 // pred_region
      _
    $region45: #{tpu_custom_call.1} parent=1 // pred_fallthru
      _
    // Predicated region
    $region46: #{tpu_custom_call.1} parent=1 // pred_check
      _
    $region47: #{tpu_custom_call.1} parent=1 // pred_check_branch
      %54 = sbr.rel (0) target = $region49
    $region48: #{tpu_custom_call.1} parent=1 // pred_region
      _
    $region49: #{tpu_custom_call.1} parent=1 // pred_fallthru
      _
    // Predicated region
    $region50: #{tpu_custom_call.1} parent=1 // pred_check
      _
    $region51: #{tpu_custom_call.1} parent=1 // pred_check_branch
      %56 = sbr.rel (0) target = $region53
    $region52: #{tpu_custom_call.1} parent=1 // pred_region
      _
    $region53: #{tpu_custom_call.1} parent=1 // pred_fallthru
      _
    // Predicated region
    $region54: #{tpu_custom_call.1} parent=1 // pred_check
      _
    $region55: #{tpu_custom_call.1} parent=1 // pred_check_branch
      %58 = sbr.rel (0) target = $region57
    $region56: #{tpu_custom_call.1} parent=1 // pred_region
      _
    $region57: #{tpu_custom_call.1} parent=1 // pred_fallthru
      _
    // Predicated region
    $region58: #{tpu_custom_call.1} parent=1 // pred_check
      _
    $region59: #{tpu_custom_call.1} parent=1 // pred_check_branch
      %60 = sbr.rel (0) target = $region61
    $region60: #{tpu_custom_call.1} parent=1 // pred_region
      _
    $region61: #{tpu_custom_call.1} parent=1 // pred_fallthru
      _
    // Predicated region
    $region62: #{tpu_custom_call.1} parent=1 // pred_check
      _
    $region63: #{tpu_custom_call.1} parent=1 // pred_check_branch
      %62 = sbr.rel (0) target = $region65
    $region64: #{tpu_custom_call.1} parent=1 // pred_region
      _
    $region65: #{tpu_custom_call.1} parent=1 // pred_fallthru
      _
    // Predicated region
    $region66: #{tpu_custom_call.1} parent=1 // pred_check
      _
    $region67: #{tpu_custom_call.1} parent=1 // pred_check_branch
      %64 = sbr.rel (0) target = $region69
    $region68: #{tpu_custom_call.1} parent=1 // pred_region
      _
    $region69: #{tpu_custom_call.1} parent=1 // pred_fallthru
      _
    // Predicated region
    $region70: #{tpu_custom_call.1} parent=1 // pred_check
      _
    $region71: #{tpu_custom_call.1} parent=1 // pred_check_branch
      %66 = sbr.rel (0) target = $region73
    $region72: #{tpu_custom_call.1} parent=1 // pred_region
      _
    $region73: #{tpu_custom_call.1} parent=1 // pred_fallthru
      _
    %s68 = smul.u32 0, 2
    %s69 = smul.u32 %s68, 128
    %s70 = sld [smem:[#allocation4 + %s69]]
    %s71 = scalar_lea.vmem %s1, %s70
    %v72 = vld [vmem:[%s71] sm:$0x1]
    %vm73 = vcmask 253952
    %74 = vst.msk [vmem:[#allocation2] sm:$0x1] %vm73, %v72
    %s75 = sadd.s32 %s69, 1
    %s76 = sld [smem:[#allocation4 + %s75]]
    %s77 = scalar_lea.vmem %s1, %s76
    %v78 = vld [vmem:[%s77] sm:$0x1]
    %79 = vst.msk [vmem:[#allocation2 + $0x1] sm:$0x1] %vm73, %v78
    %s80 = sadd.s32 %s69, 2
    %s81 = sld [smem:[#allocation4 + %s80]]
    %s82 = scalar_lea.vmem %s1, %s81
    %v83 = vld [vmem:[%s82] sm:$0x1]
    %84 = vst.msk [vmem:[#allocation2 + $0x2] sm:$0x1] %vm73, %v83
    %s85 = sadd.s32 %s69, 3
    %s86 = sld [smem:[#allocation4 + %s85]]
    %s87 = scalar_lea.vmem %s1, %s86
    %v88 = vld [vmem:[%s87] sm:$0x1]
    %89 = vst.msk [vmem:[#allocation2 + $0x3] sm:$0x1] %vm73, %v88
    %s90 = sadd.s32 %s69, 4
    %s91 = sld [smem:[#allocation4 + %s90]]
    %s92 = scalar_lea.vmem %s1, %s91
    %v93 = vld [vmem:[%s92] sm:$0x1]
    %94 = vst.msk [vmem:[#allocation2 + $0x4] sm:$0x1] %vm73, %v93
    %s95 = sadd.s32 %s69, 5
    %s96 = sld [smem:[#allocation4 + %s95]]
    %s97 = scalar_lea.vmem %s1, %s96
    %v98 = vld [vmem:[%s97] sm:$0x1]
    %99 = vst.msk [vmem:[#allocation2 + $0x5] sm:$0x1] %vm73, %v98
    %s100 = sadd.s32 %s69, 6
    %s101 = sld [smem:[#allocation4 + %s100]]
    %s102 = scalar_lea.vmem %s1, %s101
    %v103 = vld [vmem:[%s102] sm:$0x1]
    %104 = vst.msk [vmem:[#allocation2 + $0x6] sm:$0x1] %vm73, %v103
    %s105 = sadd.s32 %s69, 7
    %s106 = sld [smem:[#allocation4 + %s105]]
    %s107 = scalar_lea.vmem %s1, %s106
    %v108 = vld [vmem:[%s107] sm:$0x1]
    %109 = vst.msk [vmem:[#allocation2 + $0x7] sm:$0x1] %vm73, %v108
    %s110 = sadd.s32 %s68, 1
    %s111 = smul.u32 %s110, 128
    %s112 = sld [smem:[#allocation4 + %s111]]
    %s113 = scalar_lea.vmem %s1, %s112
    %v114 = vld [vmem:[%s113] sm:$0x1]
    %s115 = scalar_lea.vmem [#allocation2], 8
    %116 = vst.msk [vmem:[%s115] sm:$0x1] %vm73, %v114
    %s117 = sadd.s32 %s111, 1
    %s118 = sld [smem:[#allocation4 + %s117]]
    %s119 = scalar_lea.vmem %s1, %s118
    %v120 = vld [vmem:[%s119] sm:$0x1]
    %121 = vst.msk [vmem:[%s115 + $0x1] sm:$0x1] %vm73, %v120
    %s122 = sadd.s32 %s111, 2
    %s123 = sld [smem:[#allocation4 + %s122]]
    %s124 = scalar_lea.vmem %s1, %s123
    %v125 = vld [vmem:[%s124] sm:$0x1]
    %126 = vst.msk [vmem:[%s115 + $0x2] sm:$0x1] %vm73, %v125
    %s127 = sadd.s32 %s111, 3
    %s128 = sld [smem:[#allocation4 + %s127]]
    %s129 = scalar_lea.vmem %s1, %s128
    %v130 = vld [vmem:[%s129] sm:$0x1]
    %131 = vst.msk [vmem:[%s115 + $0x3] sm:$0x1] %vm73, %v130
    %s132 = sadd.s32 %s111, 4
    %s133 = sld [smem:[#allocation4 + %s132]]
    %s134 = scalar_lea.vmem %s1, %s133
    %v135 = vld [vmem:[%s134] sm:$0x1]
    %136 = vst.msk [vmem:[%s115 + $0x4] sm:$0x1] %vm73, %v135
    %s137 = sadd.s32 %s111, 5
    %s138 = sld [smem:[#allocation4 + %s137]]
    %s139 = scalar_lea.vmem %s1, %s138
    %v140 = vld [vmem:[%s139] sm:$0x1]
    %141 = vst.msk [vmem:[%s115 + $0x5] sm:$0x1] %vm73, %v140
    %s142 = sadd.s32 %s111, 6
    %s143 = sld [smem:[#allocation4 + %s142]]
    %s144 = scalar_lea.vmem %s1, %s143
    %v145 = vld [vmem:[%s144] sm:$0x1]
    %146 = vst.msk [vmem:[%s115 + $0x6] sm:$0x1] %vm73, %v145
    %s147 = sadd.s32 %s111, 7
    %s148 = sld [smem:[#allocation4 + %s147]]
    %s149 = scalar_lea.vmem %s1, %s148
    %v150 = vld [vmem:[%s149] sm:$0x1]
    %151 = vst.msk [vmem:[%s115 + $0x7] sm:$0x1] %vm73, %v150
    %v152 = vld [vmem:[#allocation2] sm:$0xff]
    %v153 = vld [vmem:[#allocation2 + $0x8] sm:$0xff]
    %v154 = vld [vmem:[%s2] sm:$0xff]
    %v155 = vadd.f32 %v152, %v154
    %v156 = vadd.f32 %v153, %v154
    %v157 = vld [vmem:[%s3] sm:$0x1]
    %v158 = vld [vmem:[%s4] sm:$0x1]
    %vm159 = vcmask 261120
    %v160 = vsel %vm159, %v155, 0.0
    %161 = vadd.xlane.f32.xlu0 %v160
    %v162 = vpop.xlane.xlu0 %161
    %v163 = vsel %vm159, %v156, 0.0
    %164 = vadd.xlane.f32.xlu0 %v163
    %v165 = vpop.xlane.xlu0 %164
    %v166 = vrcp.pop 32.0
    %v167 = vmul.f32 %v162, %v166
    %v168 = vmul.f32 %v165, %v166
    %v169 = vsub.f32 %v155, %v167
    %v170 = vsub.f32 %v156, %v168
    %v171 = vmul.f32 %v169, %v169
    %v172 = vmul.f32 %v170, %v170
    %v173 = vsel %vm159, %v171, 0.0
    %174 = vadd.xlane.f32.xlu0 %v173
    %v175 = vpop.xlane.xlu0 %174
    %v176 = vsel %vm159, %v172, 0.0
    %177 = vadd.xlane.f32.xlu0 %v176
    %v178 = vpop.xlane.xlu0 %177
    %v179 = vmul.f32 %v175, %v166
    %v180 = vmul.f32 %v178, %v166
    %v181 = vadd.f32 %v179, 1e-12
    %v182 = vadd.f32 %v180, 1e-12
    %v183 = vrsqrt.pop %v181
    %v184 = vrsqrt.pop %v182
    %v185 = vmul.f32 %v169, %v183
    %v186 = vmul.f32 %v170, %v184
    %v188 = vlaneseq
    %v189 = vshrl.u32 %v188, 7
    %v190 = vsub.s32 0, %v189
    %v191 = vrot.slane %v157, %v190
    %v193 = vmul.f32 %v185, %v191
    %v194 = vmul.f32 %v186, %v191
    %v196 = vlaneseq
    %v197 = vshrl.u32 %v196, 7
    %v198 = vsub.s32 0, %v197
    %v199 = vrot.slane %v158, %v198
    %v201 = vadd.f32 %v193, %v199
    %v202 = vadd.f32 %v194, %v199
    %v203 = vpack.c.bf16 %v201, %v201
    %v204 = vpack.c.bf16 %v202, %v202
    %v205 = vld [vmem:[%s5] sm:$0xf]
    %v206 = vld [vmem:[%s5 + $0x4] sm:$0xf]
    %v207 = vld [vmem:[%s5 + $0x8] sm:$0xf]
    %v208 = vld [vmem:[%s5 + $0xc] sm:$0xf]
    %v209 = vld [vmem:[%s6] sm:$0x1]
    %v211 = vlaneseq
    %v212 = vshrl.u32 %v211, 7
    %v213 = vsub.s32 0, %v212
    %v214 = vrot.slane %v209, %v213
    %v218 = vunpack.c.l.b16 %v203
    %v219 = vunpack.c.l.b16 %v204
    %v220 = vpack.c.b16 %v219, %v218
    %v225 = vunpack.c.l.b16 %v205
    %v226 = vunpack.c.l.b16 %v206
    %v227 = vunpack.c.l.b16 %v207
    %v228 = vunpack.c.l.b16 %v208
    %v229 = vpack.c.b16 %v226, %v225
    %v230 = vpack.c.b16 %v228, %v227
    %v234 = vsel %vm159, %v220, 0
    %236 = vmatprep.subr.bf16.mxu0 0
    %237 = vmatpush1.bf16.msra.mxu0 %v229
    %238 = vmatprep.subr.bf16.mxu0 0
    %239 = vmatpush1.bf16.msra.mxu0 %v230
    %240 = vmatprep.subr.bf16.mxu0 0
    %241 = vmatpush1.bf16.msra.mxu0 0
    %242 = vmatprep.subr.bf16.mxu0 0
    %243 = vmatpush1.bf16.msra.mxu0 0
    %244 = vmatprep.subr.bf16.mxu0 0
    %245 = vmatpush1.bf16.msra.mxu0 0
    %246 = vmatprep.subr.bf16.mxu0 0
    %247 = vmatpush1.bf16.msra.mxu0 0
    %248 = vmatprep.subr.bf16.mxu0 0
    %249 = vmatpush1.bf16.msra.mxu0 0
    %250 = vmatprep.subr.bf16.mxu0 0
    %251 = vmatpush1.bf16.msra.mxu0 0
    %252 = vmatprep.subr.bf16.mxu0 0
    %253 = vmatpush1.bf16.msra.mxu0 0
    %254 = vmatprep.subr.bf16.mxu0 0
    %255 = vmatpush1.bf16.msra.mxu0 0
    %256 = vmatprep.subr.bf16.mxu0 0
    %257 = vmatpush1.bf16.msra.mxu0 0
    %258 = vmatprep.subr.bf16.mxu0 0
    %259 = vmatpush1.bf16.msra.mxu0 0
    %260 = vmatprep.subr.bf16.mxu0 0
    %261 = vmatpush1.bf16.msra.mxu0 0
    %262 = vmatprep.subr.bf16.mxu0 0
    %263 = vmatpush1.bf16.msra.mxu0 0
    %264 = vmatprep.subr.bf16.mxu0 0
    %265 = vmatpush1.bf16.msra.mxu0 0
    %266 = vmatprep.subr.bf16.mxu0 0
    %267 = vmatpush1.bf16.msra.mxu0 0
    %268 = vmatprep.mubr.bf16.mxu0 0
    %269 = vmatmul.mubr.bf16.gmra.mrb[0].mxu0 %v234
    %v270 = vpop.f32.mrb[0].mxu0
    %v271 = vadd.f32 %v214, %v270
    %v272 = vpop.f32.mrb[0].mxu0
    %v273 = vpop.f32.mrb[0].mxu0
    %v274 = vadd.f32 %v214, %v273
    %v275 = vpop.f32.mrb[0].mxu0
    %276 = vdwg.mxu0
    %v277 = vld [vmem:[%s7] sm:$0xf]
    %v278 = vld [vmem:[%s7 + $0x4] sm:$0xf]
    %v279 = vld [vmem:[%s7 + $0x8] sm:$0xf]
    %v280 = vld [vmem:[%s7 + $0xc] sm:$0xf]
    %282 = vrot.lane.b32.xlu0 %v271, 96
    %v283 = vpop.permute.xlu0 %282
    %vm284 = vcmask 130048
    %v285 = vsel %vm284, %v271, 0
    %v287 = vsel %vm284, %v283, 0
    %289 = vmatprep.subr.mxu0 0.0
    %290 = vmatpush1.xpose.msra.mxu0 %v287
    %291 = vmatprep.subr.mxu0 0.0
    %292 = vmatpush1.xpose.msra.mxu0 0.0
    %293 = vmatprep.subr.mxu0 0.0
    %294 = vmatpush1.xpose.msra.mxu0 0.0
    %295 = vmatprep.subr.mxu0 0.0
    %296 = vmatpush1.xpose.msra.mxu0 0.0
    %297 = vmatprep.subr.mxu0 0.0
    %298 = vmatpush1.xpose.msra.mxu0 0.0
    %299 = vmatprep.subr.mxu0 0.0
    %300 = vmatpush1.xpose.msra.mxu0 0.0
    %301 = vmatprep.subr.mxu0 0.0
    %302 = vmatpush1.xpose.msra.mxu0 0.0
    %303 = vmatprep.subr.mxu0 0.0
    %304 = vmatpush1.xpose.msra.mxu0 0.0
    %305 = vmatprep.subr.mxu0 0.0
    %306 = vmatpush1.xpose.msra.mxu0 0.0
    %307 = vmatprep.subr.mxu0 0.0
    %308 = vmatpush1.xpose.msra.mxu0 0.0
    %309 = vmatprep.subr.mxu0 0.0
    %310 = vmatpush1.xpose.msra.mxu0 0.0
    %311 = vmatprep.subr.mxu0 0.0
    %312 = vmatpush1.xpose.msra.mxu0 0.0
    %313 = vmatprep.subr.mxu0 0.0
    %314 = vmatpush1.xpose.msra.mxu0 0.0
    %315 = vmatprep.subr.mxu0 0.0
    %316 = vmatpush1.xpose.msra.mxu0 0.0
    %317 = vmatprep.subr.mxu0 0.0
    %318 = vmatpush1.xpose.msra.mxu0 0.0
    %319 = vmatprep.subr.mxu0 0.0
    %320 = vmatpush1.xpose.msra.mxu0 0.0
    %321 = vmatprep.subr.mxu0 0.0
    %322 = vmatpush1.xpose.msra.mxu0 0.0
    %323 = vmatprep.subr.mxu0 0.0
    %324 = vmatpush1.xpose.msra.mxu0 0.0
    %325 = vmatprep.subr.mxu0 0.0
    %326 = vmatpush1.xpose.msra.mxu0 0.0
    %327 = vmatprep.subr.mxu0 0.0
    %328 = vmatpush1.xpose.msra.mxu0 0.0
    %329 = vmatprep.subr.mxu0 0.0
    %330 = vmatpush1.xpose.msra.mxu0 0.0
    %331 = vmatprep.subr.mxu0 0.0
    %332 = vmatpush1.xpose.msra.mxu0 0.0
    %333 = vmatprep.subr.mxu0 0.0
    %334 = vmatpush1.xpose.msra.mxu0 0.0
    %335 = vmatprep.subr.mxu0 0.0
    %336 = vmatpush1.xpose.msra.mxu0 0.0
    %337 = vmatprep.subr.mxu0 0.0
    %338 = vmatpush1.xpose.msra.mxu0 0.0
    %339 = vmatprep.subr.mxu0 0.0
    %340 = vmatpush1.xpose.msra.mxu0 0.0
    %341 = vmatprep.subr.mxu0 0.0
    %342 = vmatpush1.xpose.msra.mxu0 0.0
    %343 = vmatprep.subr.mxu0 0.0
    %344 = vmatpush1.xpose.msra.mxu0 0.0
    %345 = vmatprep.subr.mxu0 0.0
    %346 = vmatpush1.xpose.msra.mxu0 0.0
    %347 = vmatprep.subr.mxu0 0.0
    %348 = vmatpush1.xpose.msra.mxu0 0.0
    %349 = vmatprep.subr.mxu0 0.0
    %350 = vmatpush1.xpose.msra.mxu0 0.0
    %351 = vmatprep.subr.mxu0 0.0
    %352 = vmatpush1.xpose.msra.mxu0 0.0
    %353 = vmatprep.mubr.f32.mxu0 0.0
    %354 = vmatmul.mubr.f32.gmra.mrb[0].mxu0 %v285
    %v355 = vpop.f32.mrb[0].mxu0
    %v356 = vadd.f32 0.0, %v355
    %v357 = vpop.f32.mrb[0].mxu0
    %358 = vdwg.mxu0
    %360 = vrot.lane.b32.xlu0 %v274, 96
    %v361 = vpop.permute.xlu0 %360
    %v362 = vsel %vm284, %v274, 0
    %v364 = vsel %vm284, %v361, 0
    %366 = vmatprep.subr.mxu0 0.0
    %367 = vmatpush1.xpose.msra.mxu0 %v364
    %368 = vmatprep.subr.mxu0 0.0
    %369 = vmatpush1.xpose.msra.mxu0 0.0
    %370 = vmatprep.subr.mxu0 0.0
    %371 = vmatpush1.xpose.msra.mxu0 0.0
    %372 = vmatprep.subr.mxu0 0.0
    %373 = vmatpush1.xpose.msra.mxu0 0.0
    %374 = vmatprep.subr.mxu0 0.0
    %375 = vmatpush1.xpose.msra.mxu0 0.0
    %376 = vmatprep.subr.mxu0 0.0
    %377 = vmatpush1.xpose.msra.mxu0 0.0
    %378 = vmatprep.subr.mxu0 0.0
    %379 = vmatpush1.xpose.msra.mxu0 0.0
    %380 = vmatprep.subr.mxu0 0.0
    %381 = vmatpush1.xpose.msra.mxu0 0.0
    %382 = vmatprep.subr.mxu0 0.0
    %383 = vmatpush1.xpose.msra.mxu0 0.0
    %384 = vmatprep.subr.mxu0 0.0
    %385 = vmatpush1.xpose.msra.mxu0 0.0
    %386 = vmatprep.subr.mxu0 0.0
    %387 = vmatpush1.xpose.msra.mxu0 0.0
    %388 = vmatprep.subr.mxu0 0.0
    %389 = vmatpush1.xpose.msra.mxu0 0.0
    %390 = vmatprep.subr.mxu0 0.0
    %391 = vmatpush1.xpose.msra.mxu0 0.0
    %392 = vmatprep.subr.mxu0 0.0
    %393 = vmatpush1.xpose.msra.mxu0 0.0
    %394 = vmatprep.subr.mxu0 0.0
    %395 = vmatpush1.xpose.msra.mxu0 0.0
    %396 = vmatprep.subr.mxu0 0.0
    %397 = vmatpush1.xpose.msra.mxu0 0.0
    %398 = vmatprep.subr.mxu0 0.0
    %399 = vmatpush1.xpose.msra.mxu0 0.0
    %400 = vmatprep.subr.mxu0 0.0
    %401 = vmatpush1.xpose.msra.mxu0 0.0
    %402 = vmatprep.subr.mxu0 0.0
    %403 = vmatpush1.xpose.msra.mxu0 0.0
    %404 = vmatprep.subr.mxu0 0.0
    %405 = vmatpush1.xpose.msra.mxu0 0.0
    %406 = vmatprep.subr.mxu0 0.0
    %407 = vmatpush1.xpose.msra.mxu0 0.0
    %408 = vmatprep.subr.mxu0 0.0
    %409 = vmatpush1.xpose.msra.mxu0 0.0
    %410 = vmatprep.subr.mxu0 0.0
    %411 = vmatpush1.xpose.msra.mxu0 0.0
    %412 = vmatprep.subr.mxu0 0.0
    %413 = vmatpush1.xpose.msra.mxu0 0.0
    %414 = vmatprep.subr.mxu0 0.0
    %415 = vmatpush1.xpose.msra.mxu0 0.0
    %416 = vmatprep.subr.mxu0 0.0
    %417 = vmatpush1.xpose.msra.mxu0 0.0
    %418 = vmatprep.subr.mxu0 0.0
    %419 = vmatpush1.xpose.msra.mxu0 0.0
    %420 = vmatprep.subr.mxu0 0.0
    %421 = vmatpush1.xpose.msra.mxu0 0.0
    %422 = vmatprep.subr.mxu0 0.0
    %423 = vmatpush1.xpose.msra.mxu0 0.0
    %424 = vmatprep.subr.mxu0 0.0
    %425 = vmatpush1.xpose.msra.mxu0 0.0
    %426 = vmatprep.subr.mxu0 0.0
    %427 = vmatpush1.xpose.msra.mxu0 0.0
    %428 = vmatprep.subr.mxu0 0.0
    %429 = vmatpush1.xpose.msra.mxu0 0.0
    %430 = vmatprep.mubr.f32.mxu0 0.0
    %431 = vmatmul.mubr.f32.gmra.mrb[0].mxu0 %v362
    %v432 = vpop.f32.mrb[0].mxu0
    %v433 = vadd.f32 0.0, %v432
    %v434 = vpop.f32.mrb[0].mxu0
    %435 = vdwg.mxu0
    %v436 = vmul.f32 %v356, 0.25
    %v437 = vmul.f32 %v433, 0.25
    %vm438 = vcmask 64512
    %v439 = vsel %vm438, %v436, -inf
    %440 = vmax.xlane.f32.xlu0 %v439
    %v441 = vpop.xlane.xlu0 %440
    %v442 = vsel %vm438, %v437, -inf
    %443 = vmax.xlane.f32.xlu0 %v442
    %v444 = vpop.xlane.xlu0 %443
    %v445 = vsub.f32 %v436, %v441
    %v446 = vsub.f32 %v437, %v444
    %v447 = vmul.f32 %v445, 1.442695
    %v448 = vpow.pop %v447
    %v449 = vmul.f32 %v446, 1.442695
    %v450 = vpow.pop %v449
    %v451 = vsel %vm438, %v448, 0.0
    %452 = vadd.xlane.f32.xlu0 %v451
    %v453 = vpop.xlane.xlu0 %452
    %v454 = vsel %vm438, %v450, 0.0
    %455 = vadd.xlane.f32.xlu0 %v454
    %v456 = vpop.xlane.xlu0 %455
    %v457 = vrcp.pop %v453
    %v458 = vrcp.pop %v456
    %v459 = vmul.f32 %v448, %v457
    %v460 = vmul.f32 %v450, %v458
    %461 = vrot.lane.b32.xlu0 %v271, 64
    %v462 = vpop.permute.xlu0 %461
    %v465 = vsel %vm438, %v459, 0
    %467 = vmatprep.subr.mxu0 0.0
    %468 = vmatpush1.msra.mxu0 %v462
    %469 = vmatprep.subr.mxu0 0.0
    %470 = vmatpush1.msra.mxu0 0.0
    %471 = vmatprep.subr.mxu0 0.0
    %472 = vmatpush1.msra.mxu0 0.0
    %473 = vmatprep.subr.mxu0 0.0
    %474 = vmatpush1.msra.mxu0 0.0
    %475 = vmatprep.subr.mxu0 0.0
    %476 = vmatpush1.msra.mxu0 0.0
    %477 = vmatprep.subr.mxu0 0.0
    %478 = vmatpush1.msra.mxu0 0.0
    %479 = vmatprep.subr.mxu0 0.0
    %480 = vmatpush1.msra.mxu0 0.0
    %481 = vmatprep.subr.mxu0 0.0
    %482 = vmatpush1.msra.mxu0 0.0
    %483 = vmatprep.subr.mxu0 0.0
    %484 = vmatpush1.msra.mxu0 0.0
    %485 = vmatprep.subr.mxu0 0.0
    %486 = vmatpush1.msra.mxu0 0.0
    %487 = vmatprep.subr.mxu0 0.0
    %488 = vmatpush1.msra.mxu0 0.0
    %489 = vmatprep.subr.mxu0 0.0
    %490 = vmatpush1.msra.mxu0 0.0
    %491 = vmatprep.subr.mxu0 0.0
    %492 = vmatpush1.msra.mxu0 0.0
    %493 = vmatprep.subr.mxu0 0.0
    %494 = vmatpush1.msra.mxu0 0.0
    %495 = vmatprep.subr.mxu0 0.0
    %496 = vmatpush1.msra.mxu0 0.0
    %497 = vmatprep.subr.mxu0 0.0
    %498 = vmatpush1.msra.mxu0 0.0
    %499 = vmatprep.subr.mxu0 0.0
    %500 = vmatpush1.msra.mxu0 0.0
    %501 = vmatprep.subr.mxu0 0.0
    %502 = vmatpush1.msra.mxu0 0.0
    %503 = vmatprep.subr.mxu0 0.0
    %504 = vmatpush1.msra.mxu0 0.0
    %505 = vmatprep.subr.mxu0 0.0
    %506 = vmatpush1.msra.mxu0 0.0
    %507 = vmatprep.subr.mxu0 0.0
    %508 = vmatpush1.msra.mxu0 0.0
    %509 = vmatprep.subr.mxu0 0.0
    %510 = vmatpush1.msra.mxu0 0.0
    %511 = vmatprep.subr.mxu0 0.0
    %512 = vmatpush1.msra.mxu0 0.0
    %513 = vmatprep.subr.mxu0 0.0
    %514 = vmatpush1.msra.mxu0 0.0
    %515 = vmatprep.subr.mxu0 0.0
    %516 = vmatpush1.msra.mxu0 0.0
    %517 = vmatprep.subr.mxu0 0.0
    %518 = vmatpush1.msra.mxu0 0.0
    %519 = vmatprep.subr.mxu0 0.0
    %520 = vmatpush1.msra.mxu0 0.0
    %521 = vmatprep.subr.mxu0 0.0
    %522 = vmatpush1.msra.mxu0 0.0
    %523 = vmatprep.subr.mxu0 0.0
    %524 = vmatpush1.msra.mxu0 0.0
    %525 = vmatprep.subr.mxu0 0.0
    %526 = vmatpush1.msra.mxu0 0.0
    %527 = vmatprep.subr.mxu0 0.0
    %528 = vmatpush1.msra.mxu0 0.0
    %529 = vmatprep.subr.mxu0 0.0
    %530 = vmatpush1.msra.mxu0 0.0
    %531 = vmatprep.mubr.f32.mxu0 0.0
    %532 = vmatmul.mubr.f32.gmra.mrb[0].mxu0 %v465
    %v533 = vpop.f32.mrb[0].mxu0
    %v534 = vadd.f32 0.0, %v533
    %v535 = vpop.f32.mrb[0].mxu0
    %536 = vdwg.mxu0
    %537 = vrot.lane.b32.xlu0 %v274, 64
    %v538 = vpop.permute.xlu0 %537
    %v541 = vsel %vm438, %v460, 0
    %543 = vmatprep.subr.mxu0 0.0
    %544 = vmatpush1.msra.mxu0 %v538
    %545 = vmatprep.subr.mxu0 0.0
    %546 = vmatpush1.msra.mxu0 0.0
    %547 = vmatprep.subr.mxu0 0.0
    %548 = vmatpush1.msra.mxu0 0.0
    %549 = vmatprep.subr.mxu0 0.0
    %550 = vmatpush1.msra.mxu0 0.0
    %551 = vmatprep.subr.mxu0 0.0
    %552 = vmatpush1.msra.mxu0 0.0
    %553 = vmatprep.subr.mxu0 0.0
    %554 = vmatpush1.msra.mxu0 0.0
    %555 = vmatprep.subr.mxu0 0.0
    %556 = vmatpush1.msra.mxu0 0.0
    %557 = vmatprep.subr.mxu0 0.0
    %558 = vmatpush1.msra.mxu0 0.0
    %559 = vmatprep.subr.mxu0 0.0
    %560 = vmatpush1.msra.mxu0 0.0
    %561 = vmatprep.subr.mxu0 0.0
    %562 = vmatpush1.msra.mxu0 0.0
    %563 = vmatprep.subr.mxu0 0.0
    %564 = vmatpush1.msra.mxu0 0.0
    %565 = vmatprep.subr.mxu0 0.0
    %566 = vmatpush1.msra.mxu0 0.0
    %567 = vmatprep.subr.mxu0 0.0
    %568 = vmatpush1.msra.mxu0 0.0
    %569 = vmatprep.subr.mxu0 0.0
    %570 = vmatpush1.msra.mxu0 0.0
    %571 = vmatprep.subr.mxu0 0.0
    %572 = vmatpush1.msra.mxu0 0.0
    %573 = vmatprep.subr.mxu0 0.0
    %574 = vmatpush1.msra.mxu0 0.0
    %575 = vmatprep.subr.mxu0 0.0
    %576 = vmatpush1.msra.mxu0 0.0
    %577 = vmatprep.subr.mxu0 0.0
    %578 = vmatpush1.msra.mxu0 0.0
    %579 = vmatprep.subr.mxu0 0.0
    %580 = vmatpush1.msra.mxu0 0.0
    %581 = vmatprep.subr.mxu0 0.0
    %582 = vmatpush1.msra.mxu0 0.0
    %583 = vmatprep.subr.mxu0 0.0
    %584 = vmatpush1.msra.mxu0 0.0
    %585 = vmatprep.subr.mxu0 0.0
    %586 = vmatpush1.msra.mxu0 0.0
    %587 = vmatprep.subr.mxu0 0.0
    %588 = vmatpush1.msra.mxu0 0.0
    %589 = vmatprep.subr.mxu0 0.0
    %590 = vmatpush1.msra.mxu0 0.0
    %591 = vmatprep.subr.mxu0 0.0
    %592 = vmatpush1.msra.mxu0 0.0
    %593 = vmatprep.subr.mxu0 0.0
    %594 = vmatpush1.msra.mxu0 0.0
    %595 = vmatprep.subr.mxu0 0.0
    %596 = vmatpush1.msra.mxu0 0.0
    %597 = vmatprep.subr.mxu0 0.0
    %598 = vmatpush1.msra.mxu0 0.0
    %599 = vmatprep.subr.mxu0 0.0
    %600 = vmatpush1.msra.mxu0 0.0
    %601 = vmatprep.subr.mxu0 0.0
    %602 = vmatpush1.msra.mxu0 0.0
    %603 = vmatprep.subr.mxu0 0.0
    %604 = vmatpush1.msra.mxu0 0.0
    %605 = vmatprep.subr.mxu0 0.0
    %606 = vmatpush1.msra.mxu0 0.0
    %607 = vmatprep.mubr.f32.mxu0 0.0
    %608 = vmatmul.mubr.f32.gmra.mrb[0].mxu0 %v541
    %v609 = vpop.f32.mrb[0].mxu0
    %v610 = vadd.f32 0.0, %v609
    %v611 = vpop.f32.mrb[0].mxu0
    %612 = vdwg.mxu0
    %v613 = vpack.c.bf16 %v534, %v534
    %v614 = vpack.c.bf16 %v610, %v610
    %615 = vrot.lane.b32.xlu0 %v271, 112
    %v616 = vpop.permute.xlu0 %615
    %617 = vrot.lane.b32.xlu0 %v271, 80
    %v618 = vpop.permute.xlu0 %617
    %v619 = vsel %vm284, %v616, 0
    %v621 = vsel %vm284, %v618, 0
    %623 = vmatprep.subr.mxu0 0.0
    %624 = vmatpush1.xpose.msra.mxu0 %v621
    %625 = vmatprep.subr.mxu0 0.0
    %626 = vmatpush1.xpose.msra.mxu0 0.0
    %627 = vmatprep.subr.mxu0 0.0
    %628 = vmatpush1.xpose.msra.mxu0 0.0
    %629 = vmatprep.subr.mxu0 0.0
    %630 = vmatpush1.xpose.msra.mxu0 0.0
    %631 = vmatprep.subr.mxu0 0.0
    %632 = vmatpush1.xpose.msra.mxu0 0.0
    %633 = vmatprep.subr.mxu0 0.0
    %634 = vmatpush1.xpose.msra.mxu0 0.0
    %635 = vmatprep.subr.mxu0 0.0
    %636 = vmatpush1.xpose.msra.mxu0 0.0
    %637 = vmatprep.subr.mxu0 0.0
    %638 = vmatpush1.xpose.msra.mxu0 0.0
    %639 = vmatprep.subr.mxu0 0.0
    %640 = vmatpush1.xpose.msra.mxu0 0.0
    %641 = vmatprep.subr.mxu0 0.0
    %642 = vmatpush1.xpose.msra.mxu0 0.0
    %643 = vmatprep.subr.mxu0 0.0
    %644 = vmatpush1.xpose.msra.mxu0 0.0
    %645 = vmatprep.subr.mxu0 0.0
    %646 = vmatpush1.xpose.msra.mxu0 0.0
    %647 = vmatprep.subr.mxu0 0.0
    %648 = vmatpush1.xpose.msra.mxu0 0.0
    %649 = vmatprep.subr.mxu0 0.0
    %650 = vmatpush1.xpose.msra.mxu0 0.0
    %651 = vmatprep.subr.mxu0 0.0
    %652 = vmatpush1.xpose.msra.mxu0 0.0
    %653 = vmatprep.subr.mxu0 0.0
    %654 = vmatpush1.xpose.msra.mxu0 0.0
    %655 = vmatprep.subr.mxu0 0.0
    %656 = vmatpush1.xpose.msra.mxu0 0.0
    %657 = vmatprep.subr.mxu0 0.0
    %658 = vmatpush1.xpose.msra.mxu0 0.0
    %659 = vmatprep.subr.mxu0 0.0
    %660 = vmatpush1.xpose.msra.mxu0 0.0
    %661 = vmatprep.subr.mxu0 0.0
    %662 = vmatpush1.xpose.msra.mxu0 0.0
    %663 = vmatprep.subr.mxu0 0.0
    %664 = vmatpush1.xpose.msra.mxu0 0.0
    %665 = vmatprep.subr.mxu0 0.0
    %666 = vmatpush1.xpose.msra.mxu0 0.0
    %667 = vmatprep.subr.mxu0 0.0
    %668 = vmatpush1.xpose.msra.mxu0 0.0
    %669 = vmatprep.subr.mxu0 0.0
    %670 = vmatpush1.xpose.msra.mxu0 0.0
    %671 = vmatprep.subr.mxu0 0.0
    %672 = vmatpush1.xpose.msra.mxu0 0.0
    %673 = vmatprep.subr.mxu0 0.0
    %674 = vmatpush1.xpose.msra.mxu0 0.0
    %675 = vmatprep.subr.mxu0 0.0
    %676 = vmatpush1.xpose.msra.mxu0 0.0
    %677 = vmatprep.subr.mxu0 0.0
    %678 = vmatpush1.xpose.msra.mxu0 0.0
    %679 = vmatprep.subr.mxu0 0.0
    %680 = vmatpush1.xpose.msra.mxu0 0.0
    %681 = vmatprep.subr.mxu0 0.0
    %682 = vmatpush1.xpose.msra.mxu0 0.0
    %683 = vmatprep.subr.mxu0 0.0
    %684 = vmatpush1.xpose.msra.mxu0 0.0
    %685 = vmatprep.subr.mxu0 0.0
    %686 = vmatpush1.xpose.msra.mxu0 0.0
    %687 = vmatprep.mubr.f32.mxu0 0.0
    %688 = vmatmul.mubr.f32.gmra.mrb[0].mxu0 %v619
    %v689 = vpop.f32.mrb[0].mxu0
    %v690 = vadd.f32 0.0, %v689
    %v691 = vpop.f32.mrb[0].mxu0
    %692 = vdwg.mxu0
    %693 = vrot.lane.b32.xlu0 %v274, 112
    %v694 = vpop.permute.xlu0 %693
    %695 = vrot.lane.b32.xlu0 %v274, 80
    %v696 = vpop.permute.xlu0 %695
    %v697 = vsel %vm284, %v694, 0
    %v699 = vsel %vm284, %v696, 0
    %701 = vmatprep.subr.mxu0 0.0
    %702 = vmatpush1.xpose.msra.mxu0 %v699
    %703 = vmatprep.subr.mxu0 0.0
    %704 = vmatpush1.xpose.msra.mxu0 0.0
    %705 = vmatprep.subr.mxu0 0.0
    %706 = vmatpush1.xpose.msra.mxu0 0.0
    %707 = vmatprep.subr.mxu0 0.0
    %708 = vmatpush1.xpose.msra.mxu0 0.0
    %709 = vmatprep.subr.mxu0 0.0
    %710 = vmatpush1.xpose.msra.mxu0 0.0
    %711 = vmatprep.subr.mxu0 0.0
    %712 = vmatpush1.xpose.msra.mxu0 0.0
    %713 = vmatprep.subr.mxu0 0.0
    %714 = vmatpush1.xpose.msra.mxu0 0.0
    %715 = vmatprep.subr.mxu0 0.0
    %716 = vmatpush1.xpose.msra.mxu0 0.0
    %717 = vmatprep.subr.mxu0 0.0
    %718 = vmatpush1.xpose.msra.mxu0 0.0
    %719 = vmatprep.subr.mxu0 0.0
    %720 = vmatpush1.xpose.msra.mxu0 0.0
    %721 = vmatprep.subr.mxu0 0.0
    %722 = vmatpush1.xpose.msra.mxu0 0.0
    %723 = vmatprep.subr.mxu0 0.0
    %724 = vmatpush1.xpose.msra.mxu0 0.0
    %725 = vmatprep.subr.mxu0 0.0
    %726 = vmatpush1.xpose.msra.mxu0 0.0
    %727 = vmatprep.subr.mxu0 0.0
    %728 = vmatpush1.xpose.msra.mxu0 0.0
    %729 = vmatprep.subr.mxu0 0.0
    %730 = vmatpush1.xpose.msra.mxu0 0.0
    %731 = vmatprep.subr.mxu0 0.0
    %732 = vmatpush1.xpose.msra.mxu0 0.0
    %733 = vmatprep.subr.mxu0 0.0
    %734 = vmatpush1.xpose.msra.mxu0 0.0
    %735 = vmatprep.subr.mxu0 0.0
    %736 = vmatpush1.xpose.msra.mxu0 0.0
    %737 = vmatprep.subr.mxu0 0.0
    %738 = vmatpush1.xpose.msra.mxu0 0.0
    %739 = vmatprep.subr.mxu0 0.0
    %740 = vmatpush1.xpose.msra.mxu0 0.0
    %741 = vmatprep.subr.mxu0 0.0
    %742 = vmatpush1.xpose.msra.mxu0 0.0
    %743 = vmatprep.subr.mxu0 0.0
    %744 = vmatpush1.xpose.msra.mxu0 0.0
    %745 = vmatprep.subr.mxu0 0.0
    %746 = vmatpush1.xpose.msra.mxu0 0.0
    %747 = vmatprep.subr.mxu0 0.0
    %748 = vmatpush1.xpose.msra.mxu0 0.0
    %749 = vmatprep.subr.mxu0 0.0
    %750 = vmatpush1.xpose.msra.mxu0 0.0
    %751 = vmatprep.subr.mxu0 0.0
    %752 = vmatpush1.xpose.msra.mxu0 0.0
    %753 = vmatprep.subr.mxu0 0.0
    %754 = vmatpush1.xpose.msra.mxu0 0.0
    %755 = vmatprep.subr.mxu0 0.0
    %756 = vmatpush1.xpose.msra.mxu0 0.0
    %757 = vmatprep.subr.mxu0 0.0
    %758 = vmatpush1.xpose.msra.mxu0 0.0
    %759 = vmatprep.subr.mxu0 0.0
    %760 = vmatpush1.xpose.msra.mxu0 0.0
    %761 = vmatprep.subr.mxu0 0.0
    %762 = vmatpush1.xpose.msra.mxu0 0.0
    %763 = vmatprep.subr.mxu0 0.0
    %764 = vmatpush1.xpose.msra.mxu0 0.0
    %765 = vmatprep.mubr.f32.mxu0 0.0
    %766 = vmatmul.mubr.f32.gmra.mrb[0].mxu0 %v697
    %v767 = vpop.f32.mrb[0].mxu0
    %v768 = vadd.f32 0.0, %v767
    %v769 = vpop.f32.mrb[0].mxu0
    %770 = vdwg.mxu0
    %v771 = vmul.f32 %v690, 0.25
    %v772 = vmul.f32 %v768, 0.25
    %v773 = vsel %vm438, %v771, -inf
    %774 = vmax.xlane.f32.xlu0 %v773
    %v775 = vpop.xlane.xlu0 %774
    %v776 = vsel %vm438, %v772, -inf
    %777 = vmax.xlane.f32.xlu0 %v776
    %v778 = vpop.xlane.xlu0 %777
    %v779 = vsub.f32 %v771, %v775
    %v780 = vsub.f32 %v772, %v778
    %v781 = vmul.f32 %v779, 1.442695
    %v782 = vpow.pop %v781
    %v783 = vmul.f32 %v780, 1.442695
    %v784 = vpow.pop %v783
    %v785 = vsel %vm438, %v782, 0.0
    %786 = vadd.xlane.f32.xlu0 %v785
    %v787 = vpop.xlane.xlu0 %786
    %v788 = vsel %vm438, %v784, 0.0
    %789 = vadd.xlane.f32.xlu0 %v788
    %v790 = vpop.xlane.xlu0 %789
    %v791 = vrcp.pop %v787
    %v792 = vrcp.pop %v790
    %v793 = vmul.f32 %v782, %v791
    %v794 = vmul.f32 %v784, %v792
    %795 = vrot.lane.b32.xlu0 %v271, 48
    %v796 = vpop.permute.xlu0 %795
    %v799 = vsel %vm438, %v793, 0
    %801 = vmatprep.subr.mxu0 0.0
    %802 = vmatpush1.msra.mxu0 %v796
    %803 = vmatprep.subr.mxu0 0.0
    %804 = vmatpush1.msra.mxu0 0.0
    %805 = vmatprep.subr.mxu0 0.0
    %806 = vmatpush1.msra.mxu0 0.0
    %807 = vmatprep.subr.mxu0 0.0
    %808 = vmatpush1.msra.mxu0 0.0
    %809 = vmatprep.subr.mxu0 0.0
    %810 = vmatpush1.msra.mxu0 0.0
    %811 = vmatprep.subr.mxu0 0.0
    %812 = vmatpush1.msra.mxu0 0.0
    %813 = vmatprep.subr.mxu0 0.0
    %814 = vmatpush1.msra.mxu0 0.0
    %815 = vmatprep.subr.mxu0 0.0
    %816 = vmatpush1.msra.mxu0 0.0
    %817 = vmatprep.subr.mxu0 0.0
    %818 = vmatpush1.msra.mxu0 0.0
    %819 = vmatprep.subr.mxu0 0.0
    %820 = vmatpush1.msra.mxu0 0.0
    %821 = vmatprep.subr.mxu0 0.0
    %822 = vmatpush1.msra.mxu0 0.0
    %823 = vmatprep.subr.mxu0 0.0
    %824 = vmatpush1.msra.mxu0 0.0
    %825 = vmatprep.subr.mxu0 0.0
    %826 = vmatpush1.msra.mxu0 0.0
    %827 = vmatprep.subr.mxu0 0.0
    %828 = vmatpush1.msra.mxu0 0.0
    %829 = vmatprep.subr.mxu0 0.0
    %830 = vmatpush1.msra.mxu0 0.0
    %831 = vmatprep.subr.mxu0 0.0
    %832 = vmatpush1.msra.mxu0 0.0
    %833 = vmatprep.subr.mxu0 0.0
    %834 = vmatpush1.msra.mxu0 0.0
    %835 = vmatprep.subr.mxu0 0.0
    %836 = vmatpush1.msra.mxu0 0.0
    %837 = vmatprep.subr.mxu0 0.0
    %838 = vmatpush1.msra.mxu0 0.0
    %839 = vmatprep.subr.mxu0 0.0
    %840 = vmatpush1.msra.mxu0 0.0
    %841 = vmatprep.subr.mxu0 0.0
    %842 = vmatpush1.msra.mxu0 0.0
    %843 = vmatprep.subr.mxu0 0.0
    %844 = vmatpush1.msra.mxu0 0.0
    %845 = vmatprep.subr.mxu0 0.0
    %846 = vmatpush1.msra.mxu0 0.0
    %847 = vmatprep.subr.mxu0 0.0
    %848 = vmatpush1.msra.mxu0 0.0
    %849 = vmatprep.subr.mxu0 0.0
    %850 = vmatpush1.msra.mxu0 0.0
    %851 = vmatprep.subr.mxu0 0.0
    %852 = vmatpush1.msra.mxu0 0.0
    %853 = vmatprep.subr.mxu0 0.0
    %854 = vmatpush1.msra.mxu0 0.0
    %855 = vmatprep.subr.mxu0 0.0
    %856 = vmatpush1.msra.mxu0 0.0
    %857 = vmatprep.subr.mxu0 0.0
    %858 = vmatpush1.msra.mxu0 0.0
    %859 = vmatprep.subr.mxu0 0.0
    %860 = vmatpush1.msra.mxu0 0.0
    %861 = vmatprep.subr.mxu0 0.0
    %862 = vmatpush1.msra.mxu0 0.0
    %863 = vmatprep.subr.mxu0 0.0
    %864 = vmatpush1.msra.mxu0 0.0
    %865 = vmatprep.mubr.f32.mxu0 0.0
    %866 = vmatmul.mubr.f32.gmra.mrb[0].mxu0 %v799
    %v867 = vpop.f32.mrb[0].mxu0
    %v868 = vadd.f32 0.0, %v867
    %v869 = vpop.f32.mrb[0].mxu0
    %870 = vdwg.mxu0
    %871 = vrot.lane.b32.xlu0 %v274, 48
    %v872 = vpop.permute.xlu0 %871
    %v875 = vsel %vm438, %v794, 0
    %877 = vmatprep.subr.mxu0 0.0
    %878 = vmatpush1.msra.mxu0 %v872
    %879 = vmatprep.subr.mxu0 0.0
    %880 = vmatpush1.msra.mxu0 0.0
    %881 = vmatprep.subr.mxu0 0.0
    %882 = vmatpush1.msra.mxu0 0.0
    %883 = vmatprep.subr.mxu0 0.0
    %884 = vmatpush1.msra.mxu0 0.0
    %885 = vmatprep.subr.mxu0 0.0
    %886 = vmatpush1.msra.mxu0 0.0
    %887 = vmatprep.subr.mxu0 0.0
    %888 = vmatpush1.msra.mxu0 0.0
    %889 = vmatprep.subr.mxu0 0.0
    %890 = vmatpush1.msra.mxu0 0.0
    %891 = vmatprep.subr.mxu0 0.0
    %892 = vmatpush1.msra.mxu0 0.0
    %893 = vmatprep.subr.mxu0 0.0
    %894 = vmatpush1.msra.mxu0 0.0
    %895 = vmatprep.subr.mxu0 0.0
    %896 = vmatpush1.msra.mxu0 0.0
    %897 = vmatprep.subr.mxu0 0.0
    %898 = vmatpush1.msra.mxu0 0.0
    %899 = vmatprep.subr.mxu0 0.0
    %900 = vmatpush1.msra.mxu0 0.0
    %901 = vmatprep.subr.mxu0 0.0
    %902 = vmatpush1.msra.mxu0 0.0
    %903 = vmatprep.subr.mxu0 0.0
    %904 = vmatpush1.msra.mxu0 0.0
    %905 = vmatprep.subr.mxu0 0.0
    %906 = vmatpush1.msra.mxu0 0.0
    %907 = vmatprep.subr.mxu0 0.0
    %908 = vmatpush1.msra.mxu0 0.0
    %909 = vmatprep.subr.mxu0 0.0
    %910 = vmatpush1.msra.mxu0 0.0
    %911 = vmatprep.subr.mxu0 0.0
    %912 = vmatpush1.msra.mxu0 0.0
    %913 = vmatprep.subr.mxu0 0.0
    %914 = vmatpush1.msra.mxu0 0.0
    %915 = vmatprep.subr.mxu0 0.0
    %916 = vmatpush1.msra.mxu0 0.0
    %917 = vmatprep.subr.mxu0 0.0
    %918 = vmatpush1.msra.mxu0 0.0
    %919 = vmatprep.subr.mxu0 0.0
    %920 = vmatpush1.msra.mxu0 0.0
    %921 = vmatprep.subr.mxu0 0.0
    %922 = vmatpush1.msra.mxu0 0.0
    %923 = vmatprep.subr.mxu0 0.0
    %924 = vmatpush1.msra.mxu0 0.0
    %925 = vmatprep.subr.mxu0 0.0
    %926 = vmatpush1.msra.mxu0 0.0
    %927 = vmatprep.subr.mxu0 0.0
    %928 = vmatpush1.msra.mxu0 0.0
    %929 = vmatprep.subr.mxu0 0.0
    %930 = vmatpush1.msra.mxu0 0.0
    %931 = vmatprep.subr.mxu0 0.0
    %932 = vmatpush1.msra.mxu0 0.0
    %933 = vmatprep.subr.mxu0 0.0
    %934 = vmatpush1.msra.mxu0 0.0
    %935 = vmatprep.subr.mxu0 0.0
    %936 = vmatpush1.msra.mxu0 0.0
    %937 = vmatprep.subr.mxu0 0.0
    %938 = vmatpush1.msra.mxu0 0.0
    %939 = vmatprep.subr.mxu0 0.0
    %940 = vmatpush1.msra.mxu0 0.0
    %941 = vmatprep.mubr.f32.mxu0 0.0
    %942 = vmatmul.mubr.f32.gmra.mrb[0].mxu0 %v875
    %v943 = vpop.f32.mrb[0].mxu0
    %v944 = vadd.f32 0.0, %v943
    %v945 = vpop.f32.mrb[0].mxu0
    %946 = vdwg.mxu0
    %v947 = vpack.c.bf16 %v868, %v868
    %v948 = vpack.c.bf16 %v944, %v944
    %v951 = vunpack.c.l.b16 %v947
    %v952 = vunpack.c.l.b16 %v948
    %v953 = vpack.c.b16 %v952, %v951
    %v956 = vunpack.c.l.b16 %v279
    %v957 = vunpack.c.l.b16 %v280
    %v958 = vpack.c.b16 %v957, %v956
    %v961 = vsel %vm284, %v953, 0
    %963 = vmatprep.subr.bf16.mxu0 0
    %964 = vmatpush1.bf16.msra.mxu0 %v958
    %965 = vmatprep.subr.bf16.mxu0 0
    %966 = vmatpush1.bf16.msra.mxu0 0
    %967 = vmatprep.subr.bf16.mxu0 0
    %968 = vmatpush1.bf16.msra.mxu0 0
    %969 = vmatprep.subr.bf16.mxu0 0
    %970 = vmatpush1.bf16.msra.mxu0 0
    %971 = vmatprep.subr.bf16.mxu0 0
    %972 = vmatpush1.bf16.msra.mxu0 0
    %973 = vmatprep.subr.bf16.mxu0 0
    %974 = vmatpush1.bf16.msra.mxu0 0
    %975 = vmatprep.subr.bf16.mxu0 0
    %976 = vmatpush1.bf16.msra.mxu0 0
    %977 = vmatprep.subr.bf16.mxu0 0
    %978 = vmatpush1.bf16.msra.mxu0 0
    %979 = vmatprep.subr.bf16.mxu0 0
    %980 = vmatpush1.bf16.msra.mxu0 0
    %981 = vmatprep.subr.bf16.mxu0 0
    %982 = vmatpush1.bf16.msra.mxu0 0
    %983 = vmatprep.subr.bf16.mxu0 0
    %984 = vmatpush1.bf16.msra.mxu0 0
    %985 = vmatprep.subr.bf16.mxu0 0
    %986 = vmatpush1.bf16.msra.mxu0 0
    %987 = vmatprep.subr.bf16.mxu0 0
    %988 = vmatpush1.bf16.msra.mxu0 0
    %989 = vmatprep.subr.bf16.mxu0 0
    %990 = vmatpush1.bf16.msra.mxu0 0
    %991 = vmatprep.subr.bf16.mxu0 0
    %992 = vmatpush1.bf16.msra.mxu0 0
    %993 = vmatprep.subr.bf16.mxu0 0
    %994 = vmatpush1.bf16.msra.mxu0 0
    %995 = vmatprep.mubr.bf16.mxu0 0
    %996 = vmatmul.mubr.bf16.gmra.mrb[0].mxu0 %v961
    %v997 = vpop.f32.mrb[0].mxu0
    %v998 = vadd.f32 0.0, %v997
    %v999 = vpop.f32.mrb[0].mxu0
    %v1000 = vpop.f32.mrb[0].mxu0
    %v1001 = vadd.f32 0.0, %v1000
    %v1002 = vpop.f32.mrb[0].mxu0
    %1003 = vdwg.mxu0
    %v1006 = vunpack.c.l.b16 %v613
    %v1007 = vunpack.c.l.b16 %v614
    %v1008 = vpack.c.b16 %v1007, %v1006
    %v1011 = vunpack.c.l.b16 %v277
    %v1012 = vunpack.c.l.b16 %v278
    %v1013 = vpack.c.b16 %v1012, %v1011
    %v1016 = vsel %vm284, %v1008, 0
    %1018 = vmatprep.subr.bf16.mxu0 0
    %1019 = vmatpush1.bf16.msra.mxu0 %v1013
    %1020 = vmatprep.subr.bf16.mxu0 0
    %1021 = vmatpush1.bf16.msra.mxu0 0
    %1022 = vmatprep.subr.bf16.mxu0 0
    %1023 = vmatpush1.bf16.msra.mxu0 0
    %1024 = vmatprep.subr.bf16.mxu0 0
    %1025 = vmatpush1.bf16.msra.mxu0 0
    %1026 = vmatprep.subr.bf16.mxu0 0
    %1027 = vmatpush1.bf16.msra.mxu0 0
    %1028 = vmatprep.subr.bf16.mxu0 0
    %1029 = vmatpush1.bf16.msra.mxu0 0
    %1030 = vmatprep.subr.bf16.mxu0 0
    %1031 = vmatpush1.bf16.msra.mxu0 0
    %1032 = vmatprep.subr.bf16.mxu0 0
    %1033 = vmatpush1.bf16.msra.mxu0 0
    %1034 = vmatprep.subr.bf16.mxu0 0
    %1035 = vmatpush1.bf16.msra.mxu0 0
    %1036 = vmatprep.subr.bf16.mxu0 0
    %1037 = vmatpush1.bf16.msra.mxu0 0
    %1038 = vmatprep.subr.bf16.mxu0 0
    %1039 = vmatpush1.bf16.msra.mxu0 0
    %1040 = vmatprep.subr.bf16.mxu0 0
    %1041 = vmatpush1.bf16.msra.mxu0 0
    %1042 = vmatprep.subr.bf16.mxu0 0
    %1043 = vmatpush1.bf16.msra.mxu0 0
    %1044 = vmatprep.subr.bf16.mxu0 0
    %1045 = vmatpush1.bf16.msra.mxu0 0
    %1046 = vmatprep.subr.bf16.mxu0 0
    %1047 = vmatpush1.bf16.msra.mxu0 0
    %1048 = vmatprep.subr.bf16.mxu0 0
    %1049 = vmatpush1.bf16.msra.mxu0 0
    %1050 = vmatprep.mubr.bf16.mxu0 0
    %1051 = vmatmul.mubr.bf16.gmra.mrb[0].mxu0 %v1016
    %v1052 = vpop.f32.mrb[0].mxu0
    %v1053 = vadd.f32 %v998, %v1052
    %v1054 = vpop.f32.mrb[0].mxu0
    %v1055 = vpop.f32.mrb[0].mxu0
    %v1056 = vadd.f32 %v1001, %v1055
    %v1057 = vpop.f32.mrb[0].mxu0
    %1058 = vdwg.mxu0
    %v1059 = vld [vmem:[%s8] sm:$0x1]
    %v1061 = vlaneseq
    %v1062 = vshrl.u32 %v1061, 7
    %v1063 = vsub.s32 0, %v1062
    %v1064 = vrot.slane %v1059, %v1063
    %v1066 = vadd.f32 %v1053, %v1064
    %v1067 = vadd.f32 %v1056, %v1064
    %v1068 = vadd.f32 %v1066, %v201
    %v1069 = vadd.f32 %v1067, %v202
    %v1070 = vld [vmem:[%s9] sm:$0x1]
    %v1071 = vld [vmem:[%s10] sm:$0x1]
    %v1072 = vsel %vm159, %v1068, 0.0
    %1073 = vadd.xlane.f32.xlu0 %v1072
    %v1074 = vpop.xlane.xlu0 %1073
    %v1075 = vsel %vm159, %v1069, 0.0
    %1076 = vadd.xlane.f32.xlu0 %v1075
    %v1077 = vpop.xlane.xlu0 %1076
    %v1078 = vmul.f32 %v1074, %v166
    %v1079 = vmul.f32 %v1077, %v166
    %v1080 = vsub.f32 %v1068, %v1078
    %v1081 = vsub.f32 %v1069, %v1079
    %v1082 = vmul.f32 %v1080, %v1080
    %v1083 = vmul.f32 %v1081, %v1081
    %v1084 = vsel %vm159, %v1082, 0.0
    %1085 = vadd.xlane.f32.xlu0 %v1084
    %v1086 = vpop.xlane.xlu0 %1085
    %v1087 = vsel %vm159, %v1083, 0.0
    %1088 = vadd.xlane.f32.xlu0 %v1087
    %v1089 = vpop.xlane.xlu0 %1088
    %v1090 = vmul.f32 %v1086, %v166
    %v1091 = vmul.f32 %v1089, %v166
    %v1092 = vadd.f32 %v1090, 1e-12
    %v1093 = vadd.f32 %v1091, 1e-12
    %v1094 = vrsqrt.pop %v1092
    %v1095 = vrsqrt.pop %v1093
    %v1096 = vmul.f32 %v1080, %v1094
    %v1097 = vmul.f32 %v1081, %v1095
    %v1099 = vlaneseq
    %v1100 = vshrl.u32 %v1099, 7
    %v1101 = vsub.s32 0, %v1100
    %v1102 = vrot.slane %v1070, %v1101
    %v1104 = vmul.f32 %v1096, %v1102
    %v1105 = vmul.f32 %v1097, %v1102
    %v1107 = vlaneseq
    %v1108 = vshrl.u32 %v1107, 7
    %v1109 = vsub.s32 0, %v1108
    %v1110 = vrot.slane %v1071, %v1109
    %v1112 = vadd.f32 %v1104, %v1110
    %v1113 = vadd.f32 %v1105, %v1110
    %v1114 = vpack.c.bf16 %v1112, %v1112
    %v1115 = vpack.c.bf16 %v1113, %v1113
    %v1116 = vld [vmem:[%s11] sm:$0xf]
    %v1117 = vld [vmem:[%s11 + $0x4] sm:$0xf]
    %v1118 = vld [vmem:[%s11 + $0x8] sm:$0xf]
    %v1119 = vld [vmem:[%s11 + $0xc] sm:$0xf]
    %v1120 = vld [vmem:[%s12] sm:$0x1]
    %v1122 = vlaneseq
    %v1123 = vshrl.u32 %v1122, 7
    %v1124 = vsub.s32 0, %v1123
    %v1125 = vrot.slane %v1120, %v1124
    %v1129 = vunpack.c.l.b16 %v1114
    %v1130 = vunpack.c.l.b16 %v1115
    %v1131 = vpack.c.b16 %v1130, %v1129
    %v1136 = vunpack.c.l.b16 %v1116
    %v1137 = vunpack.c.l.b16 %v1117
    %v1138 = vunpack.c.l.b16 %v1118
    %v1139 = vunpack.c.l.b16 %v1119
    %v1140 = vpack.c.b16 %v1137, %v1136
    %v1141 = vpack.c.b16 %v1139, %v1138
    %v1145 = vsel %vm159, %v1131, 0
    %1147 = vmatprep.subr.bf16.mxu0 0
    %1148 = vmatpush1.bf16.msra.mxu0 %v1140
    %1149 = vmatprep.subr.bf16.mxu0 0
    %1150 = vmatpush1.bf16.msra.mxu0 %v1141
    %1151 = vmatprep.subr.bf16.mxu0 0
    %1152 = vmatpush1.bf16.msra.mxu0 0
    %1153 = vmatprep.subr.bf16.mxu0 0
    %1154 = vmatpush1.bf16.msra.mxu0 0
    %1155 = vmatprep.subr.bf16.mxu0 0
    %1156 = vmatpush1.bf16.msra.mxu0 0
    %1157 = vmatprep.subr.bf16.mxu0 0
    %1158 = vmatpush1.bf16.msra.mxu0 0
    %1159 = vmatprep.subr.bf16.mxu0 0
    %1160 = vmatpush1.bf16.msra.mxu0 0
    %1161 = vmatprep.subr.bf16.mxu0 0
    %1162 = vmatpush1.bf16.msra.mxu0 0
    %1163 = vmatprep.subr.bf16.mxu0 0
    %1164 = vmatpush1.bf16.msra.mxu0 0
    %1165 = vmatprep.subr.bf16.mxu0 0
    %1166 = vmatpush1.bf16.msra.mxu0 0
    %1167 = vmatprep.subr.bf16.mxu0 0
    %1168 = vmatpush1.bf16.msra.mxu0 0
    %1169 = vmatprep.subr.bf16.mxu0 0
    %1170 = vmatpush1.bf16.msra.mxu0 0
    %1171 = vmatprep.subr.bf16.mxu0 0
    %1172 = vmatpush1.bf16.msra.mxu0 0
    %1173 = vmatprep.subr.bf16.mxu0 0
    %1174 = vmatpush1.bf16.msra.mxu0 0
    %1175 = vmatprep.subr.bf16.mxu0 0
    %1176 = vmatpush1.bf16.msra.mxu0 0
    %1177 = vmatprep.subr.bf16.mxu0 0
    %1178 = vmatpush1.bf16.msra.mxu0 0
    %1179 = vmatprep.mubr.bf16.mxu0 0
    %1180 = vmatmul.mubr.bf16.gmra.mrb[0].mxu0 %v1145
    %v1181 = vpop.f32.mrb[0].mxu0
    %v1182 = vadd.f32 %v1125, %v1181
    %v1183 = vpop.f32.mrb[0].mxu0
    %v1184 = vpop.f32.mrb[0].mxu0
    %v1185 = vadd.f32 %v1125, %v1184
    %v1186 = vpop.f32.mrb[0].mxu0
    %1187 = vdwg.mxu0
    %v1188 = vmul.f32 %v1182, %v1182
    %v1189 = vmul.f32 %v1185, %v1185
    %v1190 = vmul.f32 %v1182, %v1188
    %v1191 = vmul.f32 %v1185, %v1189
    %v1192 = vmul.f32 %v1190, 0.044715
    %v1193 = vmul.f32 %v1191, 0.044715
    %v1194 = vadd.f32 %v1182, %v1192
    %v1195 = vadd.f32 %v1185, %v1193
    %v1196 = vmul.f32 %v1194, 0.7978846
    %v1197 = vmul.f32 %v1195, 0.7978846
    %v1198 = vtanh.pop %v1196
    %v1199 = vtanh.pop %v1197
    %v1200 = vadd.f32 %v1198, 1.0
    %v1201 = vadd.f32 %v1199, 1.0
    %v1202 = vmul.f32 %v1200, 0.5
    %v1203 = vmul.f32 %v1201, 0.5
    %v1204 = vmul.f32 %v1182, %v1202
    %v1205 = vmul.f32 %v1185, %v1203
    %v1206 = vpack.c.bf16 %v1204, %v1204
    %v1207 = vpack.c.bf16 %v1205, %v1205
    %v1208 = vld [vmem:[%s13] sm:$0xf]
    %v1209 = vld [vmem:[%s13 + $0x4] sm:$0xf]
    %v1210 = vld [vmem:[%s13 + $0x8] sm:$0xf]
    %v1211 = vld [vmem:[%s13 + $0xc] sm:$0xf]
    %v1212 = vld [vmem:[%s13 + $0x10] sm:$0xf]
    %v1213 = vld [vmem:[%s13 + $0x14] sm:$0xf]
    %v1214 = vld [vmem:[%s13 + $0x18] sm:$0xf]
    %v1215 = vld [vmem:[%s13 + $0x1c] sm:$0xf]
    %v1216 = vld [vmem:[%s14] sm:$0x1]
    %v1218 = vlaneseq
    %v1219 = vshrl.u32 %v1218, 7
    %v1220 = vsub.s32 0, %v1219
    %v1221 = vrot.slane %v1216, %v1220
    %v1225 = vunpack.c.l.b16 %v1206
    %v1226 = vunpack.c.l.b16 %v1207
    %v1227 = vpack.c.b16 %v1226, %v1225
    %v1236 = vunpack.c.l.b16 %v1208
    %v1237 = vunpack.c.l.b16 %v1209
    %v1238 = vunpack.c.l.b16 %v1210
    %v1239 = vunpack.c.l.b16 %v1211
    %v1240 = vunpack.c.l.b16 %v1212
    %v1241 = vunpack.c.l.b16 %v1213
    %v1242 = vunpack.c.l.b16 %v1214
    %v1243 = vunpack.c.l.b16 %v1215
    %v1244 = vpack.c.b16 %v1237, %v1236
    %v1245 = vpack.c.b16 %v1239, %v1238
    %v1246 = vpack.c.b16 %v1241, %v1240
    %v1247 = vpack.c.b16 %v1243, %v1242
    %vm1252 = vcmask 523264
    %v1254 = vsel %vm1252, %v1227, 0
    %1256 = vmatprep.subr.bf16.mxu0 0
    %1257 = vmatpush1.bf16.msra.mxu0 %v1244
    %1258 = vmatprep.subr.bf16.mxu0 0
    %1259 = vmatpush1.bf16.msra.mxu0 %v1245
    %1260 = vmatprep.subr.bf16.mxu0 0
    %1261 = vmatpush1.bf16.msra.mxu0 %v1246
    %1262 = vmatprep.subr.bf16.mxu0 0
    %1263 = vmatpush1.bf16.msra.mxu0 %v1247
    %1264 = vmatprep.subr.bf16.mxu0 0
    %1265 = vmatpush1.bf16.msra.mxu0 0
    %1266 = vmatprep.subr.bf16.mxu0 0
    %1267 = vmatpush1.bf16.msra.mxu0 0
    %1268 = vmatprep.subr.bf16.mxu0 0
    %1269 = vmatpush1.bf16.msra.mxu0 0
    %1270 = vmatprep.subr.bf16.mxu0 0
    %1271 = vmatpush1.bf16.msra.mxu0 0
    %1272 = vmatprep.subr.bf16.mxu0 0
    %1273 = vmatpush1.bf16.msra.mxu0 0
    %1274 = vmatprep.subr.bf16.mxu0 0
    %1275 = vmatpush1.bf16.msra.mxu0 0
    %1276 = vmatprep.subr.bf16.mxu0 0
    %1277 = vmatpush1.bf16.msra.mxu0 0
    %1278 = vmatprep.subr.bf16.mxu0 0
    %1279 = vmatpush1.bf16.msra.mxu0 0
    %1280 = vmatprep.subr.bf16.mxu0 0
    %1281 = vmatpush1.bf16.msra.mxu0 0
    %1282 = vmatprep.subr.bf16.mxu0 0
    %1283 = vmatpush1.bf16.msra.mxu0 0
    %1284 = vmatprep.subr.bf16.mxu0 0
    %1285 = vmatpush1.bf16.msra.mxu0 0
    %1286 = vmatprep.subr.bf16.mxu0 0
    %1287 = vmatpush1.bf16.msra.mxu0 0
    %1288 = vmatprep.mubr.bf16.mxu0 0
    %1289 = vmatmul.mubr.bf16.gmra.mrb[0].mxu0 %v1254
    %v1290 = vpop.f32.mrb[0].mxu0
    %v1291 = vadd.f32 %v1221, %v1290
    %v1292 = vpop.f32.mrb[0].mxu0
    %v1293 = vpop.f32.mrb[0].mxu0
    %v1294 = vadd.f32 %v1221, %v1293
    %v1295 = vpop.f32.mrb[0].mxu0
    %1296 = vdwg.mxu0
    %v1297 = vadd.f32 %v1291, %v1112
    %v1298 = vadd.f32 %v1294, %v1113
    %v1299 = vld [vmem:[%s15] sm:$0x1]
    %v1300 = vld [vmem:[%s16] sm:$0x1]
    %v1301 = vsel %vm159, %v1297, 0.0
    %1302 = vadd.xlane.f32.xlu0 %v1301
    %v1303 = vpop.xlane.xlu0 %1302
    %v1304 = vsel %vm159, %v1298, 0.0
    %1305 = vadd.xlane.f32.xlu0 %v1304
    %v1306 = vpop.xlane.xlu0 %1305
    %v1307 = vmul.f32 %v1303, %v166
    %v1308 = vmul.f32 %v1306, %v166
    %v1309 = vsub.f32 %v1297, %v1307
    %v1310 = vsub.f32 %v1298, %v1308
    %v1311 = vmul.f32 %v1309, %v1309
    %v1312 = vmul.f32 %v1310, %v1310
    %v1313 = vsel %vm159, %v1311, 0.0
    %1314 = vadd.xlane.f32.xlu0 %v1313
    %v1315 = vpop.xlane.xlu0 %1314
    %v1316 = vsel %vm159, %v1312, 0.0
    %1317 = vadd.xlane.f32.xlu0 %v1316
    %v1318 = vpop.xlane.xlu0 %1317
    %v1319 = vmul.f32 %v1315, %v166
    %v1320 = vmul.f32 %v1318, %v166
    %v1321 = vadd.f32 %v1319, 1e-12
    %v1322 = vadd.f32 %v1320, 1e-12
    %v1323 = vrsqrt.pop %v1321
    %v1324 = vrsqrt.pop %v1322
    %v1325 = vmul.f32 %v1309, %v1323
    %v1326 = vmul.f32 %v1310, %v1324
    %v1328 = vlaneseq
    %v1329 = vshrl.u32 %v1328, 7
    %v1330 = vsub.s32 0, %v1329
    %v1331 = vrot.slane %v1299, %v1330
    %v1333 = vmul.f32 %v1325, %v1331
    %v1334 = vmul.f32 %v1326, %v1331
    %v1336 = vlaneseq
    %v1337 = vshrl.u32 %v1336, 7
    %v1338 = vsub.s32 0, %v1337
    %v1339 = vrot.slane %v1300, %v1338
    %v1341 = vadd.f32 %v1333, %v1339
    %v1342 = vadd.f32 %v1334, %v1339
    %v1343 = vpack.c.bf16 %v1341, %v1341
    %v1344 = vpack.c.bf16 %v1342, %v1342
    %s1345 = scalar_lea.vmem %s5, 16
    %v1346 = vld [vmem:[%s1345] sm:$0xf]
    %v1347 = vld [vmem:[%s1345 + $0x4] sm:$0xf]
    %v1348 = vld [vmem:[%s1345 + $0x8] sm:$0xf]
    %v1349 = vld [vmem:[%s1345 + $0xc] sm:$0xf]
    %s1350 = scalar_lea.vmem %s6, 1
    %v1351 = vld [vmem:[%s1350] sm:$0x1]
    %v1353 = vlaneseq
    %v1354 = vshrl.u32 %v1353, 7
    %v1355 = vsub.s32 0, %v1354
    %v1356 = vrot.slane %v1351, %v1355
    %v1360 = vunpack.c.l.b16 %v1343
    %v1361 = vunpack.c.l.b16 %v1344
    %v1362 = vpack.c.b16 %v1361, %v1360
    %v1367 = vunpack.c.l.b16 %v1346
    %v1368 = vunpack.c.l.b16 %v1347
    %v1369 = vunpack.c.l.b16 %v1348
    %v1370 = vunpack.c.l.b16 %v1349
    %v1371 = vpack.c.b16 %v1368, %v1367
    %v1372 = vpack.c.b16 %v1370, %v1369
    %v1376 = vsel %vm159, %v1362, 0
    %1378 = vmatprep.subr.bf16.mxu0 0
    %1379 = vmatpush1.bf16.msra.mxu0 %v1371
    %1380 = vmatprep.subr.bf16.mxu0 0
    %1381 = vmatpush1.bf16.msra.mxu0 %v1372
    %1382 = vmatprep.subr.bf16.mxu0 0
    %1383 = vmatpush1.bf16.msra.mxu0 0
    %1384 = vmatprep.subr.bf16.mxu0 0
    %1385 = vmatpush1.bf16.msra.mxu0 0
    %1386 = vmatprep.subr.bf16.mxu0 0
    %1387 = vmatpush1.bf16.msra.mxu0 0
    %1388 = vmatprep.subr.bf16.mxu0 0
    %1389 = vmatpush1.bf16.msra.mxu0 0
    %1390 = vmatprep.subr.bf16.mxu0 0
    %1391 = vmatpush1.bf16.msra.mxu0 0
    %1392 = vmatprep.subr.bf16.mxu0 0
    %1393 = vmatpush1.bf16.msra.mxu0 0
    %1394 = vmatprep.subr.bf16.mxu0 0
    %1395 = vmatpush1.bf16.msra.mxu0 0
    %1396 = vmatprep.subr.bf16.mxu0 0
    %1397 = vmatpush1.bf16.msra.mxu0 0
    %1398 = vmatprep.subr.bf16.mxu0 0
    %1399 = vmatpush1.bf16.msra.mxu0 0
    %1400 = vmatprep.subr.bf16.mxu0 0
    %1401 = vmatpush1.bf16.msra.mxu0 0
    %1402 = vmatprep.subr.bf16.mxu0 0
    %1403 = vmatpush1.bf16.msra.mxu0 0
    %1404 = vmatprep.subr.bf16.mxu0 0
    %1405 = vmatpush1.bf16.msra.mxu0 0
    %1406 = vmatprep.subr.bf16.mxu0 0
    %1407 = vmatpush1.bf16.msra.mxu0 0
    %1408 = vmatprep.subr.bf16.mxu0 0
    %1409 = vmatpush1.bf16.msra.mxu0 0
    %1410 = vmatprep.mubr.bf16.mxu0 0
    %1411 = vmatmul.mubr.bf16.gmra.mrb[0].mxu0 %v1376
    %v1412 = vpop.f32.mrb[0].mxu0
    %v1413 = vadd.f32 %v1356, %v1412
    %v1414 = vpop.f32.mrb[0].mxu0
    %v1415 = vpop.f32.mrb[0].mxu0
    %v1416 = vadd.f32 %v1356, %v1415
    %v1417 = vpop.f32.mrb[0].mxu0
    %1418 = vdwg.mxu0
    %s1419 = scalar_lea.vmem %s7, 16
    %v1420 = vld [vmem:[%s1419] sm:$0xf]
    %v1421 = vld [vmem:[%s1419 + $0x4] sm:$0xf]
    %v1422 = vld [vmem:[%s1419 + $0x8] sm:$0xf]
    %v1423 = vld [vmem:[%s1419 + $0xc] sm:$0xf]
    %1425 = vrot.lane.b32.xlu0 %v1413, 96
    %v1426 = vpop.permute.xlu0 %1425
    %v1427 = vsel %vm284, %v1413, 0
    %v1429 = vsel %vm284, %v1426, 0
    %1431 = vmatprep.subr.mxu0 0.0
    %1432 = vmatpush1.xpose.msra.mxu0 %v1429
    %1433 = vmatprep.subr.mxu0 0.0
    %1434 = vmatpush1.xpose.msra.mxu0 0.0
    %1435 = vmatprep.subr.mxu0 0.0
    %1436 = vmatpush1.xpose.msra.mxu0 0.0
    %1437 = vmatprep.subr.mxu0 0.0
    %1438 = vmatpush1.xpose.msra.mxu0 0.0
    %1439 = vmatprep.subr.mxu0 0.0
    %1440 = vmatpush1.xpose.msra.mxu0 0.0
    %1441 = vmatprep.subr.mxu0 0.0
    %1442 = vmatpush1.xpose.msra.mxu0 0.0
    %1443 = vmatprep.subr.mxu0 0.0
    %1444 = vmatpush1.xpose.msra.mxu0 0.0
    %1445 = vmatprep.subr.mxu0 0.0
    %1446 = vmatpush1.xpose.msra.mxu0 0.0
    %1447 = vmatprep.subr.mxu0 0.0
    %1448 = vmatpush1.xpose.msra.mxu0 0.0
    %1449 = vmatprep.subr.mxu0 0.0
    %1450 = vmatpush1.xpose.msra.mxu0 0.0
    %1451 = vmatprep.subr.mxu0 0.0
    %1452 = vmatpush1.xpose.msra.mxu0 0.0
    %1453 = vmatprep.subr.mxu0 0.0
    %1454 = vmatpush1.xpose.msra.mxu0 0.0
    %1455 = vmatprep.subr.mxu0 0.0
    %1456 = vmatpush1.xpose.msra.mxu0 0.0
    %1457 = vmatprep.subr.mxu0 0.0
    %1458 = vmatpush1.xpose.msra.mxu0 0.0
    %1459 = vmatprep.subr.mxu0 0.0
    %1460 = vmatpush1.xpose.msra.mxu0 0.0
    %1461 = vmatprep.subr.mxu0 0.0
    %1462 = vmatpush1.xpose.msra.mxu0 0.0
    %1463 = vmatprep.subr.mxu0 0.0
    %1464 = vmatpush1.xpose.msra.mxu0 0.0
    %1465 = vmatprep.subr.mxu0 0.0
    %1466 = vmatpush1.xpose.msra.mxu0 0.0
    %1467 = vmatprep.subr.mxu0 0.0
    %1468 = vmatpush1.xpose.msra.mxu0 0.0
    %1469 = vmatprep.subr.mxu0 0.0
    %1470 = vmatpush1.xpose.msra.mxu0 0.0
    %1471 = vmatprep.subr.mxu0 0.0
    %1472 = vmatpush1.xpose.msra.mxu0 0.0
    %1473 = vmatprep.subr.mxu0 0.0
    %1474 = vmatpush1.xpose.msra.mxu0 0.0
    %1475 = vmatprep.subr.mxu0 0.0
    %1476 = vmatpush1.xpose.msra.mxu0 0.0
    %1477 = vmatprep.subr.mxu0 0.0
    %1478 = vmatpush1.xpose.msra.mxu0 0.0
    %1479 = vmatprep.subr.mxu0 0.0
    %1480 = vmatpush1.xpose.msra.mxu0 0.0
    %1481 = vmatprep.subr.mxu0 0.0
    %1482 = vmatpush1.xpose.msra.mxu0 0.0
    %1483 = vmatprep.subr.mxu0 0.0
    %1484 = vmatpush1.xpose.msra.mxu0 0.0
    %1485 = vmatprep.subr.mxu0 0.0
    %1486 = vmatpush1.xpose.msra.mxu0 0.0
    %1487 = vmatprep.subr.mxu0 0.0
    %1488 = vmatpush1.xpose.msra.mxu0 0.0
    %1489 = vmatprep.subr.mxu0 0.0
    %1490 = vmatpush1.xpose.msra.mxu0 0.0
    %1491 = vmatprep.subr.mxu0 0.0
    %1492 = vmatpush1.xpose.msra.mxu0 0.0
    %1493 = vmatprep.subr.mxu0 0.0
    %1494 = vmatpush1.xpose.msra.mxu0 0.0
    %1495 = vmatprep.mubr.f32.mxu0 0.0
    %1496 = vmatmul.mubr.f32.gmra.mrb[0].mxu0 %v1427
    %v1497 = vpop.f32.mrb[0].mxu0
    %v1498 = vadd.f32 0.0, %v1497
    %v1499 = vpop.f32.mrb[0].mxu0
    %1500 = vdwg.mxu0
    %1502 = vrot.lane.b32.xlu0 %v1416, 96
    %v1503 = vpop.permute.xlu0 %1502
    %v1504 = vsel %vm284, %v1416, 0
    %v1506 = vsel %vm284, %v1503, 0
    %1508 = vmatprep.subr.mxu0 0.0
    %1509 = vmatpush1.xpose.msra.mxu0 %v1506
    %1510 = vmatprep.subr.mxu0 0.0
    %1511 = vmatpush1.xpose.msra.mxu0 0.0
    %1512 = vmatprep.subr.mxu0 0.0
    %1513 = vmatpush1.xpose.msra.mxu0 0.0
    %1514 = vmatprep.subr.mxu0 0.0
    %1515 = vmatpush1.xpose.msra.mxu0 0.0
    %1516 = vmatprep.subr.mxu0 0.0
    %1517 = vmatpush1.xpose.msra.mxu0 0.0
    %1518 = vmatprep.subr.mxu0 0.0
    %1519 = vmatpush1.xpose.msra.mxu0 0.0
    %1520 = vmatprep.subr.mxu0 0.0
    %1521 = vmatpush1.xpose.msra.mxu0 0.0
    %1522 = vmatprep.subr.mxu0 0.0
    %1523 = vmatpush1.xpose.msra.mxu0 0.0
    %1524 = vmatprep.subr.mxu0 0.0
    %1525 = vmatpush1.xpose.msra.mxu0 0.0
    %1526 = vmatprep.subr.mxu0 0.0
    %1527 = vmatpush1.xpose.msra.mxu0 0.0
    %1528 = vmatprep.subr.mxu0 0.0
    %1529 = vmatpush1.xpose.msra.mxu0 0.0
    %1530 = vmatprep.subr.mxu0 0.0
    %1531 = vmatpush1.xpose.msra.mxu0 0.0
    %1532 = vmatprep.subr.mxu0 0.0
    %1533 = vmatpush1.xpose.msra.mxu0 0.0
    %1534 = vmatprep.subr.mxu0 0.0
    %1535 = vmatpush1.xpose.msra.mxu0 0.0
    %1536 = vmatprep.subr.mxu0 0.0
    %1537 = vmatpush1.xpose.msra.mxu0 0.0
    %1538 = vmatprep.subr.mxu0 0.0
    %1539 = vmatpush1.xpose.msra.mxu0 0.0
    %1540 = vmatprep.subr.mxu0 0.0
    %1541 = vmatpush1.xpose.msra.mxu0 0.0
    %1542 = vmatprep.subr.mxu0 0.0
    %1543 = vmatpush1.xpose.msra.mxu0 0.0
    %1544 = vmatprep.subr.mxu0 0.0
    %1545 = vmatpush1.xpose.msra.mxu0 0.0
    %1546 = vmatprep.subr.mxu0 0.0
    %1547 = vmatpush1.xpose.msra.mxu0 0.0
    %1548 = vmatprep.subr.mxu0 0.0
    %1549 = vmatpush1.xpose.msra.mxu0 0.0
    %1550 = vmatprep.subr.mxu0 0.0
    %1551 = vmatpush1.xpose.msra.mxu0 0.0
    %1552 = vmatprep.subr.mxu0 0.0
    %1553 = vmatpush1.xpose.msra.mxu0 0.0
    %1554 = vmatprep.subr.mxu0 0.0
    %1555 = vmatpush1.xpose.msra.mxu0 0.0
    %1556 = vmatprep.subr.mxu0 0.0
    %1557 = vmatpush1.xpose.msra.mxu0 0.0
    %1558 = vmatprep.subr.mxu0 0.0
    %1559 = vmatpush1.xpose.msra.mxu0 0.0
    %1560 = vmatprep.subr.mxu0 0.0
    %1561 = vmatpush1.xpose.msra.mxu0 0.0
    %1562 = vmatprep.subr.mxu0 0.0
    %1563 = vmatpush1.xpose.msra.mxu0 0.0
    %1564 = vmatprep.subr.mxu0 0.0
    %1565 = vmatpush1.xpose.msra.mxu0 0.0
    %1566 = vmatprep.subr.mxu0 0.0
    %1567 = vmatpush1.xpose.msra.mxu0 0.0
    %1568 = vmatprep.subr.mxu0 0.0
    %1569 = vmatpush1.xpose.msra.mxu0 0.0
    %1570 = vmatprep.subr.mxu0 0.0
    %1571 = vmatpush1.xpose.msra.mxu0 0.0
    %1572 = vmatprep.mubr.f32.mxu0 0.0
    %1573 = vmatmul.mubr.f32.gmra.mrb[0].mxu0 %v1504
    %v1574 = vpop.f32.mrb[0].mxu0
    %v1575 = vadd.f32 0.0, %v1574
    %v1576 = vpop.f32.mrb[0].mxu0
    %1577 = vdwg.mxu0
    %v1578 = vmul.f32 %v1498, 0.25
    %v1579 = vmul.f32 %v1575, 0.25
    %v1580 = vsel %vm438, %v1578, -inf
    %1581 = vmax.xlane.f32.xlu0 %v1580
    %v1582 = vpop.xlane.xlu0 %1581
    %v1583 = vsel %vm438, %v1579, -inf
    %1584 = vmax.xlane.f32.xlu0 %v1583
    %v1585 = vpop.xlane.xlu0 %1584
    %v1586 = vsub.f32 %v1578, %v1582
    %v1587 = vsub.f32 %v1579, %v1585
    %v1588 = vmul.f32 %v1586, 1.442695
    %v1589 = vpow.pop %v1588
    %v1590 = vmul.f32 %v1587, 1.442695
    %v1591 = vpow.pop %v1590
    %v1592 = vsel %vm438, %v1589, 0.0
    %1593 = vadd.xlane.f32.xlu0 %v1592
    %v1594 = vpop.xlane.xlu0 %1593
    %v1595 = vsel %vm438, %v1591, 0.0
    %1596 = vadd.xlane.f32.xlu0 %v1595
    %v1597 = vpop.xlane.xlu0 %1596
    %v1598 = vrcp.pop %v1594
    %v1599 = vrcp.pop %v1597
    %v1600 = vmul.f32 %v1589, %v1598
    %v1601 = vmul.f32 %v1591, %v1599
    %1602 = vrot.lane.b32.xlu0 %v1413, 64
    %v1603 = vpop.permute.xlu0 %1602
    %v1606 = vsel %vm438, %v1600, 0
    %1608 = vmatprep.subr.mxu0 0.0
    %1609 = vmatpush1.msra.mxu0 %v1603
    %1610 = vmatprep.subr.mxu0 0.0
    %1611 = vmatpush1.msra.mxu0 0.0
    %1612 = vmatprep.subr.mxu0 0.0
    %1613 = vmatpush1.msra.mxu0 0.0
    %1614 = vmatprep.subr.mxu0 0.0
    %1615 = vmatpush1.msra.mxu0 0.0
    %1616 = vmatprep.subr.mxu0 0.0
    %1617 = vmatpush1.msra.mxu0 0.0
    %1618 = vmatprep.subr.mxu0 0.0
    %1619 = vmatpush1.msra.mxu0 0.0
    %1620 = vmatprep.subr.mxu0 0.0
    %1621 = vmatpush1.msra.mxu0 0.0
    %1622 = vmatprep.subr.mxu0 0.0
    %1623 = vmatpush1.msra.mxu0 0.0
    %1624 = vmatprep.subr.mxu0 0.0
    %1625 = vmatpush1.msra.mxu0 0.0
    %1626 = vmatprep.subr.mxu0 0.0
    %1627 = vmatpush1.msra.mxu0 0.0
    %1628 = vmatprep.subr.mxu0 0.0
    %1629 = vmatpush1.msra.mxu0 0.0
    %1630 = vmatprep.subr.mxu0 0.0
    %1631 = vmatpush1.msra.mxu0 0.0
    %1632 = vmatprep.subr.mxu0 0.0
    %1633 = vmatpush1.msra.mxu0 0.0
    %1634 = vmatprep.subr.mxu0 0.0
    %1635 = vmatpush1.msra.mxu0 0.0
    %1636 = vmatprep.subr.mxu0 0.0
    %1637 = vmatpush1.msra.mxu0 0.0
    %1638 = vmatprep.subr.mxu0 0.0
    %1639 = vmatpush1.msra.mxu0 0.0
    %1640 = vmatprep.subr.mxu0 0.0
    %1641 = vmatpush1.msra.mxu0 0.0
    %1642 = vmatprep.subr.mxu0 0.0
    %1643 = vmatpush1.msra.mxu0 0.0
    %1644 = vmatprep.subr.mxu0 0.0
    %1645 = vmatpush1.msra.mxu0 0.0
    %1646 = vmatprep.subr.mxu0 0.0
    %1647 = vmatpush1.msra.mxu0 0.0
    %1648 = vmatprep.subr.mxu0 0.0
    %1649 = vmatpush1.msra.mxu0 0.0
    %1650 = vmatprep.subr.mxu0 0.0
    %1651 = vmatpush1.msra.mxu0 0.0
    %1652 = vmatprep.subr.mxu0 0.0
    %1653 = vmatpush1.msra.mxu0 0.0
    %1654 = vmatprep.subr.mxu0 0.0
    %1655 = vmatpush1.msra.mxu0 0.0
    %1656 = vmatprep.subr.mxu0 0.0
    %1657 = vmatpush1.msra.mxu0 0.0
    %1658 = vmatprep.subr.mxu0 0.0
    %1659 = vmatpush1.msra.mxu0 0.0
    %1660 = vmatprep.subr.mxu0 0.0
    %1661 = vmatpush1.msra.mxu0 0.0
    %1662 = vmatprep.subr.mxu0 0.0
    %1663 = vmatpush1.msra.mxu0 0.0
    %1664 = vmatprep.subr.mxu0 0.0
    %1665 = vmatpush1.msra.mxu0 0.0
    %1666 = vmatprep.subr.mxu0 0.0
    %1667 = vmatpush1.msra.mxu0 0.0
    %1668 = vmatprep.subr.mxu0 0.0
    %1669 = vmatpush1.msra.mxu0 0.0
    %1670 = vmatprep.subr.mxu0 0.0
    %1671 = vmatpush1.msra.mxu0 0.0
    %1672 = vmatprep.mubr.f32.mxu0 0.0
    %1673 = vmatmul.mubr.f32.gmra.mrb[0].mxu0 %v1606
    %v1674 = vpop.f32.mrb[0].mxu0
    %v1675 = vadd.f32 0.0, %v1674
    %v1676 = vpop.f32.mrb[0].mxu0
    %1677 = vdwg.mxu0
    %1678 = vrot.lane.b32.xlu0 %v1416, 64
    %v1679 = vpop.permute.xlu0 %1678
    %v1682 = vsel %vm438, %v1601, 0
    %1684 = vmatprep.subr.mxu0 0.0
    %1685 = vmatpush1.msra.mxu0 %v1679
    %1686 = vmatprep.subr.mxu0 0.0
    %1687 = vmatpush1.msra.mxu0 0.0
    %1688 = vmatprep.subr.mxu0 0.0
    %1689 = vmatpush1.msra.mxu0 0.0
    %1690 = vmatprep.subr.mxu0 0.0
    %1691 = vmatpush1.msra.mxu0 0.0
    %1692 = vmatprep.subr.mxu0 0.0
    %1693 = vmatpush1.msra.mxu0 0.0
    %1694 = vmatprep.subr.mxu0 0.0
    %1695 = vmatpush1.msra.mxu0 0.0
    %1696 = vmatprep.subr.mxu0 0.0
    %1697 = vmatpush1.msra.mxu0 0.0
    %1698 = vmatprep.subr.mxu0 0.0
    %1699 = vmatpush1.msra.mxu0 0.0
    %1700 = vmatprep.subr.mxu0 0.0
    %1701 = vmatpush1.msra.mxu0 0.0
    %1702 = vmatprep.subr.mxu0 0.0
    %1703 = vmatpush1.msra.mxu0 0.0
    %1704 = vmatprep.subr.mxu0 0.0
    %1705 = vmatpush1.msra.mxu0 0.0
    %1706 = vmatprep.subr.mxu0 0.0
    %1707 = vmatpush1.msra.mxu0 0.0
    %1708 = vmatprep.subr.mxu0 0.0
    %1709 = vmatpush1.msra.mxu0 0.0
    %1710 = vmatprep.subr.mxu0 0.0
    %1711 = vmatpush1.msra.mxu0 0.0
    %1712 = vmatprep.subr.mxu0 0.0
    %1713 = vmatpush1.msra.mxu0 0.0
    %1714 = vmatprep.subr.mxu0 0.0
    %1715 = vmatpush1.msra.mxu0 0.0
    %1716 = vmatprep.subr.mxu0 0.0
    %1717 = vmatpush1.msra.mxu0 0.0
    %1718 = vmatprep.subr.mxu0 0.0
    %1719 = vmatpush1.msra.mxu0 0.0
    %1720 = vmatprep.subr.mxu0 0.0
    %1721 = vmatpush1.msra.mxu0 0.0
    %1722 = vmatprep.subr.mxu0 0.0
    %1723 = vmatpush1.msra.mxu0 0.0
    %1724 = vmatprep.subr.mxu0 0.0
    %1725 = vmatpush1.msra.mxu0 0.0
    %1726 = vmatprep.subr.mxu0 0.0
    %1727 = vmatpush1.msra.mxu0 0.0
    %1728 = vmatprep.subr.mxu0 0.0
    %1729 = vmatpush1.msra.mxu0 0.0
    %1730 = vmatprep.subr.mxu0 0.0
    %1731 = vmatpush1.msra.mxu0 0.0
    %1732 = vmatprep.subr.mxu0 0.0
    %1733 = vmatpush1.msra.mxu0 0.0
    %1734 = vmatprep.subr.mxu0 0.0
    %1735 = vmatpush1.msra.mxu0 0.0
    %1736 = vmatprep.subr.mxu0 0.0
    %1737 = vmatpush1.msra.mxu0 0.0
    %1738 = vmatprep.subr.mxu0 0.0
    %1739 = vmatpush1.msra.mxu0 0.0
    %1740 = vmatprep.subr.mxu0 0.0
    %1741 = vmatpush1.msra.mxu0 0.0
    %1742 = vmatprep.subr.mxu0 0.0
    %1743 = vmatpush1.msra.mxu0 0.0
    %1744 = vmatprep.subr.mxu0 0.0
    %1745 = vmatpush1.msra.mxu0 0.0
    %1746 = vmatprep.subr.mxu0 0.0
    %1747 = vmatpush1.msra.mxu0 0.0
    %1748 = vmatprep.mubr.f32.mxu0 0.0
    %1749 = vmatmul.mubr.f32.gmra.mrb[0].mxu0 %v1682
    %v1750 = vpop.f32.mrb[0].mxu0
    %v1751 = vadd.f32 0.0, %v1750
    %v1752 = vpop.f32.mrb[0].mxu0
    %1753 = vdwg.mxu0
    %v1754 = vpack.c.bf16 %v1675, %v1675
    %v1755 = vpack.c.bf16 %v1751, %v1751
    %1756 = vrot.lane.b32.xlu0 %v1413, 112
    %v1757 = vpop.permute.xlu0 %1756
    %1758 = vrot.lane.b32.xlu0 %v1413, 80
    %v1759 = vpop.permute.xlu0 %1758
    %v1760 = vsel %vm284, %v1757, 0
    %v1762 = vsel %vm284, %v1759, 0
    %1764 = vmatprep.subr.mxu0 0.0
    %1765 = vmatpush1.xpose.msra.mxu0 %v1762
    %1766 = vmatprep.subr.mxu0 0.0
    %1767 = vmatpush1.xpose.msra.mxu0 0.0
    %1768 = vmatprep.subr.mxu0 0.0
    %1769 = vmatpush1.xpose.msra.mxu0 0.0
    %1770 = vmatprep.subr.mxu0 0.0
    %1771 = vmatpush1.xpose.msra.mxu0 0.0
    %1772 = vmatprep.subr.mxu0 0.0
    %1773 = vmatpush1.xpose.msra.mxu0 0.0
    %1774 = vmatprep.subr.mxu0 0.0
    %1775 = vmatpush1.xpose.msra.mxu0 0.0
    %1776 = vmatprep.subr.mxu0 0.0
    %1777 = vmatpush1.xpose.msra.mxu0 0.0
    %1778 = vmatprep.subr.mxu0 0.0
    %1779 = vmatpush1.xpose.msra.mxu0 0.0
    %1780 = vmatprep.subr.mxu0 0.0
    %1781 = vmatpush1.xpose.msra.mxu0 0.0
    %1782 = vmatprep.subr.mxu0 0.0
    %1783 = vmatpush1.xpose.msra.mxu0 0.0
    %1784 = vmatprep.subr.mxu0 0.0
    %1785 = vmatpush1.xpose.msra.mxu0 0.0
    %1786 = vmatprep.subr.mxu0 0.0
    %1787 = vmatpush1.xpose.msra.mxu0 0.0
    %1788 = vmatprep.subr.mxu0 0.0
    %1789 = vmatpush1.xpose.msra.mxu0 0.0
    %1790 = vmatprep.subr.mxu0 0.0
    %1791 = vmatpush1.xpose.msra.mxu0 0.0
    %1792 = vmatprep.subr.mxu0 0.0
    %1793 = vmatpush1.xpose.msra.mxu0 0.0
    %1794 = vmatprep.subr.mxu0 0.0
    %1795 = vmatpush1.xpose.msra.mxu0 0.0
    %1796 = vmatprep.subr.mxu0 0.0
    %1797 = vmatpush1.xpose.msra.mxu0 0.0
    %1798 = vmatprep.subr.mxu0 0.0
    %1799 = vmatpush1.xpose.msra.mxu0 0.0
    %1800 = vmatprep.subr.mxu0 0.0
    %1801 = vmatpush1.xpose.msra.mxu0 0.0
    %1802 = vmatprep.subr.mxu0 0.0
    %1803 = vmatpush1.xpose.msra.mxu0 0.0
    %1804 = vmatprep.subr.mxu0 0.0
    %1805 = vmatpush1.xpose.msra.mxu0 0.0
    %1806 = vmatprep.subr.mxu0 0.0
    %1807 = vmatpush1.xpose.msra.mxu0 0.0
    %1808 = vmatprep.subr.mxu0 0.0
    %1809 = vmatpush1.xpose.msra.mxu0 0.0
    %1810 = vmatprep.subr.mxu0 0.0
    %1811 = vmatpush1.xpose.msra.mxu0 0.0
    %1812 = vmatprep.subr.mxu0 0.0
    %1813 = vmatpush1.xpose.msra.mxu0 0.0
    %1814 = vmatprep.subr.mxu0 0.0
    %1815 = vmatpush1.xpose.msra.mxu0 0.0
    %1816 = vmatprep.subr.mxu0 0.0
    %1817 = vmatpush1.xpose.msra.mxu0 0.0
    %1818 = vmatprep.subr.mxu0 0.0
    %1819 = vmatpush1.xpose.msra.mxu0 0.0
    %1820 = vmatprep.subr.mxu0 0.0
    %1821 = vmatpush1.xpose.msra.mxu0 0.0
    %1822 = vmatprep.subr.mxu0 0.0
    %1823 = vmatpush1.xpose.msra.mxu0 0.0
    %1824 = vmatprep.subr.mxu0 0.0
    %1825 = vmatpush1.xpose.msra.mxu0 0.0
    %1826 = vmatprep.subr.mxu0 0.0
    %1827 = vmatpush1.xpose.msra.mxu0 0.0
    %1828 = vmatprep.mubr.f32.mxu0 0.0
    %1829 = vmatmul.mubr.f32.gmra.mrb[0].mxu0 %v1760
    %v1830 = vpop.f32.mrb[0].mxu0
    %v1831 = vadd.f32 0.0, %v1830
    %v1832 = vpop.f32.mrb[0].mxu0
    %1833 = vdwg.mxu0
    %1834 = vrot.lane.b32.xlu0 %v1416, 112
    %v1835 = vpop.permute.xlu0 %1834
    %1836 = vrot.lane.b32.xlu0 %v1416, 80
    %v1837 = vpop.permute.xlu0 %1836
    %v1838 = vsel %vm284, %v1835, 0
    %v1840 = vsel %vm284, %v1837, 0
    %1842 = vmatprep.subr.mxu0 0.0
    %1843 = vmatpush1.xpose.msra.mxu0 %v1840
    %1844 = vmatprep.subr.mxu0 0.0
    %1845 = vmatpush1.xpose.msra.mxu0 0.0
    %1846 = vmatprep.subr.mxu0 0.0
    %1847 = vmatpush1.xpose.msra.mxu0 0.0
    %1848 = vmatprep.subr.mxu0 0.0
    %1849 = vmatpush1.xpose.msra.mxu0 0.0
    %1850 = vmatprep.subr.mxu0 0.0
    %1851 = vmatpush1.xpose.msra.mxu0 0.0
    %1852 = vmatprep.subr.mxu0 0.0
    %1853 = vmatpush1.xpose.msra.mxu0 0.0
    %1854 = vmatprep.subr.mxu0 0.0
    %1855 = vmatpush1.xpose.msra.mxu0 0.0
    %1856 = vmatprep.subr.mxu0 0.0
    %1857 = vmatpush1.xpose.msra.mxu0 0.0
    %1858 = vmatprep.subr.mxu0 0.0
    %1859 = vmatpush1.xpose.msra.mxu0 0.0
    %1860 = vmatprep.subr.mxu0 0.0
    %1861 = vmatpush1.xpose.msra.mxu0 0.0
    %1862 = vmatprep.subr.mxu0 0.0
    %1863 = vmatpush1.xpose.msra.mxu0 0.0
    %1864 = vmatprep.subr.mxu0 0.0
    %1865 = vmatpush1.xpose.msra.mxu0 0.0
    %1866 = vmatprep.subr.mxu0 0.0
    %1867 = vmatpush1.xpose.msra.mxu0 0.0
    %1868 = vmatprep.subr.mxu0 0.0
    %1869 = vmatpush1.xpose.msra.mxu0 0.0
    %1870 = vmatprep.subr.mxu0 0.0
    %1871 = vmatpush1.xpose.msra.mxu0 0.0
    %1872 = vmatprep.subr.mxu0 0.0
    %1873 = vmatpush1.xpose.msra.mxu0 0.0
    %1874 = vmatprep.subr.mxu0 0.0
    %1875 = vmatpush1.xpose.msra.mxu0 0.0
    %1876 = vmatprep.subr.mxu0 0.0
    %1877 = vmatpush1.xpose.msra.mxu0 0.0
    %1878 = vmatprep.subr.mxu0 0.0
    %1879 = vmatpush1.xpose.msra.mxu0 0.0
    %1880 = vmatprep.subr.mxu0 0.0
    %1881 = vmatpush1.xpose.msra.mxu0 0.0
    %1882 = vmatprep.subr.mxu0 0.0
    %1883 = vmatpush1.xpose.msra.mxu0 0.0
    %1884 = vmatprep.subr.mxu0 0.0
    %1885 = vmatpush1.xpose.msra.mxu0 0.0
    %1886 = vmatprep.subr.mxu0 0.0
    %1887 = vmatpush1.xpose.msra.mxu0 0.0
    %1888 = vmatprep.subr.mxu0 0.0
    %1889 = vmatpush1.xpose.msra.mxu0 0.0
    %1890 = vmatprep.subr.mxu0 0.0
    %1891 = vmatpush1.xpose.msra.mxu0 0.0
    %1892 = vmatprep.subr.mxu0 0.0
    %1893 = vmatpush1.xpose.msra.mxu0 0.0
    %1894 = vmatprep.subr.mxu0 0.0
    %1895 = vmatpush1.xpose.msra.mxu0 0.0
    %1896 = vmatprep.subr.mxu0 0.0
    %1897 = vmatpush1.xpose.msra.mxu0 0.0
    %1898 = vmatprep.subr.mxu0 0.0
    %1899 = vmatpush1.xpose.msra.mxu0 0.0
    %1900 = vmatprep.subr.mxu0 0.0
    %1901 = vmatpush1.xpose.msra.mxu0 0.0
    %1902 = vmatprep.subr.mxu0 0.0
    %1903 = vmatpush1.xpose.msra.mxu0 0.0
    %1904 = vmatprep.subr.mxu0 0.0
    %1905 = vmatpush1.xpose.msra.mxu0 0.0
    %1906 = vmatprep.mubr.f32.mxu0 0.0
    %1907 = vmatmul.mubr.f32.gmra.mrb[0].mxu0 %v1838
    %v1908 = vpop.f32.mrb[0].mxu0
    %v1909 = vadd.f32 0.0, %v1908
    %v1910 = vpop.f32.mrb[0].mxu0
    %1911 = vdwg.mxu0
    %v1912 = vmul.f32 %v1831, 0.25
    %v1913 = vmul.f32 %v1909, 0.25
    %v1914 = vsel %vm438, %v1912, -inf
    %1915 = vmax.xlane.f32.xlu0 %v1914
    %v1916 = vpop.xlane.xlu0 %1915
    %v1917 = vsel %vm438, %v1913, -inf
    %1918 = vmax.xlane.f32.xlu0 %v1917
    %v1919 = vpop.xlane.xlu0 %1918
    %v1920 = vsub.f32 %v1912, %v1916
    %v1921 = vsub.f32 %v1913, %v1919
    %v1922 = vmul.f32 %v1920, 1.442695
    %v1923 = vpow.pop %v1922
    %v1924 = vmul.f32 %v1921, 1.442695
    %v1925 = vpow.pop %v1924
    %v1926 = vsel %vm438, %v1923, 0.0
    %1927 = vadd.xlane.f32.xlu0 %v1926
    %v1928 = vpop.xlane.xlu0 %1927
    %v1929 = vsel %vm438, %v1925, 0.0
    %1930 = vadd.xlane.f32.xlu0 %v1929
    %v1931 = vpop.xlane.xlu0 %1930
    %v1932 = vrcp.pop %v1928
    %v1933 = vrcp.pop %v1931
    %v1934 = vmul.f32 %v1923, %v1932
    %v1935 = vmul.f32 %v1925, %v1933
    %1936 = vrot.lane.b32.xlu0 %v1413, 48
    %v1937 = vpop.permute.xlu0 %1936
    %v1940 = vsel %vm438, %v1934, 0
    %1942 = vmatprep.subr.mxu0 0.0
    %1943 = vmatpush1.msra.mxu0 %v1937
    %1944 = vmatprep.subr.mxu0 0.0
    %1945 = vmatpush1.msra.mxu0 0.0
    %1946 = vmatprep.subr.mxu0 0.0
    %1947 = vmatpush1.msra.mxu0 0.0
    %1948 = vmatprep.subr.mxu0 0.0
    %1949 = vmatpush1.msra.mxu0 0.0
    %1950 = vmatprep.subr.mxu0 0.0
    %1951 = vmatpush1.msra.mxu0 0.0
    %1952 = vmatprep.subr.mxu0 0.0
    %1953 = vmatpush1.msra.mxu0 0.0
    %1954 = vmatprep.subr.mxu0 0.0
    %1955 = vmatpush1.msra.mxu0 0.0
    %1956 = vmatprep.subr.mxu0 0.0
    %1957 = vmatpush1.msra.mxu0 0.0
    %1958 = vmatprep.subr.mxu0 0.0
    %1959 = vmatpush1.msra.mxu0 0.0
    %1960 = vmatprep.subr.mxu0 0.0
    %1961 = vmatpush1.msra.mxu0 0.0
    %1962 = vmatprep.subr.mxu0 0.0
    %1963 = vmatpush1.msra.mxu0 0.0
    %1964 = vmatprep.subr.mxu0 0.0
    %1965 = vmatpush1.msra.mxu0 0.0
    %1966 = vmatprep.subr.mxu0 0.0
    %1967 = vmatpush1.msra.mxu0 0.0
    %1968 = vmatprep.subr.mxu0 0.0
    %1969 = vmatpush1.msra.mxu0 0.0
    %1970 = vmatprep.subr.mxu0 0.0
    %1971 = vmatpush1.msra.mxu0 0.0
    %1972 = vmatprep.subr.mxu0 0.0
    %1973 = vmatpush1.msra.mxu0 0.0
    %1974 = vmatprep.subr.mxu0 0.0
    %1975 = vmatpush1.msra.mxu0 0.0
    %1976 = vmatprep.subr.mxu0 0.0
    %1977 = vmatpush1.msra.mxu0 0.0
    %1978 = vmatprep.subr.mxu0 0.0
    %1979 = vmatpush1.msra.mxu0 0.0
    %1980 = vmatprep.subr.mxu0 0.0
    %1981 = vmatpush1.msra.mxu0 0.0
    %1982 = vmatprep.subr.mxu0 0.0
    %1983 = vmatpush1.msra.mxu0 0.0
    %1984 = vmatprep.subr.mxu0 0.0
    %1985 = vmatpush1.msra.mxu0 0.0
    %1986 = vmatprep.subr.mxu0 0.0
    %1987 = vmatpush1.msra.mxu0 0.0
    %1988 = vmatprep.subr.mxu0 0.0
    %1989 = vmatpush1.msra.mxu0 0.0
    %1990 = vmatprep.subr.mxu0 0.0
    %1991 = vmatpush1.msra.mxu0 0.0
    %1992 = vmatprep.subr.mxu0 0.0
    %1993 = vmatpush1.msra.mxu0 0.0
    %1994 = vmatprep.subr.mxu0 0.0
    %1995 = vmatpush1.msra.mxu0 0.0
    %1996 = vmatprep.subr.mxu0 0.0
    %1997 = vmatpush1.msra.mxu0 0.0
    %1998 = vmatprep.subr.mxu0 0.0
    %1999 = vmatpush1.msra.mxu0 0.0
    %2000 = vmatprep.subr.mxu0 0.0
    %2001 = vmatpush1.msra.mxu0 0.0
    %2002 = vmatprep.subr.mxu0 0.0
    %2003 = vmatpush1.msra.mxu0 0.0
    %2004 = vmatprep.subr.mxu0 0.0
    %2005 = vmatpush1.msra.mxu0 0.0
    %2006 = vmatprep.mubr.f32.mxu0 0.0
    %2007 = vmatmul.mubr.f32.gmra.mrb[0].mxu0 %v1940
    %v2008 = vpop.f32.mrb[0].mxu0
    %v2009 = vadd.f32 0.0, %v2008
    %v2010 = vpop.f32.mrb[0].mxu0
    %2011 = vdwg.mxu0
    %2012 = vrot.lane.b32.xlu0 %v1416, 48
    %v2013 = vpop.permute.xlu0 %2012
    %v2016 = vsel %vm438, %v1935, 0
    %2018 = vmatprep.subr.mxu0 0.0
    %2019 = vmatpush1.msra.mxu0 %v2013
    %2020 = vmatprep.subr.mxu0 0.0
    %2021 = vmatpush1.msra.mxu0 0.0
    %2022 = vmatprep.subr.mxu0 0.0
    %2023 = vmatpush1.msra.mxu0 0.0
    %2024 = vmatprep.subr.mxu0 0.0
    %2025 = vmatpush1.msra.mxu0 0.0
    %2026 = vmatprep.subr.mxu0 0.0
    %2027 = vmatpush1.msra.mxu0 0.0
    %2028 = vmatprep.subr.mxu0 0.0
    %2029 = vmatpush1.msra.mxu0 0.0
    %2030 = vmatprep.subr.mxu0 0.0
    %2031 = vmatpush1.msra.mxu0 0.0
    %2032 = vmatprep.subr.mxu0 0.0
    %2033 = vmatpush1.msra.mxu0 0.0
    %2034 = vmatprep.subr.mxu0 0.0
    %2035 = vmatpush1.msra.mxu0 0.0
    %2036 = vmatprep.subr.mxu0 0.0
    %2037 = vmatpush1.msra.mxu0 0.0
    %2038 = vmatprep.subr.mxu0 0.0
    %2039 = vmatpush1.msra.mxu0 0.0
    %2040 = vmatprep.subr.mxu0 0.0
    %2041 = vmatpush1.msra.mxu0 0.0
    %2042 = vmatprep.subr.mxu0 0.0
    %2043 = vmatpush1.msra.mxu0 0.0
    %2044 = vmatprep.subr.mxu0 0.0
    %2045 = vmatpush1.msra.mxu0 0.0
    %2046 = vmatprep.subr.mxu0 0.0
    %2047 = vmatpush1.msra.mxu0 0.0
    %2048 = vmatprep.subr.mxu0 0.0
    %2049 = vmatpush1.msra.mxu0 0.0
    %2050 = vmatprep.subr.mxu0 0.0
    %2051 = vmatpush1.msra.mxu0 0.0
    %2052 = vmatprep.subr.mxu0 0.0
    %2053 = vmatpush1.msra.mxu0 0.0
    %2054 = vmatprep.subr.mxu0 0.0
    %2055 = vmatpush1.msra.mxu0 0.0
    %2056 = vmatprep.subr.mxu0 0.0
    %2057 = vmatpush1.msra.mxu0 0.0
    %2058 = vmatprep.subr.mxu0 0.0
    %2059 = vmatpush1.msra.mxu0 0.0
    %2060 = vmatprep.subr.mxu0 0.0
    %2061 = vmatpush1.msra.mxu0 0.0
    %2062 = vmatprep.subr.mxu0 0.0
    %2063 = vmatpush1.msra.mxu0 0.0
    %2064 = vmatprep.subr.mxu0 0.0
    %2065 = vmatpush1.msra.mxu0 0.0
    %2066 = vmatprep.subr.mxu0 0.0
    %2067 = vmatpush1.msra.mxu0 0.0
    %2068 = vmatprep.subr.mxu0 0.0
    %2069 = vmatpush1.msra.mxu0 0.0
    %2070 = vmatprep.subr.mxu0 0.0
    %2071 = vmatpush1.msra.mxu0 0.0
    %2072 = vmatprep.subr.mxu0 0.0
    %2073 = vmatpush1.msra.mxu0 0.0
    %2074 = vmatprep.subr.mxu0 0.0
    %2075 = vmatpush1.msra.mxu0 0.0
    %2076 = vmatprep.subr.mxu0 0.0
    %2077 = vmatpush1.msra.mxu0 0.0
    %2078 = vmatprep.subr.mxu0 0.0
    %2079 = vmatpush1.msra.mxu0 0.0
    %2080 = vmatprep.subr.mxu0 0.0
    %2081 = vmatpush1.msra.mxu0 0.0
    %2082 = vmatprep.mubr.f32.mxu0 0.0
    %2083 = vmatmul.mubr.f32.gmra.mrb[0].mxu0 %v2016
    %v2084 = vpop.f32.mrb[0].mxu0
    %v2085 = vadd.f32 0.0, %v2084
    %v2086 = vpop.f32.mrb[0].mxu0
    %2087 = vdwg.mxu0
    %v2088 = vpack.c.bf16 %v2009, %v2009
    %v2089 = vpack.c.bf16 %v2085, %v2085
    %v2092 = vunpack.c.l.b16 %v2088
    %v2093 = vunpack.c.l.b16 %v2089
    %v2094 = vpack.c.b16 %v2093, %v2092
    %v2097 = vunpack.c.l.b16 %v1422
    %v2098 = vunpack.c.l.b16 %v1423
    %v2099 = vpack.c.b16 %v2098, %v2097
    %v2102 = vsel %vm284, %v2094, 0
    %2104 = vmatprep.subr.bf16.mxu0 0
    %2105 = vmatpush1.bf16.msra.mxu0 %v2099
    %2106 = vmatprep.subr.bf16.mxu0 0
    %2107 = vmatpush1.bf16.msra.mxu0 0
    %2108 = vmatprep.subr.bf16.mxu0 0
    %2109 = vmatpush1.bf16.msra.mxu0 0
    %2110 = vmatprep.subr.bf16.mxu0 0
    %2111 = vmatpush1.bf16.msra.mxu0 0
    %2112 = vmatprep.subr.bf16.mxu0 0
    %2113 = vmatpush1.bf16.msra.mxu0 0
    %2114 = vmatprep.subr.bf16.mxu0 0
    %2115 = vmatpush1.bf16.msra.mxu0 0
    %2116 = vmatprep.subr.bf16.mxu0 0
    %2117 = vmatpush1.bf16.msra.mxu0 0
    %2118 = vmatprep.subr.bf16.mxu0 0
    %2119 = vmatpush1.bf16.msra.mxu0 0
    %2120 = vmatprep.subr.bf16.mxu0 0
    %2121 = vmatpush1.bf16.msra.mxu0 0
    %2122 = vmatprep.subr.bf16.mxu0 0
    %2123 = vmatpush1.bf16.msra.mxu0 0
    %2124 = vmatprep.subr.bf16.mxu0 0
    %2125 = vmatpush1.bf16.msra.mxu0 0
    %2126 = vmatprep.subr.bf16.mxu0 0
    %2127 = vmatpush1.bf16.msra.mxu0 0
    %2128 = vmatprep.subr.bf16.mxu0 0
    %2129 = vmatpush1.bf16.msra.mxu0 0
    %2130 = vmatprep.subr.bf16.mxu0 0
    %2131 = vmatpush1.bf16.msra.mxu0 0
    %2132 = vmatprep.subr.bf16.mxu0 0
    %2133 = vmatpush1.bf16.msra.mxu0 0
    %2134 = vmatprep.subr.bf16.mxu0 0
    %2135 = vmatpush1.bf16.msra.mxu0 0
    %2136 = vmatprep.mubr.bf16.mxu0 0
    %2137 = vmatmul.mubr.bf16.gmra.mrb[0].mxu0 %v2102
    %v2138 = vpop.f32.mrb[0].mxu0
    %v2139 = vadd.f32 0.0, %v2138
    %v2140 = vpop.f32.mrb[0].mxu0
    %v2141 = vpop.f32.mrb[0].mxu0
    %v2142 = vadd.f32 0.0, %v2141
    %v2143 = vpop.f32.mrb[0].mxu0
    %2144 = vdwg.mxu0
    %v2147 = vunpack.c.l.b16 %v1754
    %v2148 = vunpack.c.l.b16 %v1755
    %v2149 = vpack.c.b16 %v2148, %v2147
    %v2152 = vunpack.c.l.b16 %v1420
    %v2153 = vunpack.c.l.b16 %v1421
    %v2154 = vpack.c.b16 %v2153, %v2152
    %v2157 = vsel %vm284, %v2149, 0
    %2159 = vmatprep.subr.bf16.mxu0 0
    %2160 = vmatpush1.bf16.msra.mxu0 %v2154
    %2161 = vmatprep.subr.bf16.mxu0 0
    %2162 = vmatpush1.bf16.msra.mxu0 0
    %2163 = vmatprep.subr.bf16.mxu0 0
    %2164 = vmatpush1.bf16.msra.mxu0 0
    %2165 = vmatprep.subr.bf16.mxu0 0
    %2166 = vmatpush1.bf16.msra.mxu0 0
    %2167 = vmatprep.subr.bf16.mxu0 0
    %2168 = vmatpush1.bf16.msra.mxu0 0
    %2169 = vmatprep.subr.bf16.mxu0 0
    %2170 = vmatpush1.bf16.msra.mxu0 0
    %2171 = vmatprep.subr.bf16.mxu0 0
    %2172 = vmatpush1.bf16.msra.mxu0 0
    %2173 = vmatprep.subr.bf16.mxu0 0
    %2174 = vmatpush1.bf16.msra.mxu0 0
    %2175 = vmatprep.subr.bf16.mxu0 0
    %2176 = vmatpush1.bf16.msra.mxu0 0
    %2177 = vmatprep.subr.bf16.mxu0 0
    %2178 = vmatpush1.bf16.msra.mxu0 0
    %2179 = vmatprep.subr.bf16.mxu0 0
    %2180 = vmatpush1.bf16.msra.mxu0 0
    %2181 = vmatprep.subr.bf16.mxu0 0
    %2182 = vmatpush1.bf16.msra.mxu0 0
    %2183 = vmatprep.subr.bf16.mxu0 0
    %2184 = vmatpush1.bf16.msra.mxu0 0
    %2185 = vmatprep.subr.bf16.mxu0 0
    %2186 = vmatpush1.bf16.msra.mxu0 0
    %2187 = vmatprep.subr.bf16.mxu0 0
    %2188 = vmatpush1.bf16.msra.mxu0 0
    %2189 = vmatprep.subr.bf16.mxu0 0
    %2190 = vmatpush1.bf16.msra.mxu0 0
    %2191 = vmatprep.mubr.bf16.mxu0 0
    %2192 = vmatmul.mubr.bf16.gmra.mrb[0].mxu0 %v2157
    %v2193 = vpop.f32.mrb[0].mxu0
    %v2194 = vadd.f32 %v2139, %v2193
    %v2195 = vpop.f32.mrb[0].mxu0
    %v2196 = vpop.f32.mrb[0].mxu0
    %v2197 = vadd.f32 %v2142, %v2196
    %v2198 = vpop.f32.mrb[0].mxu0
    %2199 = vdwg.mxu0
    %s2200 = scalar_lea.vmem %s8, 1
    %v2201 = vld [vmem:[%s2200] sm:$0x1]
    %v2203 = vlaneseq
    %v2204 = vshrl.u32 %v2203, 7
    %v2205 = vsub.s32 0, %v2204
    %v2206 = vrot.slane %v2201, %v2205
    %v2208 = vadd.f32 %v2194, %v2206
    %v2209 = vadd.f32 %v2197, %v2206
    %v2210 = vadd.f32 %v2208, %v1341
    %v2211 = vadd.f32 %v2209, %v1342
    %s2212 = scalar_lea.vmem %s9, 1
    %v2213 = vld [vmem:[%s2212] sm:$0x1]
    %s2214 = scalar_lea.vmem %s10, 1
    %v2215 = vld [vmem:[%s2214] sm:$0x1]
    %v2216 = vsel %vm159, %v2210, 0.0
    %2217 = vadd.xlane.f32.xlu0 %v2216
    %v2218 = vpop.xlane.xlu0 %2217
    %v2219 = vsel %vm159, %v2211, 0.0
    %2220 = vadd.xlane.f32.xlu0 %v2219
    %v2221 = vpop.xlane.xlu0 %2220
    %v2222 = vmul.f32 %v2218, %v166
    %v2223 = vmul.f32 %v2221, %v166
    %v2224 = vsub.f32 %v2210, %v2222
    %v2225 = vsub.f32 %v2211, %v2223
    %v2226 = vmul.f32 %v2224, %v2224
    %v2227 = vmul.f32 %v2225, %v2225
    %v2228 = vsel %vm159, %v2226, 0.0
    %2229 = vadd.xlane.f32.xlu0 %v2228
    %v2230 = vpop.xlane.xlu0 %2229
    %v2231 = vsel %vm159, %v2227, 0.0
    %2232 = vadd.xlane.f32.xlu0 %v2231
    %v2233 = vpop.xlane.xlu0 %2232
    %v2234 = vmul.f32 %v2230, %v166
    %v2235 = vmul.f32 %v2233, %v166
    %v2236 = vadd.f32 %v2234, 1e-12
    %v2237 = vadd.f32 %v2235, 1e-12
    %v2238 = vrsqrt.pop %v2236
    %v2239 = vrsqrt.pop %v2237
    %v2240 = vmul.f32 %v2224, %v2238
    %v2241 = vmul.f32 %v2225, %v2239
    %v2243 = vlaneseq
    %v2244 = vshrl.u32 %v2243, 7
    %v2245 = vsub.s32 0, %v2244
    %v2246 = vrot.slane %v2213, %v2245
    %v2248 = vmul.f32 %v2240, %v2246
    %v2249 = vmul.f32 %v2241, %v2246
    %v2251 = vlaneseq
    %v2252 = vshrl.u32 %v2251, 7
    %v2253 = vsub.s32 0, %v2252
    %v2254 = vrot.slane %v2215, %v2253
    %v2256 = vadd.f32 %v2248, %v2254
    %v2257 = vadd.f32 %v2249, %v2254
    %v2258 = vpack.c.bf16 %v2256, %v2256
    %v2259 = vpack.c.bf16 %v2257, %v2257
    %s2260 = scalar_lea.vmem %s11, 16
    %v2261 = vld [vmem:[%s2260] sm:$0xf]
    %v2262 = vld [vmem:[%s2260 + $0x4] sm:$0xf]
    %v2263 = vld [vmem:[%s2260 + $0x8] sm:$0xf]
    %v2264 = vld [vmem:[%s2260 + $0xc] sm:$0xf]
    %s2265 = scalar_lea.vmem %s12, 1
    %v2266 = vld [vmem:[%s2265] sm:$0x1]
    %v2268 = vlaneseq
    %v2269 = vshrl.u32 %v2268, 7
    %v2270 = vsub.s32 0, %v2269
    %v2271 = vrot.slane %v2266, %v2270
    %v2275 = vunpack.c.l.b16 %v2258
    %v2276 = vunpack.c.l.b16 %v2259
    %v2277 = vpack.c.b16 %v2276, %v2275
    %v2282 = vunpack.c.l.b16 %v2261
    %v2283 = vunpack.c.l.b16 %v2262
    %v2284 = vunpack.c.l.b16 %v2263
    %v2285 = vunpack.c.l.b16 %v2264
    %v2286 = vpack.c.b16 %v2283, %v2282
    %v2287 = vpack.c.b16 %v2285, %v2284
    %v2291 = vsel %vm159, %v2277, 0
    %2293 = vmatprep.subr.bf16.mxu0 0
    %2294 = vmatpush1.bf16.msra.mxu0 %v2286
    %2295 = vmatprep.subr.bf16.mxu0 0
    %2296 = vmatpush1.bf16.msra.mxu0 %v2287
    %2297 = vmatprep.subr.bf16.mxu0 0
    %2298 = vmatpush1.bf16.msra.mxu0 0
    %2299 = vmatprep.subr.bf16.mxu0 0
    %2300 = vmatpush1.bf16.msra.mxu0 0
    %2301 = vmatprep.subr.bf16.mxu0 0
    %2302 = vmatpush1.bf16.msra.mxu0 0
    %2303 = vmatprep.subr.bf16.mxu0 0
    %2304 = vmatpush1.bf16.msra.mxu0 0
    %2305 = vmatprep.subr.bf16.mxu0 0
    %2306 = vmatpush1.bf16.msra.mxu0 0
    %2307 = vmatprep.subr.bf16.mxu0 0
    %2308 = vmatpush1.bf16.msra.mxu0 0
    %2309 = vmatprep.subr.bf16.mxu0 0
    %2310 = vmatpush1.bf16.msra.mxu0 0
    %2311 = vmatprep.subr.bf16.mxu0 0
    %2312 = vmatpush1.bf16.msra.mxu0 0
    %2313 = vmatprep.subr.bf16.mxu0 0
    %2314 = vmatpush1.bf16.msra.mxu0 0
    %2315 = vmatprep.subr.bf16.mxu0 0
    %2316 = vmatpush1.bf16.msra.mxu0 0
    %2317 = vmatprep.subr.bf16.mxu0 0
    %2318 = vmatpush1.bf16.msra.mxu0 0
    %2319 = vmatprep.subr.bf16.mxu0 0
    %2320 = vmatpush1.bf16.msra.mxu0 0
    %2321 = vmatprep.subr.bf16.mxu0 0
    %2322 = vmatpush1.bf16.msra.mxu0 0
    %2323 = vmatprep.subr.bf16.mxu0 0
    %2324 = vmatpush1.bf16.msra.mxu0 0
    %2325 = vmatprep.mubr.bf16.mxu0 0
    %2326 = vmatmul.mubr.bf16.gmra.mrb[0].mxu0 %v2291
    %v2327 = vpop.f32.mrb[0].mxu0
    %v2328 = vadd.f32 %v2271, %v2327
    %v2329 = vpop.f32.mrb[0].mxu0
    %v2330 = vpop.f32.mrb[0].mxu0
    %v2331 = vadd.f32 %v2271, %v2330
    %v2332 = vpop.f32.mrb[0].mxu0
    %2333 = vdwg.mxu0
    %v2334 = vmul.f32 %v2328, %v2328
    %v2335 = vmul.f32 %v2331, %v2331
    %v2336 = vmul.f32 %v2328, %v2334
    %v2337 = vmul.f32 %v2331, %v2335
    %v2338 = vmul.f32 %v2336, 0.044715
    %v2339 = vmul.f32 %v2337, 0.044715
    %v2340 = vadd.f32 %v2328, %v2338
    %v2341 = vadd.f32 %v2331, %v2339
    %v2342 = vmul.f32 %v2340, 0.7978846
    %v2343 = vmul.f32 %v2341, 0.7978846
    %v2344 = vtanh.pop %v2342
    %v2345 = vtanh.pop %v2343
    %v2346 = vadd.f32 %v2344, 1.0
    %v2347 = vadd.f32 %v2345, 1.0
    %v2348 = vmul.f32 %v2346, 0.5
    %v2349 = vmul.f32 %v2347, 0.5
    %v2350 = vmul.f32 %v2328, %v2348
    %v2351 = vmul.f32 %v2331, %v2349
    %v2352 = vpack.c.bf16 %v2350, %v2350
    %v2353 = vpack.c.bf16 %v2351, %v2351
    %s2354 = scalar_lea.vmem %s13, 32
    %v2355 = vld [vmem:[%s2354] sm:$0xf]
    %v2356 = vld [vmem:[%s2354 + $0x4] sm:$0xf]
    %v2357 = vld [vmem:[%s2354 + $0x8] sm:$0xf]
    %v2358 = vld [vmem:[%s2354 + $0xc] sm:$0xf]
    %v2359 = vld [vmem:[%s2354 + $0x10] sm:$0xf]
    %v2360 = vld [vmem:[%s2354 + $0x14] sm:$0xf]
    %v2361 = vld [vmem:[%s2354 + $0x18] sm:$0xf]
    %v2362 = vld [vmem:[%s2354 + $0x1c] sm:$0xf]
    %s2363 = scalar_lea.vmem %s14, 1
    %v2364 = vld [vmem:[%s2363] sm:$0x1]
    %v2366 = vlaneseq
    %v2367 = vshrl.u32 %v2366, 7
    %v2368 = vsub.s32 0, %v2367
    %v2369 = vrot.slane %v2364, %v2368
    %v2373 = vunpack.c.l.b16 %v2352
    %v2374 = vunpack.c.l.b16 %v2353
    %v2375 = vpack.c.b16 %v2374, %v2373
    %v2384 = vunpack.c.l.b16 %v2355
    %v2385 = vunpack.c.l.b16 %v2356
    %v2386 = vunpack.c.l.b16 %v2357
    %v2387 = vunpack.c.l.b16 %v2358
    %v2388 = vunpack.c.l.b16 %v2359
    %v2389 = vunpack.c.l.b16 %v2360
    %v2390 = vunpack.c.l.b16 %v2361
    %v2391 = vunpack.c.l.b16 %v2362
    %v2392 = vpack.c.b16 %v2385, %v2384
    %v2393 = vpack.c.b16 %v2387, %v2386
    %v2394 = vpack.c.b16 %v2389, %v2388
    %v2395 = vpack.c.b16 %v2391, %v2390
    %v2401 = vsel %vm1252, %v2375, 0
    %2403 = vmatprep.subr.bf16.mxu0 0
    %2404 = vmatpush1.bf16.msra.mxu0 %v2392
    %2405 = vmatprep.subr.bf16.mxu0 0
    %2406 = vmatpush1.bf16.msra.mxu0 %v2393
    %2407 = vmatprep.subr.bf16.mxu0 0
    %2408 = vmatpush1.bf16.msra.mxu0 %v2394
    %2409 = vmatprep.subr.bf16.mxu0 0
    %2410 = vmatpush1.bf16.msra.mxu0 %v2395
    %2411 = vmatprep.subr.bf16.mxu0 0
    %2412 = vmatpush1.bf16.msra.mxu0 0
    %2413 = vmatprep.subr.bf16.mxu0 0
    %2414 = vmatpush1.bf16.msra.mxu0 0
    %2415 = vmatprep.subr.bf16.mxu0 0
    %2416 = vmatpush1.bf16.msra.mxu0 0
    %2417 = vmatprep.subr.bf16.mxu0 0
    %2418 = vmatpush1.bf16.msra.mxu0 0
    %2419 = vmatprep.subr.bf16.mxu0 0
    %2420 = vmatpush1.bf16.msra.mxu0 0
    %2421 = vmatprep.subr.bf16.mxu0 0
    %2422 = vmatpush1.bf16.msra.mxu0 0
    %2423 = vmatprep.subr.bf16.mxu0 0
    %2424 = vmatpush1.bf16.msra.mxu0 0
    %2425 = vmatprep.subr.bf16.mxu0 0
    %2426 = vmatpush1.bf16.msra.mxu0 0
    %2427 = vmatprep.subr.bf16.mxu0 0
    %2428 = vmatpush1.bf16.msra.mxu0 0
    %2429 = vmatprep.subr.bf16.mxu0 0
    %2430 = vmatpush1.bf16.msra.mxu0 0
    %2431 = vmatprep.subr.bf16.mxu0 0
    %2432 = vmatpush1.bf16.msra.mxu0 0
    %2433 = vmatprep.subr.bf16.mxu0 0
    %2434 = vmatpush1.bf16.msra.mxu0 0
    %2435 = vmatprep.mubr.bf16.mxu0 0
    %2436 = vmatmul.mubr.bf16.gmra.mrb[0].mxu0 %v2401
    %v2437 = vpop.f32.mrb[0].mxu0
    %v2438 = vadd.f32 %v2369, %v2437
    %v2439 = vpop.f32.mrb[0].mxu0
    %v2440 = vpop.f32.mrb[0].mxu0
    %v2441 = vadd.f32 %v2369, %v2440
    %v2442 = vpop.f32.mrb[0].mxu0
    %2443 = vdwg.mxu0
    %v2444 = vadd.f32 %v2438, %v2256
    %v2445 = vadd.f32 %v2441, %v2257
    %s2446 = scalar_lea.vmem %s15, 1
    %v2447 = vld [vmem:[%s2446] sm:$0x1]
    %s2448 = scalar_lea.vmem %s16, 1
    %v2449 = vld [vmem:[%s2448] sm:$0x1]
    %v2450 = vsel %vm159, %v2444, 0.0
    %2451 = vadd.xlane.f32.xlu0 %v2450
    %v2452 = vpop.xlane.xlu0 %2451
    %v2453 = vsel %vm159, %v2445, 0.0
    %2454 = vadd.xlane.f32.xlu0 %v2453
    %v2455 = vpop.xlane.xlu0 %2454
    %v2456 = vmul.f32 %v2452, %v166
    %v2457 = vmul.f32 %v2455, %v166
    %v2458 = vsub.f32 %v2444, %v2456
    %v2459 = vsub.f32 %v2445, %v2457
    %v2460 = vmul.f32 %v2458, %v2458
    %v2461 = vmul.f32 %v2459, %v2459
    %v2462 = vsel %vm159, %v2460, 0.0
    %2463 = vadd.xlane.f32.xlu0 %v2462
    %v2464 = vpop.xlane.xlu0 %2463
    %v2465 = vsel %vm159, %v2461, 0.0
    %2466 = vadd.xlane.f32.xlu0 %v2465
    %v2467 = vpop.xlane.xlu0 %2466
    %v2468 = vmul.f32 %v2464, %v166
    %v2469 = vmul.f32 %v2467, %v166
    %v2470 = vadd.f32 %v2468, 1e-12
    %v2471 = vadd.f32 %v2469, 1e-12
    %v2472 = vrsqrt.pop %v2470
    %v2473 = vrsqrt.pop %v2471
    %v2474 = vmul.f32 %v2458, %v2472
    %v2475 = vmul.f32 %v2459, %v2473
    %v2477 = vlaneseq
    %v2478 = vshrl.u32 %v2477, 7
    %v2479 = vsub.s32 0, %v2478
    %v2480 = vrot.slane %v2447, %v2479
    %v2482 = vmul.f32 %v2474, %v2480
    %v2483 = vmul.f32 %v2475, %v2480
    %v2485 = vlaneseq
    %v2486 = vshrl.u32 %v2485, 7
    %v2487 = vsub.s32 0, %v2486
    %v2488 = vrot.slane %v2449, %v2487
    %v2490 = vadd.f32 %v2482, %v2488
    %v2491 = vadd.f32 %v2483, %v2488
    %v2492 = vpack.c.bf16 %v2490, %v2490
    %v2493 = vpack.c.bf16 %v2491, %v2491
    %v2494 = vld [vmem:[%s17] sm:$0xf]
    %v2495 = vld [vmem:[%s17 + $0x4] sm:$0xf]
    %v2496 = vld [vmem:[%s17 + $0x8] sm:$0xf]
    %v2497 = vld [vmem:[%s17 + $0xc] sm:$0xf]
    %v2498 = vld [vmem:[%s18] sm:$0x1]
    %v2500 = vlaneseq
    %v2501 = vshrl.u32 %v2500, 7
    %v2502 = vsub.s32 0, %v2501
    %v2503 = vrot.slane %v2498, %v2502
    %v2507 = vunpack.c.l.b16 %v2492
    %v2508 = vunpack.c.l.b16 %v2493
    %v2509 = vrot.slane %v2508, 7
    %vm2510 = vcmask 1041409
    %v2511 = vsel %vm2510, %v2509, %v2507
    %v2512 = vpack.c.b16 %v2511, %v2511
    %v2517 = vunpack.c.l.b16 %v2494
    %v2518 = vunpack.c.l.b16 %v2495
    %v2519 = vunpack.c.l.b16 %v2496
    %v2520 = vunpack.c.l.b16 %v2497
    %v2521 = vpack.c.b16 %v2518, %v2517
    %v2522 = vpack.c.b16 %v2520, %v2519
    %v2526 = vsel %vm159, %v2512, 0
    %2528 = vmatprep.subr.bf16.mxu0 0
    %2529 = vmatpush1.bf16.msra.mxu0 %v2521
    %2530 = vmatprep.subr.bf16.mxu0 0
    %2531 = vmatpush1.bf16.msra.mxu0 %v2522
    %2532 = vmatprep.subr.bf16.mxu0 0
    %2533 = vmatpush1.bf16.msra.mxu0 0
    %2534 = vmatprep.subr.bf16.mxu0 0
    %2535 = vmatpush1.bf16.msra.mxu0 0
    %2536 = vmatprep.subr.bf16.mxu0 0
    %2537 = vmatpush1.bf16.msra.mxu0 0
    %2538 = vmatprep.subr.bf16.mxu0 0
    %2539 = vmatpush1.bf16.msra.mxu0 0
    %2540 = vmatprep.subr.bf16.mxu0 0
    %2541 = vmatpush1.bf16.msra.mxu0 0
    %2542 = vmatprep.subr.bf16.mxu0 0
    %2543 = vmatpush1.bf16.msra.mxu0 0
    %2544 = vmatprep.subr.bf16.mxu0 0
    %2545 = vmatpush1.bf16.msra.mxu0 0
    %2546 = vmatprep.subr.bf16.mxu0 0
    %2547 = vmatpush1.bf16.msra.mxu0 0
    %2548 = vmatprep.subr.bf16.mxu0 0
    %2549 = vmatpush1.bf16.msra.mxu0 0
    %2550 = vmatprep.subr.bf16.mxu0 0
    %2551 = vmatpush1.bf16.msra.mxu0 0
    %2552 = vmatprep.subr.bf16.mxu0 0
    %2553 = vmatpush1.bf16.msra.mxu0 0
    %2554 = vmatprep.subr.bf16.mxu0 0
    %2555 = vmatpush1.bf16.msra.mxu0 0
    %2556 = vmatprep.subr.bf16.mxu0 0
    %2557 = vmatpush1.bf16.msra.mxu0 0
    %2558 = vmatprep.subr.bf16.mxu0 0
    %2559 = vmatpush1.bf16.msra.mxu0 0
    %2560 = vmatprep.mubr.bf16.mxu0 0
    %2561 = vmatmul.mubr.bf16.gmra.mrb[0].mxu0 %v2526
    %v2562 = vpop.f32.mrb[0].mxu0
    %v2563 = vadd.f32 %v2503, %v2562
    %v2564 = vpop.f32.mrb[0].mxu0
    %v2565 = vpop.f32.mrb[0].mxu0
    %v2566 = vpop.f32.mrb[0].mxu0
    %2567 = vdwg.mxu0
    %2568 = vst [vmem:[#allocation5] sm:$0x3] %v2563
    // Predicated region
    $region74: #{tpu_custom_call.1} parent=1 // pred_check
      _
    $region75: #{tpu_custom_call.1} parent=1 // pred_check_branch
      %2570 = sbr.rel (0) target = $region77
    $region76: #{tpu_custom_call.1} parent=1 // pred_region
      %s2572 = ssub.s32 32, 32
      %2573 = vsyncadd [#allocation6], %s2572
      %s2575 = sshll.u32 [#allocation5], 4
      %s2576 = int_to_ptr.vmem [resolvable:$true] %s2575
      %2578 = dma.vmem_to_hbm [thread:$0]  %s2576, 32, %s19, [#allocation6]
    $region77: #{tpu_custom_call.1} parent=1 // pred_fallthru
      _
    // Predicated region
    $region78: #{tpu_custom_call.1} parent=1 // pred_check
      _
    $region79: #{tpu_custom_call.1} parent=1 // pred_check_branch
      %2580 = sbr.rel (0) target = $region81
    $region80: #{tpu_custom_call.1} parent=1 // pred_region
      %2581 = dma.done [#allocation6], 32
    $region81: #{tpu_custom_call.1} parent=1 // pred_fallthru
      _
    %2582 = vsyncpa [#allocation6], 1

</llo_original>
